<compile_context>
chip_gen: v6e
topology: v6e:2x2x1
jax: 0.10.0
libtpu: 0.0.40
codegen_flags: <defaults>
</compile_context>

<pallas_src>
from functools import reduce
from operator import mul

import jax
import jax.numpy as jnp
from jax.experimental import pallas as pl
from jax.experimental.pallas import tpu as pltpu


def _round_up(n, m):
    return ((n + m - 1) // m) * m


# ---------------------------------------------------------------------------
# Pallas kernel: the whole 3-layer MLP head (matmuls + bias + ReLU) runs
# on-chip.  Weights (bf16, ~2.6 MiB at D=1024) stay VMEM-resident across the
# batch grid via constant-index BlockSpecs; activation/output tiles pipeline
# along the batch axis.
# ---------------------------------------------------------------------------
def _mlp_head_kernel(x_ref, w1_ref, b1_ref, w2_ref, b2_ref, w3_ref, b3_ref,
                     o_ref):
    # Accepts f32 or bf16 activations; cast happens in VMEM, not as a separate
    # HBM-round-trip op in the wrapper.
    x = x_ref[...].astype(jnp.bfloat16)                           # (TB, D)

    # Linear(D, D) + [Dropout=identity] + ReLU.
    # Bias + ReLU + bf16 cast fused so only the bf16 copy of h1 persists.
    h1 = jnp.maximum(
        jnp.dot(x, w1_ref[...], preferred_element_type=jnp.float32)
        + b1_ref[...], 0.0).astype(jnp.bfloat16)                  # (TB, D)

    # Linear(D, D//4) + [Dropout=identity] + ReLU.
    h2 = jnp.maximum(
        jnp.dot(h1, w2_ref[...], preferred_element_type=jnp.float32)
        + b2_ref[...], 0.0).astype(jnp.bfloat16)                  # (TB, D//4)

    # Linear(D//4, OUTP)  (OUTP = outd padded to 128; pad cols/bias are zero
    # -> lane-dense unmasked stores; padding sliced off outside the kernel).
    out = jnp.dot(h2, w3_ref[...], preferred_element_type=jnp.float32) \
        + b3_ref[...]
    o_ref[...] = out.astype(o_ref.dtype)                          # (TB, OUTP)


# ---------------------------------------------------------------------------
# Tiling / VMEM-budget helpers (generation-aware, per perf review).
# ---------------------------------------------------------------------------
def _choose_batch_tile(B, cap=256):
    """Pick the batch tile TB and padded batch Bp.

    * TB up to 256 rows fills the 256-row MXU on v6e/v7x and amortizes the
      ~0.35 us per-grid-step overhead (v5e's 128-wide MXU is full at 128
      already, so a bigger TB only helps pipelining there).
    * Prefer a TB that divides the 8-padded batch so we never pad the full
      activation up to a multiple of TB (jnp.pad = extra HBM pass).
    * When the batch is big enough to split, prefer an even grid-step count so
      v7x's two TensorCores each get work under ("parallel",) semantics.
    """
    Bp8 = _round_up(max(B, 1), 8)
    cands = [t for t in range(8, min(cap, Bp8) + 1, 8) if Bp8 % t == 0]
    best_key, best_tb = None, 8
    for t in cands:
        steps = Bp8 // t
        good_split = (steps % 2 == 0) or (Bp8 < 2 * 128)
        key = (good_split, t)
        if best_key is None or key > best_key:
            best_key, best_tb = key, t
    TB = best_tb
    # Degenerate divisor structure (e.g. Bp8 = 8 * large prime): fall back to a
    # full cap-sized tile and pad the batch instead of running tiny tiles.
    if TB < 64 and Bp8 > 2 * cap:
        TB = cap
    Bp = _round_up(Bp8, TB)
    return TB, Bp


def _vmem_budget_bytes(D, OUTP, TB, x_bytes):
    """Right-sized VMEM limit: actual footprint + generous margin (<= 64 MiB)."""
    d4 = max(D // 4, 1)
    weights = (D * D + D * d4 + d4 * OUTP) * 2          # bf16 weights
    biases = (D + d4 + OUTP) * 4                        # f32 biases
    io = 2 * TB * D * x_bytes + 2 * TB * OUTP * 4       # double-buffered x/out
    scratch = TB * D * (4 + 2) + TB * d4 * (4 + 2)      # h1/h2 f32 acc + bf16
    total = 2 * (weights + biases) + io + scratch       # weights double-buffered
    return max(8 << 20, min(64 << 20, 2 * total + (8 << 20)))


def _mlp_head_forward(x, params, outd):
    """Run one head. x: (B, D) f32 or bf16. params: (w1, b1, w2, b2, w3p, b3p)."""
    w1, b1, w2, b2, w3p, b3p = params
    B, D = x.shape
    OUTP = w3p.shape[1]

    TB, Bp = _choose_batch_tile(B)
    if Bp != B:
        x = jnp.pad(x, ((0, Bp - B), (0, 0)))

    vmem_bytes = _vmem_budget_bytes(D, OUTP, TB, jnp.dtype(x.dtype).itemsize)

    out = pl.pallas_call(
        _mlp_head_kernel,
        out_shape=jax.ShapeDtypeStruct((Bp, OUTP), jnp.float32),
        grid_spec=pltpu.PrefetchScalarGridSpec(
            num_scalar_prefetch=0,
            grid=(Bp // TB,),
            in_specs=[
                # activation tile marches along the batch axis
                pl.BlockSpec((TB, D), lambda i: (i, 0)),
                # weights/biases: constant block index -> VMEM-resident,
                # DMA'd once and reused across all grid steps
                pl.BlockSpec(w1.shape, lambda i: (0, 0)),
                pl.BlockSpec(b1.shape, lambda i: (0, 0)),
                pl.BlockSpec(w2.shape, lambda i: (0, 0)),
                pl.BlockSpec(b2.shape, lambda i: (0, 0)),
                pl.BlockSpec(w3p.shape, lambda i: (0, 0)),
                pl.BlockSpec(b3p.shape, lambda i: (0, 0)),
            ],
            out_specs=pl.BlockSpec((TB, OUTP), lambda i: (i, 0)),
        ),
        compiler_params=pltpu.CompilerParams(
            dimension_semantics=("parallel",),   # v7x: shard batch steps over 2 TCs
            vmem_limit_bytes=int(vmem_bytes),
        ),
    )(x, w1, b1, w2, b2, w3p, b3p)

    # Undo batch/output padding (lane-dense store path inside the kernel).
    return out[:B, :outd]


# Pure-JAX reference (same bf16-weight math) for correctness checking.
def _mlp_head_reference(x, params, outd):
    w1, b1, w2, b2, w3p, b3p = params
    xb = x.reshape(x.shape[0], -1).astype(jnp.bfloat16)
    h1 = jnp.maximum(jnp.dot(xb, w1, preferred_element_type=jnp.float32) + b1,
                     0.0).astype(jnp.bfloat16)
    h2 = jnp.maximum(jnp.dot(h1, w2, preferred_element_type=jnp.float32) + b2,
                     0.0).astype(jnp.bfloat16)
    out = jnp.dot(h2, w3p, preferred_element_type=jnp.float32) + b3p
    return out[:, :outd]


# ---------------------------------------------------------------------------
# Plain-JAX "module" glue mirroring MultiHeadTaskSolver semantics.
# ---------------------------------------------------------------------------
def _init_linear(key, fan_in, fan_out, pad_out=None):
    """torch.nn.Linear default init U(-1/sqrt(fan_in), 1/sqrt(fan_in)).

    Weight returned transposed (fan_in, fan_out) in bf16; bias (1, fan_out)
    in f32.  If pad_out is given, the output dim is zero-padded to pad_out
    (lane-dense last layer; pad cols/bias MUST stay zero)."""
    kw, kb = jax.random.split(key)
    bound = 1.0 / jnp.sqrt(jnp.float32(fan_in))
    w = jax.random.uniform(kw, (fan_in, fan_out), jnp.float32, -bound, bound)
    b = jax.random.uniform(kb, (1, fan_out), jnp.float32, -bound, bound)
    if pad_out is not None and pad_out != fan_out:
        w = jnp.pad(w, ((0, 0), (0, pad_out - fan_out)))
        b = jnp.pad(b, ((0, 0), (0, pad_out - fan_out)))
    return w.astype(jnp.bfloat16), b.astype(jnp.float32)


class MultiHeadTaskSolver:
    def __init__(self, input_dim, key):
        if hasattr(input_dim, "__len__") and len(input_dim) > 1:
            input_dim = reduce(mul, input_dim, 1)
            self.flat_input = True
        else:
            self.flat_input = False
        self.input_dim = int(input_dim)
        self._tasks = []
        self._out_dims = []
        self._task = 0
        self._key = key

    def add_task(self, output_size):
        self._key, k1, k2, k3 = jax.random.split(self._key, 4)
        ind = self.input_dim
        outp = _round_up(int(output_size), 128)  # lane-dense padded out dim
        w1, b1 = _init_linear(k1, ind, ind)
        w2, b2 = _init_linear(k2, ind, ind // 4)
        w3, b3 = _init_linear(k3, ind // 4, int(output_size), pad_out=outp)
        self._tasks.append((w1, b1, w2, b2, w3, b3))
        self._out_dims.append(int(output_size))

    @property
    def task(self):
        return self._task

    @task.setter
    def task(self, value):
        if not (0 <= value < len(self._tasks)):   # reject negative and OOB
            raise ValueError("ERROR (MODIFICARE)")
        self._task = value

    @property
    def heads(self):
        return self._tasks

    def forward(self, x, task=None):
        _t = self._task if task is None else task
        if self.flat_input:
            x = x.reshape(x.shape[0], -1)         # torch.flatten(x, 1)
        return _mlp_head_forward(x, self._tasks[_t], self._out_dims[_t])

    __call__ = forward


# ---------------------------------------------------------------------------
if __name__ == "__main__":
    key = jax.random.PRNGKey(0)
    k_param, k_data, k_big = jax.random.split(key, 3)

    # input_dim = (C, H, W) = (4, 16, 16) -> flattened D = 1024
    input_dim = (4, 16, 16)
    solver = MultiHeadTaskSolver(input_dim, k_param)
    solver.add_task(10)   # head 0: 10-way classifier
    solver.add_task(6)    # head 1: 6-way classifier

    # Small NCHW input, batch=2 (f32 activations)
    x = jax.random.normal(k_data, (2,) + input_dim, dtype=jnp.float32)

    solver.task = 0
    out0 = solver(x)                  # current task -> head 0, (2, 10)
    out1 = solver(x, task=1)          # explicit task -> head 1, (2, 6)
    jax.block_until_ready(out0)
    jax.block_until_ready(out1)

    assert out0.shape == (2, 10) and out0.dtype == jnp.float32
    assert out1.shape == (2, 6) and out1.dtype == jnp.float32
    assert bool(jnp.all(jnp.isfinite(out0))) and bool(jnp.all(jnp.isfinite(out1)))

    # Correctness vs. a pure-JAX reference (same bf16-weight math).
    ref0 = _mlp_head_reference(x, solver.heads[0], 10)
    ref1 = _mlp_head_reference(x, solver.heads[1], 6)
    assert bool(jnp.allclose(out0, ref0, atol=5e-2, rtol=5e-2))
    assert bool(jnp.allclose(out1, ref1, atol=5e-2, rtol=5e-2))

    # Larger batch in bf16: exercises the multi-step grid (TB=256, 2 steps,
    # "parallel" batch axis) and the bf16-activation DMA path.
    xb = jax.random.normal(k_big, (512,) + input_dim).astype(jnp.bfloat16)
    outb = solver(xb, task=0)
    jax.block_until_ready(outb)
    assert outb.shape == (512, 10)
    refb = _mlp_head_reference(xb, solver.heads[0], 10)
    assert bool(jnp.allclose(outb, refb, atol=5e-2, rtol=5e-2))

    print("KERNEL_OK")
</pallas_src>

<mosaic_0001>
module attributes {stable_mosaic.version = 11 : i64} {
  func.func @_mlp_head_kernel(%arg0: i32, %arg1: memref<8x1024xf32, #tpu.memory_space<vmem>>, %arg2: memref<1024x1024xbf16, #tpu.memory_space<vmem>>, %arg3: memref<1x1024xf32, #tpu.memory_space<vmem>>, %arg4: memref<1024x256xbf16, #tpu.memory_space<vmem>>, %arg5: memref<1x256xf32, #tpu.memory_space<vmem>>, %arg6: memref<256x128xbf16, #tpu.memory_space<vmem>>, %arg7: memref<1x128xf32, #tpu.memory_space<vmem>>, %arg8: memref<8x128xf32, #tpu.memory_space<vmem>>) attributes {dimension_semantics = [#tpu.dimension_semantics<parallel>], iteration_bounds = array<i64: 1>, scalar_prefetch = 0 : i64, scratch_operands = 0 : i64, tpu.core_type = #tpu.core_type<tc>, window_params = [{transform_indices = @transform_0, window_bounds = array<i64: 8, 1024>}, {pipeline_mode = #tpu.pipeline_mode<synchronous>, transform_indices = @transform_1, window_bounds = array<i64: 1024, 1024>}, {pipeline_mode = #tpu.pipeline_mode<synchronous>, transform_indices = @transform_2, window_bounds = array<i64: 1, 1024>}, {pipeline_mode = #tpu.pipeline_mode<synchronous>, transform_indices = @transform_3, window_bounds = array<i64: 1024, 256>}, {pipeline_mode = #tpu.pipeline_mode<synchronous>, transform_indices = @transform_4, window_bounds = array<i64: 1, 256>}, {pipeline_mode = #tpu.pipeline_mode<synchronous>, transform_indices = @transform_5, window_bounds = array<i64: 256, 128>}, {pipeline_mode = #tpu.pipeline_mode<synchronous>, transform_indices = @transform_6, window_bounds = array<i64: 1, 128>}, {transform_indices = @transform_7, window_bounds = array<i64: 8, 128>}]} {
    %c0 = arith.constant 0 : index
    %c0_0 = arith.constant 0 : index
    %0 = vector.load %arg1[%c0, %c0_0] : memref<8x1024xf32, #tpu.memory_space<vmem>>, vector<8x1024xf32>
    %1 = arith.truncf %0 : vector<8x1024xf32> to vector<8x1024xbf16>
    %c0_1 = arith.constant 0 : index
    %c0_2 = arith.constant 0 : index
    %2 = vector.load %arg2[%c0_1, %c0_2] : memref<1024x1024xbf16, #tpu.memory_space<vmem>>, vector<1024x1024xbf16>
    %cst = arith.constant dense<0.000000e+00> : vector<8x1024xf32>
    %3 = tpu.matmul %1, %2, %cst {dimension_numbers = #tpu.dot_dimension_numbers<[1], [0], [0], [1], [0, 0, 1, 1], [], []>} : vector<8x1024xbf16>, vector<1024x1024xbf16>, vector<8x1024xf32> -> vector<8x1024xf32>
    %c0_3 = arith.constant 0 : index
    %c0_4 = arith.constant 0 : index
    %4 = vector.load %arg3[%c0_3, %c0_4] : memref<1x1024xf32, #tpu.memory_space<vmem>>, vector<1x1024xf32>
    %5 = vector.broadcast %4 : vector<1x1024xf32> to vector<8x1024xf32>
    %6 = arith.addf %3, %5 : vector<8x1024xf32>
    %cst_5 = arith.constant 0.000000e+00 : f32
    %7 = vector.broadcast %cst_5 : f32 to vector<8x1024xf32>
    %8 = arith.maximumf %6, %7 : vector<8x1024xf32>
    %9 = arith.truncf %8 : vector<8x1024xf32> to vector<8x1024xbf16>
    %c0_6 = arith.constant 0 : index
    %c0_7 = arith.constant 0 : index
    %10 = vector.load %arg4[%c0_6, %c0_7] : memref<1024x256xbf16, #tpu.memory_space<vmem>>, vector<1024x256xbf16>
    %cst_8 = arith.constant dense<0.000000e+00> : vector<8x256xf32>
    %11 = tpu.matmul %9, %10, %cst_8 {dimension_numbers = #tpu.dot_dimension_numbers<[1], [0], [0], [1], [0, 0, 1, 1], [], []>} : vector<8x1024xbf16>, vector<1024x256xbf16>, vector<8x256xf32> -> vector<8x256xf32>
    %c0_9 = arith.constant 0 : index
    %c0_10 = arith.constant 0 : index
    %12 = vector.load %arg5[%c0_9, %c0_10] : memref<1x256xf32, #tpu.memory_space<vmem>>, vector<1x256xf32>
    %13 = vector.broadcast %12 : vector<1x256xf32> to vector<8x256xf32>
    %14 = arith.addf %11, %13 : vector<8x256xf32>
    %cst_11 = arith.constant 0.000000e+00 : f32
    %15 = vector.broadcast %cst_11 : f32 to vector<8x256xf32>
    %16 = arith.maximumf %14, %15 : vector<8x256xf32>
    %17 = arith.truncf %16 : vector<8x256xf32> to vector<8x256xbf16>
    %c0_12 = arith.constant 0 : index
    %c0_13 = arith.constant 0 : index
    %18 = vector.load %arg6[%c0_12, %c0_13] : memref<256x128xbf16, #tpu.memory_space<vmem>>, vector<256x128xbf16>
    %cst_14 = arith.constant dense<0.000000e+00> : vector<8x128xf32>
    %19 = tpu.matmul %17, %18, %cst_14 {dimension_numbers = #tpu.dot_dimension_numbers<[1], [0], [0], [1], [0, 0, 1, 1], [], []>} : vector<8x256xbf16>, vector<256x128xbf16>, vector<8x128xf32> -> vector<8x128xf32>
    %c0_15 = arith.constant 0 : index
    %c0_16 = arith.constant 0 : index
    %20 = vector.load %arg7[%c0_15, %c0_16] : memref<1x128xf32, #tpu.memory_space<vmem>>, vector<1x128xf32>
    %21 = vector.broadcast %20 : vector<1x128xf32> to vector<8x128xf32>
    %22 = arith.addf %19, %21 : vector<8x128xf32>
    %c0_17 = arith.constant 0 : index
    %c0_18 = arith.constant 0 : index
    %23 = vector.load %arg8[%c0_17, %c0_18] : memref<8x128xf32, #tpu.memory_space<vmem>>, vector<8x128xf32>
    tpu.vector_store %arg8[%c0_17, %c0_18], %22 {strides = array<i32>} : memref<8x128xf32, #tpu.memory_space<vmem>>, vector<8x128xf32>,
    return
  }
  func.func @transform_0(%arg0: i32) -> (i32, i32) {
    %c0_i32 = arith.constant 0 : i32
    %c0_i32_0 = arith.constant 0 : i32
    return %arg0, %c0_i32 : i32, i32
  }
  func.func @transform_1(%arg0: i32) -> (i32, i32) {
    %c0_i32 = arith.constant 0 : i32
    %c0_i32_0 = arith.constant 0 : i32
    %c0_i32_1 = arith.constant 0 : i32
    return %c0_i32, %c0_i32_0 : i32, i32
  }
  func.func @transform_2(%arg0: i32) -> (i32, i32) {
    %c0_i32 = arith.constant 0 : i32
    %c0_i32_0 = arith.constant 0 : i32
    %c0_i32_1 = arith.constant 0 : i32
    return %c0_i32, %c0_i32_0 : i32, i32
  }
  func.func @transform_3(%arg0: i32) -> (i32, i32) {
    %c0_i32 = arith.constant 0 : i32
    %c0_i32_0 = arith.constant 0 : i32
    %c0_i32_1 = arith.constant 0 : i32
    return %c0_i32, %c0_i32_0 : i32, i32
  }
  func.func @transform_4(%arg0: i32) -> (i32, i32) {
    %c0_i32 = arith.constant 0 : i32
    %c0_i32_0 = arith.constant 0 : i32
    %c0_i32_1 = arith.constant 0 : i32
    return %c0_i32, %c0_i32_0 : i32, i32
  }
  func.func @transform_5(%arg0: i32) -> (i32, i32) {
    %c0_i32 = arith.constant 0 : i32
    %c0_i32_0 = arith.constant 0 : i32
    %c0_i32_1 = arith.constant 0 : i32
    return %c0_i32, %c0_i32_0 : i32, i32
  }
  func.func @transform_6(%arg0: i32) -> (i32, i32) {
    %c0_i32 = arith.constant 0 : i32
    %c0_i32_0 = arith.constant 0 : i32
    %c0_i32_1 = arith.constant 0 : i32
    return %c0_i32, %c0_i32_0 : i32, i32
  }
  func.func @transform_7(%arg0: i32) -> (i32, i32) {
    %c0_i32 = arith.constant 0 : i32
    %c0_i32_0 = arith.constant 0 : i32
    return %arg0, %c0_i32 : i32, i32
  }
}

</mosaic_0001>

<llo_original>
// kernel: tpu_custom_call.1
$region0: #{tpu_custom_call.1}
  #allocation0 [shape = 'u32[]', space=smem, size = 0x4, offset = 0x4, fixed_abs, tag = 'smem constant byte address 0x4 - core index']
  #allocation1 [shape = 'u32[144,128]{1,0:T(1,128)}', space=vmem, size = 0x12000, scoped, tag = 'internal scratch']
  %s0 = inlined_call_operand.hbm [shape: f32[8,1024], index: 0, kind: input, shape index: {}]
  %s1 = inlined_call_operand.hbm [shape: bf16[1024,1024], index: 1, kind: input, shape index: {}]
  %s2 = inlined_call_operand.hbm [shape: f32[1,1024], index: 2, kind: input, shape index: {}]
  %s3 = inlined_call_operand.hbm [shape: bf16[1024,256], index: 3, kind: input, shape index: {}]
  %s4 = inlined_call_operand.hbm [shape: f32[1,256], index: 4, kind: input, shape index: {}]
  %s5 = inlined_call_operand.hbm [shape: bf16[256,128], index: 5, kind: input, shape index: {}]
  %s6 = inlined_call_operand.hbm [shape: f32[1,128], index: 6, kind: input, shape index: {}]
  %s7 = inlined_call_operand.hbm [shape: f32[8,128], index: 7, kind: output, shape index: {}]
  %s8 = sld [smem:[#allocation0]]
  $region66: #{tpu_custom_call.1} parent=0
    _
  %s10 = ssub.s32 1, %s8
  %s11 = scalar_select 0, %s10, %s8
  $region1: #{tpu_custom_call.1} parent=0
    #allocation2 [shape = 'u8[32768]{0}', space=vmem, size = 0x8000, scoped, tag = 'input window, operand 0, single buffered']
    #allocation3 [shape = 's32[1]{0}', space=sflag, size = 0x4, scoped, tag = 'scoped memory for tpu_custom_call.1']
    #allocation4 [shape = 's32[1]{0}', space=sflag, size = 0x4, scoped, tag = 'scoped memory for tpu_custom_call.1']
    #allocation5 [shape = 'u8[2097152]{0}', space=vmem, size = 0x200000, scoped, tag = 'input window, operand 1, single buffered']
    #allocation6 [shape = 's32[1]{0}', space=sflag, size = 0x4, scoped, tag = 'scoped memory for tpu_custom_call.1']
    #allocation7 [shape = 'u8[4096]{0}', space=vmem, size = 0x1000, scoped, tag = 'input window, operand 2, single buffered']
    #allocation8 [shape = 'u8[524288]{0}', space=vmem, size = 0x80000, scoped, tag = 'input window, operand 3, single buffered']
    #allocation9 [shape = 's32[1]{0}', space=sflag, size = 0x4, scoped, tag = 'scoped memory for tpu_custom_call.1']
    #allocation10 [shape = 'u8[1024]{0}', space=vmem, size = 0x400, scoped, tag = 'input window, operand 4, single buffered']
    #allocation11 [shape = 'u8[65536]{0}', space=vmem, size = 0x10000, scoped, tag = 'input window, operand 5, single buffered']
    #allocation12 [shape = 's32[1]{0}', space=sflag, size = 0x4, scoped, tag = 'scoped memory for tpu_custom_call.1']
    #allocation13 [shape = 'u8[512]{0}', space=vmem, size = 0x400, scoped, tag = 'input window, operand 6, single buffered']
    #allocation14 [shape = 'u8[4096]{0}', space=vmem, size = 0x1000, scoped, tag = 'output window, operand 0, single buffered']
    %12 = vsyncpa [#allocation3], 0
    %13 = vsyncpa [#allocation6], 0
    %14 = vsyncpa [#allocation9], 0
    %15 = vsyncpa [#allocation12], 0
    %16 = vsyncpa [#allocation4], 0
    // Predicated region
    $region2: #{tpu_custom_call.1} parent=1 // pred_check
      _
    $region3: #{tpu_custom_call.1} parent=1 // pred_check_branch
      %18 = sbr.rel (0) target = $region5
    $region4: #{tpu_custom_call.1} parent=1 // pred_region
      %s20 = ssub.s32 1024, 1024
      %21 = vsyncadd [#allocation3], %s20
      %s23 = sshll.u32 [#allocation2], 4
      %s24 = int_to_ptr.vmem [resolvable:$true] %s23
      %26 = dma.hbm_to_vmem [thread:$0]  %s0, 1024, %s24, [#allocation3]
    $region5: #{tpu_custom_call.1} parent=1 // pred_fallthru
      _
    // Predicated region
    $region6: #{tpu_custom_call.1} parent=1 // pred_check
      _
    $region7: #{tpu_custom_call.1} parent=1 // pred_check_branch
      %28 = sbr.rel (0) target = $region9
    $region8: #{tpu_custom_call.1} parent=1 // pred_region
      %s30 = ssub.s32 65536, 65536
      %31 = vsyncadd [#allocation6], %s30
      %s32 = sshll.u32 [#allocation5], 4
      %s33 = int_to_ptr.vmem [resolvable:$true] %s32
      %38 = dma.hbm_to_vmem [thread:$0]  %s1, 65536, %s33, [#allocation6], 512, 512, 32
    $region9: #{tpu_custom_call.1} parent=1 // pred_fallthru
      _
    // Predicated region
    $region10: #{tpu_custom_call.1} parent=1 // pred_check
      _
    $region11: #{tpu_custom_call.1} parent=1 // pred_check_branch
      %40 = sbr.rel (0) target = $region13
    $region12: #{tpu_custom_call.1} parent=1 // pred_region
      %s42 = ssub.s32 128, 128
      %43 = vsyncadd [#allocation6], %s42
      %s45 = sshll.u32 [#allocation7], 4
      %s46 = int_to_ptr.vmem [resolvable:$true] %s45
      %48 = dma.hbm_to_vmem [thread:$0]  %s2, 128, %s46, [#allocation6]
    $region13: #{tpu_custom_call.1} parent=1 // pred_fallthru
      _
    // Predicated region
    $region14: #{tpu_custom_call.1} parent=1 // pred_check
      _
    $region15: #{tpu_custom_call.1} parent=1 // pred_check_branch
      %50 = sbr.rel (0) target = $region17
    $region16: #{tpu_custom_call.1} parent=1 // pred_region
      %s52 = ssub.s32 16384, 16384
      %53 = vsyncadd [#allocation9], %s52
      %s54 = sshll.u32 [#allocation8], 4
      %s55 = int_to_ptr.vmem [resolvable:$true] %s54
      %60 = dma.hbm_to_vmem [thread:$0]  %s3, 16384, %s55, [#allocation9], 128, 128, 8
    $region17: #{tpu_custom_call.1} parent=1 // pred_fallthru
      _
    // Predicated region
    $region18: #{tpu_custom_call.1} parent=1 // pred_check
      _
    $region19: #{tpu_custom_call.1} parent=1 // pred_check_branch
      %62 = sbr.rel (0) target = $region21
    $region20: #{tpu_custom_call.1} parent=1 // pred_region
      %s64 = ssub.s32 32, 32
      %65 = vsyncadd [#allocation9], %s64
      %s67 = sshll.u32 [#allocation10], 4
      %s68 = int_to_ptr.vmem [resolvable:$true] %s67
      %70 = dma.hbm_to_vmem [thread:$0]  %s4, 32, %s68, [#allocation9]
    $region21: #{tpu_custom_call.1} parent=1 // pred_fallthru
      _
    // Predicated region
    $region22: #{tpu_custom_call.1} parent=1 // pred_check
      _
    $region23: #{tpu_custom_call.1} parent=1 // pred_check_branch
      %72 = sbr.rel (0) target = $region25
    $region24: #{tpu_custom_call.1} parent=1 // pred_region
      %s74 = ssub.s32 2048, 2048
      %75 = vsyncadd [#allocation12], %s74
      %s76 = sshll.u32 [#allocation11], 4
      %s77 = int_to_ptr.vmem [resolvable:$true] %s76
      %82 = dma.hbm_to_vmem [thread:$0]  %s5, 2048, %s77, [#allocation12], 64, 64, 4
    $region25: #{tpu_custom_call.1} parent=1 // pred_fallthru
      _
    // Predicated region
    $region26: #{tpu_custom_call.1} parent=1 // pred_check
      _
    $region27: #{tpu_custom_call.1} parent=1 // pred_check_branch
      %84 = sbr.rel (0) target = $region29
    $region28: #{tpu_custom_call.1} parent=1 // pred_region
      %s86 = ssub.s32 16, 16
      %87 = vsyncadd [#allocation12], %s86
      %s89 = sshll.u32 [#allocation13], 4
      %s90 = int_to_ptr.vmem [resolvable:$true] %s89
      %92 = dma.hbm_to_vmem [thread:$0]  %s6, 16, %s90, [#allocation12]
    $region29: #{tpu_custom_call.1} parent=1 // pred_fallthru
      _
    // Predicated region
    $region30: #{tpu_custom_call.1} parent=1 // pred_check
      _
    $region31: #{tpu_custom_call.1} parent=1 // pred_check_branch
      %94 = sbr.rel (0) target = $region33
    $region32: #{tpu_custom_call.1} parent=1 // pred_region
      %95 = dma.done [#allocation3], 1024
    $region33: #{tpu_custom_call.1} parent=1 // pred_fallthru
      _
    // Predicated region
    $region34: #{tpu_custom_call.1} parent=1 // pred_check
      _
    $region35: #{tpu_custom_call.1} parent=1 // pred_check_branch
      %97 = sbr.rel (0) target = $region37
    $region36: #{tpu_custom_call.1} parent=1 // pred_region
      %98 = dma.done [#allocation6], 65536
    $region37: #{tpu_custom_call.1} parent=1 // pred_fallthru
      _
    // Predicated region
    $region38: #{tpu_custom_call.1} parent=1 // pred_check
      _
    $region39: #{tpu_custom_call.1} parent=1 // pred_check_branch
      %100 = sbr.rel (0) target = $region41
    $region40: #{tpu_custom_call.1} parent=1 // pred_region
      %101 = dma.done [#allocation6], 128
    $region41: #{tpu_custom_call.1} parent=1 // pred_fallthru
      _
    // Predicated region
    $region42: #{tpu_custom_call.1} parent=1 // pred_check
      _
    $region43: #{tpu_custom_call.1} parent=1 // pred_check_branch
      %103 = sbr.rel (0) target = $region45
    $region44: #{tpu_custom_call.1} parent=1 // pred_region
      %104 = dma.done [#allocation9], 16384
    $region45: #{tpu_custom_call.1} parent=1 // pred_fallthru
      _
    // Predicated region
    $region46: #{tpu_custom_call.1} parent=1 // pred_check
      _
    $region47: #{tpu_custom_call.1} parent=1 // pred_check_branch
      %106 = sbr.rel (0) target = $region49
    $region48: #{tpu_custom_call.1} parent=1 // pred_region
      %107 = dma.done [#allocation9], 32
    $region49: #{tpu_custom_call.1} parent=1 // pred_fallthru
      _
    // Predicated region
    $region50: #{tpu_custom_call.1} parent=1 // pred_check
      _
    $region51: #{tpu_custom_call.1} parent=1 // pred_check_branch
      %109 = sbr.rel (0) target = $region53
    $region52: #{tpu_custom_call.1} parent=1 // pred_region
      %110 = dma.done [#allocation12], 2048
    $region53: #{tpu_custom_call.1} parent=1 // pred_fallthru
      _
    // Predicated region
    $region54: #{tpu_custom_call.1} parent=1 // pred_check
      _
    $region55: #{tpu_custom_call.1} parent=1 // pred_check_branch
      %112 = sbr.rel (0) target = $region57
    $region56: #{tpu_custom_call.1} parent=1 // pred_region
      %113 = dma.done [#allocation12], 16
    $region57: #{tpu_custom_call.1} parent=1 // pred_fallthru
      _
    %v115 = vld [vmem:[#allocation2] sm:$0xff]
    %v116 = vld [vmem:[#allocation2 + $0x8] sm:$0xff]
    %v117 = vld [vmem:[#allocation2 + $0x10] sm:$0xff]
    %v118 = vld [vmem:[#allocation2 + $0x18] sm:$0xff]
    %v119 = vld [vmem:[#allocation2 + $0x20] sm:$0xff]
    %v120 = vld [vmem:[#allocation2 + $0x28] sm:$0xff]
    %v121 = vld [vmem:[#allocation2 + $0x30] sm:$0xff]
    %v122 = vld [vmem:[#allocation2 + $0x38] sm:$0xff]
    %v123 = vpack.c.bf16 %v115, %v115
    %v124 = vpack.c.bf16 %v116, %v116
    %v125 = vpack.c.bf16 %v117, %v117
    %v126 = vpack.c.bf16 %v118, %v118
    %v127 = vpack.c.bf16 %v119, %v119
    %v128 = vpack.c.bf16 %v120, %v120
    %v129 = vpack.c.bf16 %v121, %v121
    %v130 = vpack.c.bf16 %v122, %v122
    %v131 = vld [vmem:[#allocation5] sm:$0xff]
    %v132 = vld [vmem:[#allocation5 + $0x8] sm:$0xff]
    %v133 = vld [vmem:[#allocation5 + $0x10] sm:$0xff]
    %v134 = vld [vmem:[#allocation5 + $0x18] sm:$0xff]
    %v135 = vld [vmem:[#allocation5 + $0x20] sm:$0xff]
    %v136 = vld [vmem:[#allocation5 + $0x28] sm:$0xff]
    %v137 = vld [vmem:[#allocation5 + $0x30] sm:$0xff]
    %v138 = vld [vmem:[#allocation5 + $0x38] sm:$0xff]
    %v139 = vld [vmem:[#allocation5 + $0x40] sm:$0xff]
    %v140 = vld [vmem:[#allocation5 + $0x48] sm:$0xff]
    %v141 = vld [vmem:[#allocation5 + $0x50] sm:$0xff]
    %v142 = vld [vmem:[#allocation5 + $0x58] sm:$0xff]
    %v143 = vld [vmem:[#allocation5 + $0x60] sm:$0xff]
    %v144 = vld [vmem:[#allocation5 + $0x68] sm:$0xff]
    %v145 = vld [vmem:[#allocation5 + $0x70] sm:$0xff]
    %v146 = vld [vmem:[#allocation5 + $0x78] sm:$0xff]
    %v147 = vld [vmem:[#allocation5 + $0x80] sm:$0xff]
    %v148 = vld [vmem:[#allocation5 + $0x88] sm:$0xff]
    %v149 = vld [vmem:[#allocation5 + $0x90] sm:$0xff]
    %v150 = vld [vmem:[#allocation5 + $0x98] sm:$0xff]
    %v151 = vld [vmem:[#allocation5 + $0xa0] sm:$0xff]
    %v152 = vld [vmem:[#allocation5 + $0xa8] sm:$0xff]
    %v153 = vld [vmem:[#allocation5 + $0xb0] sm:$0xff]
    %v154 = vld [vmem:[#allocation5 + $0xb8] sm:$0xff]
    %v155 = vld [vmem:[#allocation5 + $0xc0] sm:$0xff]
    %v156 = vld [vmem:[#allocation5 + $0xc8] sm:$0xff]
    %v157 = vld [vmem:[#allocation5 + $0xd0] sm:$0xff]
    %v158 = vld [vmem:[#allocation5 + $0xd8] sm:$0xff]
    %v159 = vld [vmem:[#allocation5 + $0xe0] sm:$0xff]
    %v160 = vld [vmem:[#allocation5 + $0xe8] sm:$0xff]
    %v161 = vld [vmem:[#allocation5 + $0xf0] sm:$0xff]
    %v162 = vld [vmem:[#allocation5 + $0xf8] sm:$0xff]
    %v163 = vld [vmem:[#allocation5 + $0x100] sm:$0xff]
    %v164 = vld [vmem:[#allocation5 + $0x108] sm:$0xff]
    %v165 = vld [vmem:[#allocation5 + $0x110] sm:$0xff]
    %v166 = vld [vmem:[#allocation5 + $0x118] sm:$0xff]
    %v167 = vld [vmem:[#allocation5 + $0x120] sm:$0xff]
    %v168 = vld [vmem:[#allocation5 + $0x128] sm:$0xff]
    %v169 = vld [vmem:[#allocation5 + $0x130] sm:$0xff]
    %v170 = vld [vmem:[#allocation5 + $0x138] sm:$0xff]
    %v171 = vld [vmem:[#allocation5 + $0x140] sm:$0xff]
    %v172 = vld [vmem:[#allocation5 + $0x148] sm:$0xff]
    %v173 = vld [vmem:[#allocation5 + $0x150] sm:$0xff]
    %v174 = vld [vmem:[#allocation5 + $0x158] sm:$0xff]
    %v175 = vld [vmem:[#allocation5 + $0x160] sm:$0xff]
    %v176 = vld [vmem:[#allocation5 + $0x168] sm:$0xff]
    %v177 = vld [vmem:[#allocation5 + $0x170] sm:$0xff]
    %v178 = vld [vmem:[#allocation5 + $0x178] sm:$0xff]
    %v179 = vld [vmem:[#allocation5 + $0x180] sm:$0xff]
    %v180 = vld [vmem:[#allocation5 + $0x188] sm:$0xff]
    %v181 = vld [vmem:[#allocation5 + $0x190] sm:$0xff]
    %v182 = vld [vmem:[#allocation5 + $0x198] sm:$0xff]
    %v183 = vld [vmem:[#allocation5 + $0x1a0] sm:$0xff]
    %v184 = vld [vmem:[#allocation5 + $0x1a8] sm:$0xff]
    %v185 = vld [vmem:[#allocation5 + $0x1b0] sm:$0xff]
    %v186 = vld [vmem:[#allocation5 + $0x1b8] sm:$0xff]
    %v187 = vld [vmem:[#allocation5 + $0x1c0] sm:$0xff]
    %v188 = vld [vmem:[#allocation5 + $0x1c8] sm:$0xff]
    %v189 = vld [vmem:[#allocation5 + $0x1d0] sm:$0xff]
    %v190 = vld [vmem:[#allocation5 + $0x1d8] sm:$0xff]
    %v191 = vld [vmem:[#allocation5 + $0x1e0] sm:$0xff]
    %v192 = vld [vmem:[#allocation5 + $0x1e8] sm:$0xff]
    %v193 = vld [vmem:[#allocation5 + $0x1f0] sm:$0xff]
    %v194 = vld [vmem:[#allocation5 + $0x1f8] sm:$0xff]
    %v195 = vld [vmem:[#allocation5 + $0x200] sm:$0xff]
    %v196 = vld [vmem:[#allocation5 + $0x208] sm:$0xff]
    %v197 = vld [vmem:[#allocation5 + $0x210] sm:$0xff]
    %v198 = vld [vmem:[#allocation5 + $0x218] sm:$0xff]
    %v199 = vld [vmem:[#allocation5 + $0x220] sm:$0xff]
    %v200 = vld [vmem:[#allocation5 + $0x228] sm:$0xff]
    %v201 = vld [vmem:[#allocation5 + $0x230] sm:$0xff]
    %v202 = vld [vmem:[#allocation5 + $0x238] sm:$0xff]
    %v203 = vld [vmem:[#allocation5 + $0x240] sm:$0xff]
    %v204 = vld [vmem:[#allocation5 + $0x248] sm:$0xff]
    %v205 = vld [vmem:[#allocation5 + $0x250] sm:$0xff]
    %v206 = vld [vmem:[#allocation5 + $0x258] sm:$0xff]
    %v207 = vld [vmem:[#allocation5 + $0x260] sm:$0xff]
    %v208 = vld [vmem:[#allocation5 + $0x268] sm:$0xff]
    %v209 = vld [vmem:[#allocation5 + $0x270] sm:$0xff]
    %v210 = vld [vmem:[#allocation5 + $0x278] sm:$0xff]
    %v211 = vld [vmem:[#allocation5 + $0x280] sm:$0xff]
    %v212 = vld [vmem:[#allocation5 + $0x288] sm:$0xff]
    %v213 = vld [vmem:[#allocation5 + $0x290] sm:$0xff]
    %v214 = vld [vmem:[#allocation5 + $0x298] sm:$0xff]
    %v215 = vld [vmem:[#allocation5 + $0x2a0] sm:$0xff]
    %v216 = vld [vmem:[#allocation5 + $0x2a8] sm:$0xff]
    %v217 = vld [vmem:[#allocation5 + $0x2b0] sm:$0xff]
    %v218 = vld [vmem:[#allocation5 + $0x2b8] sm:$0xff]
    %v219 = vld [vmem:[#allocation5 + $0x2c0] sm:$0xff]
    %v220 = vld [vmem:[#allocation5 + $0x2c8] sm:$0xff]
    %v221 = vld [vmem:[#allocation5 + $0x2d0] sm:$0xff]
    %v222 = vld [vmem:[#allocation5 + $0x2d8] sm:$0xff]
    %v223 = vld [vmem:[#allocation5 + $0x2e0] sm:$0xff]
    %v224 = vld [vmem:[#allocation5 + $0x2e8] sm:$0xff]
    %v225 = vld [vmem:[#allocation5 + $0x2f0] sm:$0xff]
    %v226 = vld [vmem:[#allocation5 + $0x2f8] sm:$0xff]
    %v227 = vld [vmem:[#allocation5 + $0x300] sm:$0xff]
    %v228 = vld [vmem:[#allocation5 + $0x308] sm:$0xff]
    %v229 = vld [vmem:[#allocation5 + $0x310] sm:$0xff]
    %v230 = vld [vmem:[#allocation5 + $0x318] sm:$0xff]
    %v231 = vld [vmem:[#allocation5 + $0x320] sm:$0xff]
    %v232 = vld [vmem:[#allocation5 + $0x328] sm:$0xff]
    %v233 = vld [vmem:[#allocation5 + $0x330] sm:$0xff]
    %v234 = vld [vmem:[#allocation5 + $0x338] sm:$0xff]
    %v235 = vld [vmem:[#allocation5 + $0x340] sm:$0xff]
    %v236 = vld [vmem:[#allocation5 + $0x348] sm:$0xff]
    %v237 = vld [vmem:[#allocation5 + $0x350] sm:$0xff]
    %v238 = vld [vmem:[#allocation5 + $0x358] sm:$0xff]
    %v239 = vld [vmem:[#allocation5 + $0x360] sm:$0xff]
    %v240 = vld [vmem:[#allocation5 + $0x368] sm:$0xff]
    %v241 = vld [vmem:[#allocation5 + $0x370] sm:$0xff]
    %v242 = vld [vmem:[#allocation5 + $0x378] sm:$0xff]
    %v243 = vld [vmem:[#allocation5 + $0x380] sm:$0xff]
    %v244 = vld [vmem:[#allocation5 + $0x388] sm:$0xff]
    %v245 = vld [vmem:[#allocation5 + $0x390] sm:$0xff]
    %v246 = vld [vmem:[#allocation5 + $0x398] sm:$0xff]
    %v247 = vld [vmem:[#allocation5 + $0x3a0] sm:$0xff]
    %v248 = vld [vmem:[#allocation5 + $0x3a8] sm:$0xff]
    %v249 = vld [vmem:[#allocation5 + $0x3b0] sm:$0xff]
    %v250 = vld [vmem:[#allocation5 + $0x3b8] sm:$0xff]
    %v251 = vld [vmem:[#allocation5 + $0x3c0] sm:$0xff]
    %v252 = vld [vmem:[#allocation5 + $0x3c8] sm:$0xff]
    %v253 = vld [vmem:[#allocation5 + $0x3d0] sm:$0xff]
    %v254 = vld [vmem:[#allocation5 + $0x3d8] sm:$0xff]
    %v255 = vld [vmem:[#allocation5 + $0x3e0] sm:$0xff]
    %v256 = vld [vmem:[#allocation5 + $0x3e8] sm:$0xff]
    %v257 = vld [vmem:[#allocation5 + $0x3f0] sm:$0xff]
    %v258 = vld [vmem:[#allocation5 + $0x3f8] sm:$0xff]
    %v259 = vld [vmem:[#allocation5 + $0x400] sm:$0xff]
    %v260 = vld [vmem:[#allocation5 + $0x408] sm:$0xff]
    %v261 = vld [vmem:[#allocation5 + $0x410] sm:$0xff]
    %v262 = vld [vmem:[#allocation5 + $0x418] sm:$0xff]
    %v263 = vld [vmem:[#allocation5 + $0x420] sm:$0xff]
    %v264 = vld [vmem:[#allocation5 + $0x428] sm:$0xff]
    %v265 = vld [vmem:[#allocation5 + $0x430] sm:$0xff]
    %v266 = vld [vmem:[#allocation5 + $0x438] sm:$0xff]
    %v267 = vld [vmem:[#allocation5 + $0x440] sm:$0xff]
    %v268 = vld [vmem:[#allocation5 + $0x448] sm:$0xff]
    %v269 = vld [vmem:[#allocation5 + $0x450] sm:$0xff]
    %v270 = vld [vmem:[#allocation5 + $0x458] sm:$0xff]
    %v271 = vld [vmem:[#allocation5 + $0x460] sm:$0xff]
    %v272 = vld [vmem:[#allocation5 + $0x468] sm:$0xff]
    %v273 = vld [vmem:[#allocation5 + $0x470] sm:$0xff]
    %v274 = vld [vmem:[#allocation5 + $0x478] sm:$0xff]
    %v275 = vld [vmem:[#allocation5 + $0x480] sm:$0xff]
    %v276 = vld [vmem:[#allocation5 + $0x488] sm:$0xff]
    %v277 = vld [vmem:[#allocation5 + $0x490] sm:$0xff]
    %v278 = vld [vmem:[#allocation5 + $0x498] sm:$0xff]
    %v279 = vld [vmem:[#allocation5 + $0x4a0] sm:$0xff]
    %v280 = vld [vmem:[#allocation5 + $0x4a8] sm:$0xff]
    %v281 = vld [vmem:[#allocation5 + $0x4b0] sm:$0xff]
    %v282 = vld [vmem:[#allocation5 + $0x4b8] sm:$0xff]
    %v283 = vld [vmem:[#allocation5 + $0x4c0] sm:$0xff]
    %v284 = vld [vmem:[#allocation5 + $0x4c8] sm:$0xff]
    %v285 = vld [vmem:[#allocation5 + $0x4d0] sm:$0xff]
    %v286 = vld [vmem:[#allocation5 + $0x4d8] sm:$0xff]
    %v287 = vld [vmem:[#allocation5 + $0x4e0] sm:$0xff]
    %v288 = vld [vmem:[#allocation5 + $0x4e8] sm:$0xff]
    %v289 = vld [vmem:[#allocation5 + $0x4f0] sm:$0xff]
    %v290 = vld [vmem:[#allocation5 + $0x4f8] sm:$0xff]
    %v291 = vld [vmem:[#allocation5 + $0x500] sm:$0xff]
    %v292 = vld [vmem:[#allocation5 + $0x508] sm:$0xff]
    %v293 = vld [vmem:[#allocation5 + $0x510] sm:$0xff]
    %v294 = vld [vmem:[#allocation5 + $0x518] sm:$0xff]
    %v295 = vld [vmem:[#allocation5 + $0x520] sm:$0xff]
    %v296 = vld [vmem:[#allocation5 + $0x528] sm:$0xff]
    %v297 = vld [vmem:[#allocation5 + $0x530] sm:$0xff]
    %v298 = vld [vmem:[#allocation5 + $0x538] sm:$0xff]
    %v299 = vld [vmem:[#allocation5 + $0x540] sm:$0xff]
    %v300 = vld [vmem:[#allocation5 + $0x548] sm:$0xff]
    %v301 = vld [vmem:[#allocation5 + $0x550] sm:$0xff]
    %v302 = vld [vmem:[#allocation5 + $0x558] sm:$0xff]
    %v303 = vld [vmem:[#allocation5 + $0x560] sm:$0xff]
    %v304 = vld [vmem:[#allocation5 + $0x568] sm:$0xff]
    %v305 = vld [vmem:[#allocation5 + $0x570] sm:$0xff]
    %v306 = vld [vmem:[#allocation5 + $0x578] sm:$0xff]
    %v307 = vld [vmem:[#allocation5 + $0x580] sm:$0xff]
    %v308 = vld [vmem:[#allocation5 + $0x588] sm:$0xff]
    %v309 = vld [vmem:[#allocation5 + $0x590] sm:$0xff]
    %v310 = vld [vmem:[#allocation5 + $0x598] sm:$0xff]
    %v311 = vld [vmem:[#allocation5 + $0x5a0] sm:$0xff]
    %v312 = vld [vmem:[#allocation5 + $0x5a8] sm:$0xff]
    %v313 = vld [vmem:[#allocation5 + $0x5b0] sm:$0xff]
    %v314 = vld [vmem:[#allocation5 + $0x5b8] sm:$0xff]
    %v315 = vld [vmem:[#allocation5 + $0x5c0] sm:$0xff]
    %v316 = vld [vmem:[#allocation5 + $0x5c8] sm:$0xff]
    %v317 = vld [vmem:[#allocation5 + $0x5d0] sm:$0xff]
    %v318 = vld [vmem:[#allocation5 + $0x5d8] sm:$0xff]
    %v319 = vld [vmem:[#allocation5 + $0x5e0] sm:$0xff]
    %v320 = vld [vmem:[#allocation5 + $0x5e8] sm:$0xff]
    %v321 = vld [vmem:[#allocation5 + $0x5f0] sm:$0xff]
    %v322 = vld [vmem:[#allocation5 + $0x5f8] sm:$0xff]
    %v323 = vld [vmem:[#allocation5 + $0x600] sm:$0xff]
    %v324 = vld [vmem:[#allocation5 + $0x608] sm:$0xff]
    %v325 = vld [vmem:[#allocation5 + $0x610] sm:$0xff]
    %v326 = vld [vmem:[#allocation5 + $0x618] sm:$0xff]
    %v327 = vld [vmem:[#allocation5 + $0x620] sm:$0xff]
    %v328 = vld [vmem:[#allocation5 + $0x628] sm:$0xff]
    %v329 = vld [vmem:[#allocation5 + $0x630] sm:$0xff]
    %v330 = vld [vmem:[#allocation5 + $0x638] sm:$0xff]
    %v331 = vld [vmem:[#allocation5 + $0x640] sm:$0xff]
    %v332 = vld [vmem:[#allocation5 + $0x648] sm:$0xff]
    %v333 = vld [vmem:[#allocation5 + $0x650] sm:$0xff]
    %v334 = vld [vmem:[#allocation5 + $0x658] sm:$0xff]
    %v335 = vld [vmem:[#allocation5 + $0x660] sm:$0xff]
    %v336 = vld [vmem:[#allocation5 + $0x668] sm:$0xff]
    %v337 = vld [vmem:[#allocation5 + $0x670] sm:$0xff]
    %v338 = vld [vmem:[#allocation5 + $0x678] sm:$0xff]
    %v339 = vld [vmem:[#allocation5 + $0x680] sm:$0xff]
    %v340 = vld [vmem:[#allocation5 + $0x688] sm:$0xff]
    %v341 = vld [vmem:[#allocation5 + $0x690] sm:$0xff]
    %v342 = vld [vmem:[#allocation5 + $0x698] sm:$0xff]
    %v343 = vld [vmem:[#allocation5 + $0x6a0] sm:$0xff]
    %v344 = vld [vmem:[#allocation5 + $0x6a8] sm:$0xff]
    %v345 = vld [vmem:[#allocation5 + $0x6b0] sm:$0xff]
    %v346 = vld [vmem:[#allocation5 + $0x6b8] sm:$0xff]
    %v347 = vld [vmem:[#allocation5 + $0x6c0] sm:$0xff]
    %v348 = vld [vmem:[#allocation5 + $0x6c8] sm:$0xff]
    %v349 = vld [vmem:[#allocation5 + $0x6d0] sm:$0xff]
    %v350 = vld [vmem:[#allocation5 + $0x6d8] sm:$0xff]
    %v351 = vld [vmem:[#allocation5 + $0x6e0] sm:$0xff]
    %v352 = vld [vmem:[#allocation5 + $0x6e8] sm:$0xff]
    %v353 = vld [vmem:[#allocation5 + $0x6f0] sm:$0xff]
    %v354 = vld [vmem:[#allocation5 + $0x6f8] sm:$0xff]
    %v355 = vld [vmem:[#allocation5 + $0x700] sm:$0xff]
    %v356 = vld [vmem:[#allocation5 + $0x708] sm:$0xff]
    %v357 = vld [vmem:[#allocation5 + $0x710] sm:$0xff]
    %v358 = vld [vmem:[#allocation5 + $0x718] sm:$0xff]
    %v359 = vld [vmem:[#allocation5 + $0x720] sm:$0xff]
    %v360 = vld [vmem:[#allocation5 + $0x728] sm:$0xff]
    %v361 = vld [vmem:[#allocation5 + $0x730] sm:$0xff]
    %v362 = vld [vmem:[#allocation5 + $0x738] sm:$0xff]
    %v363 = vld [vmem:[#allocation5 + $0x740] sm:$0xff]
    %v364 = vld [vmem:[#allocation5 + $0x748] sm:$0xff]
    %v365 = vld [vmem:[#allocation5 + $0x750] sm:$0xff]
    %v366 = vld [vmem:[#allocation5 + $0x758] sm:$0xff]
    %v367 = vld [vmem:[#allocation5 + $0x760] sm:$0xff]
    %v368 = vld [vmem:[#allocation5 + $0x768] sm:$0xff]
    %v369 = vld [vmem:[#allocation5 + $0x770] sm:$0xff]
    %v370 = vld [vmem:[#allocation5 + $0x778] sm:$0xff]
    %v371 = vld [vmem:[#allocation5 + $0x780] sm:$0xff]
    %v372 = vld [vmem:[#allocation5 + $0x788] sm:$0xff]
    %v373 = vld [vmem:[#allocation5 + $0x790] sm:$0xff]
    %v374 = vld [vmem:[#allocation5 + $0x798] sm:$0xff]
    %v375 = vld [vmem:[#allocation5 + $0x7a0] sm:$0xff]
    %v376 = vld [vmem:[#allocation5 + $0x7a8] sm:$0xff]
    %v377 = vld [vmem:[#allocation5 + $0x7b0] sm:$0xff]
    %v378 = vld [vmem:[#allocation5 + $0x7b8] sm:$0xff]
    %v379 = vld [vmem:[#allocation5 + $0x7c0] sm:$0xff]
    %v380 = vld [vmem:[#allocation5 + $0x7c8] sm:$0xff]
    %v381 = vld [vmem:[#allocation5 + $0x7d0] sm:$0xff]
    %v382 = vld [vmem:[#allocation5 + $0x7d8] sm:$0xff]
    %v383 = vld [vmem:[#allocation5 + $0x7e0] sm:$0xff]
    %v384 = vld [vmem:[#allocation5 + $0x7e8] sm:$0xff]
    %v385 = vld [vmem:[#allocation5 + $0x7f0] sm:$0xff]
    %v386 = vld [vmem:[#allocation5 + $0x7f8] sm:$0xff]
    %v387 = vld [vmem:[#allocation5 + $0x800] sm:$0xff]
    %v388 = vld [vmem:[#allocation5 + $0x808] sm:$0xff]
    %v389 = vld [vmem:[#allocation5 + $0x810] sm:$0xff]
    %v390 = vld [vmem:[#allocation5 + $0x818] sm:$0xff]
    %v391 = vld [vmem:[#allocation5 + $0x820] sm:$0xff]
    %v392 = vld [vmem:[#allocation5 + $0x828] sm:$0xff]
    %v393 = vld [vmem:[#allocation5 + $0x830] sm:$0xff]
    %v394 = vld [vmem:[#allocation5 + $0x838] sm:$0xff]
    %v395 = vld [vmem:[#allocation5 + $0x840] sm:$0xff]
    %v396 = vld [vmem:[#allocation5 + $0x848] sm:$0xff]
    %v397 = vld [vmem:[#allocation5 + $0x850] sm:$0xff]
    %v398 = vld [vmem:[#allocation5 + $0x858] sm:$0xff]
    %v399 = vld [vmem:[#allocation5 + $0x860] sm:$0xff]
    %v400 = vld [vmem:[#allocation5 + $0x868] sm:$0xff]
    %v401 = vld [vmem:[#allocation5 + $0x870] sm:$0xff]
    %v402 = vld [vmem:[#allocation5 + $0x878] sm:$0xff]
    %v403 = vld [vmem:[#allocation5 + $0x880] sm:$0xff]
    %v404 = vld [vmem:[#allocation5 + $0x888] sm:$0xff]
    %v405 = vld [vmem:[#allocation5 + $0x890] sm:$0xff]
    %v406 = vld [vmem:[#allocation5 + $0x898] sm:$0xff]
    %v407 = vld [vmem:[#allocation5 + $0x8a0] sm:$0xff]
    %v408 = vld [vmem:[#allocation5 + $0x8a8] sm:$0xff]
    %v409 = vld [vmem:[#allocation5 + $0x8b0] sm:$0xff]
    %v410 = vld [vmem:[#allocation5 + $0x8b8] sm:$0xff]
    %v411 = vld [vmem:[#allocation5 + $0x8c0] sm:$0xff]
    %v412 = vld [vmem:[#allocation5 + $0x8c8] sm:$0xff]
    %v413 = vld [vmem:[#allocation5 + $0x8d0] sm:$0xff]
    %v414 = vld [vmem:[#allocation5 + $0x8d8] sm:$0xff]
    %v415 = vld [vmem:[#allocation5 + $0x8e0] sm:$0xff]
    %v416 = vld [vmem:[#allocation5 + $0x8e8] sm:$0xff]
    %v417 = vld [vmem:[#allocation5 + $0x8f0] sm:$0xff]
    %v418 = vld [vmem:[#allocation5 + $0x8f8] sm:$0xff]
    %v419 = vld [vmem:[#allocation5 + $0x900] sm:$0xff]
    %v420 = vld [vmem:[#allocation5 + $0x908] sm:$0xff]
    %v421 = vld [vmem:[#allocation5 + $0x910] sm:$0xff]
    %v422 = vld [vmem:[#allocation5 + $0x918] sm:$0xff]
    %v423 = vld [vmem:[#allocation5 + $0x920] sm:$0xff]
    %v424 = vld [vmem:[#allocation5 + $0x928] sm:$0xff]
    %v425 = vld [vmem:[#allocation5 + $0x930] sm:$0xff]
    %v426 = vld [vmem:[#allocation5 + $0x938] sm:$0xff]
    %v427 = vld [vmem:[#allocation5 + $0x940] sm:$0xff]
    %v428 = vld [vmem:[#allocation5 + $0x948] sm:$0xff]
    %v429 = vld [vmem:[#allocation5 + $0x950] sm:$0xff]
    %v430 = vld [vmem:[#allocation5 + $0x958] sm:$0xff]
    %v431 = vld [vmem:[#allocation5 + $0x960] sm:$0xff]
    %v432 = vld [vmem:[#allocation5 + $0x968] sm:$0xff]
    %v433 = vld [vmem:[#allocation5 + $0x970] sm:$0xff]
    %v434 = vld [vmem:[#allocation5 + $0x978] sm:$0xff]
    %v435 = vld [vmem:[#allocation5 + $0x980] sm:$0xff]
    %v436 = vld [vmem:[#allocation5 + $0x988] sm:$0xff]
    %v437 = vld [vmem:[#allocation5 + $0x990] sm:$0xff]
    %v438 = vld [vmem:[#allocation5 + $0x998] sm:$0xff]
    %v439 = vld [vmem:[#allocation5 + $0x9a0] sm:$0xff]
    %v440 = vld [vmem:[#allocation5 + $0x9a8] sm:$0xff]
    %v441 = vld [vmem:[#allocation5 + $0x9b0] sm:$0xff]
    %v442 = vld [vmem:[#allocation5 + $0x9b8] sm:$0xff]
    %v443 = vld [vmem:[#allocation5 + $0x9c0] sm:$0xff]
    %v444 = vld [vmem:[#allocation5 + $0x9c8] sm:$0xff]
    %v445 = vld [vmem:[#allocation5 + $0x9d0] sm:$0xff]
    %v446 = vld [vmem:[#allocation5 + $0x9d8] sm:$0xff]
    %v447 = vld [vmem:[#allocation5 + $0x9e0] sm:$0xff]
    %v448 = vld [vmem:[#allocation5 + $0x9e8] sm:$0xff]
    %v449 = vld [vmem:[#allocation5 + $0x9f0] sm:$0xff]
    %v450 = vld [vmem:[#allocation5 + $0x9f8] sm:$0xff]
    %v451 = vld [vmem:[#allocation5 + $0xa00] sm:$0xff]
    %v452 = vld [vmem:[#allocation5 + $0xa08] sm:$0xff]
    %v453 = vld [vmem:[#allocation5 + $0xa10] sm:$0xff]
    %v454 = vld [vmem:[#allocation5 + $0xa18] sm:$0xff]
    %v455 = vld [vmem:[#allocation5 + $0xa20] sm:$0xff]
    %v456 = vld [vmem:[#allocation5 + $0xa28] sm:$0xff]
    %v457 = vld [vmem:[#allocation5 + $0xa30] sm:$0xff]
    %v458 = vld [vmem:[#allocation5 + $0xa38] sm:$0xff]
    %v459 = vld [vmem:[#allocation5 + $0xa40] sm:$0xff]
    %v460 = vld [vmem:[#allocation5 + $0xa48] sm:$0xff]
    %v461 = vld [vmem:[#allocation5 + $0xa50] sm:$0xff]
    %v462 = vld [vmem:[#allocation5 + $0xa58] sm:$0xff]
    %v463 = vld [vmem:[#allocation5 + $0xa60] sm:$0xff]
    %v464 = vld [vmem:[#allocation5 + $0xa68] sm:$0xff]
    %v465 = vld [vmem:[#allocation5 + $0xa70] sm:$0xff]
    %v466 = vld [vmem:[#allocation5 + $0xa78] sm:$0xff]
    %v467 = vld [vmem:[#allocation5 + $0xa80] sm:$0xff]
    %v468 = vld [vmem:[#allocation5 + $0xa88] sm:$0xff]
    %v469 = vld [vmem:[#allocation5 + $0xa90] sm:$0xff]
    %v470 = vld [vmem:[#allocation5 + $0xa98] sm:$0xff]
    %v471 = vld [vmem:[#allocation5 + $0xaa0] sm:$0xff]
    %v472 = vld [vmem:[#allocation5 + $0xaa8] sm:$0xff]
    %v473 = vld [vmem:[#allocation5 + $0xab0] sm:$0xff]
    %v474 = vld [vmem:[#allocation5 + $0xab8] sm:$0xff]
    %v475 = vld [vmem:[#allocation5 + $0xac0] sm:$0xff]
    %v476 = vld [vmem:[#allocation5 + $0xac8] sm:$0xff]
    %v477 = vld [vmem:[#allocation5 + $0xad0] sm:$0xff]
    %v478 = vld [vmem:[#allocation5 + $0xad8] sm:$0xff]
    %v479 = vld [vmem:[#allocation5 + $0xae0] sm:$0xff]
    %v480 = vld [vmem:[#allocation5 + $0xae8] sm:$0xff]
    %v481 = vld [vmem:[#allocation5 + $0xaf0] sm:$0xff]
    %v482 = vld [vmem:[#allocation5 + $0xaf8] sm:$0xff]
    %v483 = vld [vmem:[#allocation5 + $0xb00] sm:$0xff]
    %v484 = vld [vmem:[#allocation5 + $0xb08] sm:$0xff]
    %v485 = vld [vmem:[#allocation5 + $0xb10] sm:$0xff]
    %v486 = vld [vmem:[#allocation5 + $0xb18] sm:$0xff]
    %v487 = vld [vmem:[#allocation5 + $0xb20] sm:$0xff]
    %v488 = vld [vmem:[#allocation5 + $0xb28] sm:$0xff]
    %v489 = vld [vmem:[#allocation5 + $0xb30] sm:$0xff]
    %v490 = vld [vmem:[#allocation5 + $0xb38] sm:$0xff]
    %v491 = vld [vmem:[#allocation5 + $0xb40] sm:$0xff]
    %v492 = vld [vmem:[#allocation5 + $0xb48] sm:$0xff]
    %v493 = vld [vmem:[#allocation5 + $0xb50] sm:$0xff]
    %v494 = vld [vmem:[#allocation5 + $0xb58] sm:$0xff]
    %v495 = vld [vmem:[#allocation5 + $0xb60] sm:$0xff]
    %v496 = vld [vmem:[#allocation5 + $0xb68] sm:$0xff]
    %v497 = vld [vmem:[#allocation5 + $0xb70] sm:$0xff]
    %v498 = vld [vmem:[#allocation5 + $0xb78] sm:$0xff]
    %v499 = vld [vmem:[#allocation5 + $0xb80] sm:$0xff]
    %v500 = vld [vmem:[#allocation5 + $0xb88] sm:$0xff]
    %v501 = vld [vmem:[#allocation5 + $0xb90] sm:$0xff]
    %v502 = vld [vmem:[#allocation5 + $0xb98] sm:$0xff]
    %v503 = vld [vmem:[#allocation5 + $0xba0] sm:$0xff]
    %v504 = vld [vmem:[#allocation5 + $0xba8] sm:$0xff]
    %v505 = vld [vmem:[#allocation5 + $0xbb0] sm:$0xff]
    %v506 = vld [vmem:[#allocation5 + $0xbb8] sm:$0xff]
    %v507 = vld [vmem:[#allocation5 + $0xbc0] sm:$0xff]
    %v508 = vld [vmem:[#allocation5 + $0xbc8] sm:$0xff]
    %v509 = vld [vmem:[#allocation5 + $0xbd0] sm:$0xff]
    %v510 = vld [vmem:[#allocation5 + $0xbd8] sm:$0xff]
    %v511 = vld [vmem:[#allocation5 + $0xbe0] sm:$0xff]
    %v512 = vld [vmem:[#allocation5 + $0xbe8] sm:$0xff]
    %v513 = vld [vmem:[#allocation5 + $0xbf0] sm:$0xff]
    %v514 = vld [vmem:[#allocation5 + $0xbf8] sm:$0xff]
    %v515 = vld [vmem:[#allocation5 + $0xc00] sm:$0xff]
    %v516 = vld [vmem:[#allocation5 + $0xc08] sm:$0xff]
    %v517 = vld [vmem:[#allocation5 + $0xc10] sm:$0xff]
    %v518 = vld [vmem:[#allocation5 + $0xc18] sm:$0xff]
    %v519 = vld [vmem:[#allocation5 + $0xc20] sm:$0xff]
    %v520 = vld [vmem:[#allocation5 + $0xc28] sm:$0xff]
    %v521 = vld [vmem:[#allocation5 + $0xc30] sm:$0xff]
    %v522 = vld [vmem:[#allocation5 + $0xc38] sm:$0xff]
    %v523 = vld [vmem:[#allocation5 + $0xc40] sm:$0xff]
    %v524 = vld [vmem:[#allocation5 + $0xc48] sm:$0xff]
    %v525 = vld [vmem:[#allocation5 + $0xc50] sm:$0xff]
    %v526 = vld [vmem:[#allocation5 + $0xc58] sm:$0xff]
    %v527 = vld [vmem:[#allocation5 + $0xc60] sm:$0xff]
    %v528 = vld [vmem:[#allocation5 + $0xc68] sm:$0xff]
    %v529 = vld [vmem:[#allocation5 + $0xc70] sm:$0xff]
    %v530 = vld [vmem:[#allocation5 + $0xc78] sm:$0xff]
    %v531 = vld [vmem:[#allocation5 + $0xc80] sm:$0xff]
    %v532 = vld [vmem:[#allocation5 + $0xc88] sm:$0xff]
    %v533 = vld [vmem:[#allocation5 + $0xc90] sm:$0xff]
    %v534 = vld [vmem:[#allocation5 + $0xc98] sm:$0xff]
    %v535 = vld [vmem:[#allocation5 + $0xca0] sm:$0xff]
    %v536 = vld [vmem:[#allocation5 + $0xca8] sm:$0xff]
    %v537 = vld [vmem:[#allocation5 + $0xcb0] sm:$0xff]
    %v538 = vld [vmem:[#allocation5 + $0xcb8] sm:$0xff]
    %v539 = vld [vmem:[#allocation5 + $0xcc0] sm:$0xff]
    %v540 = vld [vmem:[#allocation5 + $0xcc8] sm:$0xff]
    %v541 = vld [vmem:[#allocation5 + $0xcd0] sm:$0xff]
    %v542 = vld [vmem:[#allocation5 + $0xcd8] sm:$0xff]
    %v543 = vld [vmem:[#allocation5 + $0xce0] sm:$0xff]
    %v544 = vld [vmem:[#allocation5 + $0xce8] sm:$0xff]
    %v545 = vld [vmem:[#allocation5 + $0xcf0] sm:$0xff]
    %v546 = vld [vmem:[#allocation5 + $0xcf8] sm:$0xff]
    %v547 = vld [vmem:[#allocation5 + $0xd00] sm:$0xff]
    %v548 = vld [vmem:[#allocation5 + $0xd08] sm:$0xff]
    %v549 = vld [vmem:[#allocation5 + $0xd10] sm:$0xff]
    %v550 = vld [vmem:[#allocation5 + $0xd18] sm:$0xff]
    %v551 = vld [vmem:[#allocation5 + $0xd20] sm:$0xff]
    %v552 = vld [vmem:[#allocation5 + $0xd28] sm:$0xff]
    %v553 = vld [vmem:[#allocation5 + $0xd30] sm:$0xff]
    %v554 = vld [vmem:[#allocation5 + $0xd38] sm:$0xff]
    %v555 = vld [vmem:[#allocation5 + $0xd40] sm:$0xff]
    %v556 = vld [vmem:[#allocation5 + $0xd48] sm:$0xff]
    %v557 = vld [vmem:[#allocation5 + $0xd50] sm:$0xff]
    %v558 = vld [vmem:[#allocation5 + $0xd58] sm:$0xff]
    %v559 = vld [vmem:[#allocation5 + $0xd60] sm:$0xff]
    %v560 = vld [vmem:[#allocation5 + $0xd68] sm:$0xff]
    %v561 = vld [vmem:[#allocation5 + $0xd70] sm:$0xff]
    %v562 = vld [vmem:[#allocation5 + $0xd78] sm:$0xff]
    %v563 = vld [vmem:[#allocation5 + $0xd80] sm:$0xff]
    %v564 = vld [vmem:[#allocation5 + $0xd88] sm:$0xff]
    %v565 = vld [vmem:[#allocation5 + $0xd90] sm:$0xff]
    %v566 = vld [vmem:[#allocation5 + $0xd98] sm:$0xff]
    %v567 = vld [vmem:[#allocation5 + $0xda0] sm:$0xff]
    %v568 = vld [vmem:[#allocation5 + $0xda8] sm:$0xff]
    %v569 = vld [vmem:[#allocation5 + $0xdb0] sm:$0xff]
    %v570 = vld [vmem:[#allocation5 + $0xdb8] sm:$0xff]
    %v571 = vld [vmem:[#allocation5 + $0xdc0] sm:$0xff]
    %v572 = vld [vmem:[#allocation5 + $0xdc8] sm:$0xff]
    %v573 = vld [vmem:[#allocation5 + $0xdd0] sm:$0xff]
    %v574 = vld [vmem:[#allocation5 + $0xdd8] sm:$0xff]
    %v575 = vld [vmem:[#allocation5 + $0xde0] sm:$0xff]
    %v576 = vld [vmem:[#allocation5 + $0xde8] sm:$0xff]
    %v577 = vld [vmem:[#allocation5 + $0xdf0] sm:$0xff]
    %v578 = vld [vmem:[#allocation5 + $0xdf8] sm:$0xff]
    %v579 = vld [vmem:[#allocation5 + $0xe00] sm:$0xff]
    %v580 = vld [vmem:[#allocation5 + $0xe08] sm:$0xff]
    %v581 = vld [vmem:[#allocation5 + $0xe10] sm:$0xff]
    %v582 = vld [vmem:[#allocation5 + $0xe18] sm:$0xff]
    %v583 = vld [vmem:[#allocation5 + $0xe20] sm:$0xff]
    %v584 = vld [vmem:[#allocation5 + $0xe28] sm:$0xff]
    %v585 = vld [vmem:[#allocation5 + $0xe30] sm:$0xff]
    %v586 = vld [vmem:[#allocation5 + $0xe38] sm:$0xff]
    %v587 = vld [vmem:[#allocation5 + $0xe40] sm:$0xff]
    %v588 = vld [vmem:[#allocation5 + $0xe48] sm:$0xff]
    %v589 = vld [vmem:[#allocation5 + $0xe50] sm:$0xff]
    %v590 = vld [vmem:[#allocation5 + $0xe58] sm:$0xff]
    %v591 = vld [vmem:[#allocation5 + $0xe60] sm:$0xff]
    %v592 = vld [vmem:[#allocation5 + $0xe68] sm:$0xff]
    %v593 = vld [vmem:[#allocation5 + $0xe70] sm:$0xff]
    %v594 = vld [vmem:[#allocation5 + $0xe78] sm:$0xff]
    %v595 = vld [vmem:[#allocation5 + $0xe80] sm:$0xff]
    %v596 = vld [vmem:[#allocation5 + $0xe88] sm:$0xff]
    %v597 = vld [vmem:[#allocation5 + $0xe90] sm:$0xff]
    %v598 = vld [vmem:[#allocation5 + $0xe98] sm:$0xff]
    %v599 = vld [vmem:[#allocation5 + $0xea0] sm:$0xff]
    %v600 = vld [vmem:[#allocation5 + $0xea8] sm:$0xff]
    %v601 = vld [vmem:[#allocation5 + $0xeb0] sm:$0xff]
    %v602 = vld [vmem:[#allocation5 + $0xeb8] sm:$0xff]
    %v603 = vld [vmem:[#allocation5 + $0xec0] sm:$0xff]
    %v604 = vld [vmem:[#allocation5 + $0xec8] sm:$0xff]
    %v605 = vld [vmem:[#allocation5 + $0xed0] sm:$0xff]
    %v606 = vld [vmem:[#allocation5 + $0xed8] sm:$0xff]
    %v607 = vld [vmem:[#allocation5 + $0xee0] sm:$0xff]
    %v608 = vld [vmem:[#allocation5 + $0xee8] sm:$0xff]
    %v609 = vld [vmem:[#allocation5 + $0xef0] sm:$0xff]
    %v610 = vld [vmem:[#allocation5 + $0xef8] sm:$0xff]
    %v611 = vld [vmem:[#allocation5 + $0xf00] sm:$0xff]
    %v612 = vld [vmem:[#allocation5 + $0xf08] sm:$0xff]
    %v613 = vld [vmem:[#allocation5 + $0xf10] sm:$0xff]
    %v614 = vld [vmem:[#allocation5 + $0xf18] sm:$0xff]
    %v615 = vld [vmem:[#allocation5 + $0xf20] sm:$0xff]
    %v616 = vld [vmem:[#allocation5 + $0xf28] sm:$0xff]
    %v617 = vld [vmem:[#allocation5 + $0xf30] sm:$0xff]
    %v618 = vld [vmem:[#allocation5 + $0xf38] sm:$0xff]
    %v619 = vld [vmem:[#allocation5 + $0xf40] sm:$0xff]
    %v620 = vld [vmem:[#allocation5 + $0xf48] sm:$0xff]
    %v621 = vld [vmem:[#allocation5 + $0xf50] sm:$0xff]
    %v622 = vld [vmem:[#allocation5 + $0xf58] sm:$0xff]
    %v623 = vld [vmem:[#allocation5 + $0xf60] sm:$0xff]
    %v624 = vld [vmem:[#allocation5 + $0xf68] sm:$0xff]
    %v625 = vld [vmem:[#allocation5 + $0xf70] sm:$0xff]
    %v626 = vld [vmem:[#allocation5 + $0xf78] sm:$0xff]
    %v627 = vld [vmem:[#allocation5 + $0xf80] sm:$0xff]
    %v628 = vld [vmem:[#allocation5 + $0xf88] sm:$0xff]
    %v629 = vld [vmem:[#allocation5 + $0xf90] sm:$0xff]
    %v630 = vld [vmem:[#allocation5 + $0xf98] sm:$0xff]
    %v631 = vld [vmem:[#allocation5 + $0xfa0] sm:$0xff]
    %v632 = vld [vmem:[#allocation5 + $0xfa8] sm:$0xff]
    %v633 = vld [vmem:[#allocation5 + $0xfb0] sm:$0xff]
    %v634 = vld [vmem:[#allocation5 + $0xfb8] sm:$0xff]
    %v635 = vld [vmem:[#allocation5 + $0xfc0] sm:$0xff]
    %v636 = vld [vmem:[#allocation5 + $0xfc8] sm:$0xff]
    %v637 = vld [vmem:[#allocation5 + $0xfd0] sm:$0xff]
    %v638 = vld [vmem:[#allocation5 + $0xfd8] sm:$0xff]
    %v639 = vld [vmem:[#allocation5 + $0xfe0] sm:$0xff]
    %v640 = vld [vmem:[#allocation5 + $0xfe8] sm:$0xff]
    %v641 = vld [vmem:[#allocation5 + $0xff0] sm:$0xff]
    %v642 = vld [vmem:[#allocation5 + $0xff8] sm:$0xff]
    %v643 = vld [vmem:[#allocation7] sm:$0xff]
    %v645 = vlaneseq
    %v646 = vshrl.u32 %v645, 7
    %v647 = vsub.s32 0, %v646
    %v648 = vrot.slane %v643, %v647
    %v649 = vlaneseq
    %v650 = vshrl.u32 %v649, 7
    %v651 = vsub.s32 1, %v650
    %v652 = vrot.slane %v643, %v651
    %v653 = vlaneseq
    %v654 = vshrl.u32 %v653, 7
    %v655 = vsub.s32 2, %v654
    %v656 = vrot.slane %v643, %v655
    %v657 = vlaneseq
    %v658 = vshrl.u32 %v657, 7
    %v659 = vsub.s32 3, %v658
    %v660 = vrot.slane %v643, %v659
    %v661 = vlaneseq
    %v662 = vshrl.u32 %v661, 7
    %v663 = vsub.s32 4, %v662
    %v664 = vrot.slane %v643, %v663
    %v665 = vlaneseq
    %v666 = vshrl.u32 %v665, 7
    %v667 = vsub.s32 5, %v666
    %v668 = vrot.slane %v643, %v667
    %v669 = vlaneseq
    %v670 = vshrl.u32 %v669, 7
    %v671 = vsub.s32 6, %v670
    %v672 = vrot.slane %v643, %v671
    %v673 = vlaneseq
    %v674 = vshrl.u32 %v673, 7
    %v675 = vsub.s32 7, %v674
    %v676 = vrot.slane %v643, %v675
    %v1197 = vunpack.c.l.b16 %v131
    %v1198 = vunpack.c.h.b16 %v131
    %v1199 = vunpack.c.l.b16 %v132
    %v1200 = vunpack.c.h.b16 %v132
    %v1201 = vunpack.c.l.b16 %v133
    %v1202 = vunpack.c.h.b16 %v133
    %v1203 = vunpack.c.l.b16 %v134
    %v1204 = vunpack.c.h.b16 %v134
    %v1205 = vunpack.c.l.b16 %v135
    %v1206 = vunpack.c.h.b16 %v135
    %v1207 = vunpack.c.l.b16 %v136
    %v1208 = vunpack.c.h.b16 %v136
    %v1209 = vunpack.c.l.b16 %v137
    %v1210 = vunpack.c.h.b16 %v137
    %v1211 = vunpack.c.l.b16 %v138
    %v1212 = vunpack.c.h.b16 %v138
    %v1213 = vunpack.c.l.b16 %v139
    %v1214 = vunpack.c.h.b16 %v139
    %v1215 = vunpack.c.l.b16 %v140
    %v1216 = vunpack.c.h.b16 %v140
    %v1217 = vunpack.c.l.b16 %v141
    %v1218 = vunpack.c.h.b16 %v141
    %v1219 = vunpack.c.l.b16 %v142
    %v1220 = vunpack.c.h.b16 %v142
    %v1221 = vunpack.c.l.b16 %v143
    %v1222 = vunpack.c.h.b16 %v143
    %v1223 = vunpack.c.l.b16 %v144
    %v1224 = vunpack.c.h.b16 %v144
    %v1225 = vunpack.c.l.b16 %v145
    %v1226 = vunpack.c.h.b16 %v145
    %v1227 = vunpack.c.l.b16 %v146
    %v1228 = vunpack.c.h.b16 %v146
    %v1229 = vunpack.c.l.b16 %v147
    %v1230 = vunpack.c.h.b16 %v147
    %v1231 = vunpack.c.l.b16 %v148
    %v1232 = vunpack.c.h.b16 %v148
    %v1233 = vunpack.c.l.b16 %v149
    %v1234 = vunpack.c.h.b16 %v149
    %v1235 = vunpack.c.l.b16 %v150
    %v1236 = vunpack.c.h.b16 %v150
    %v1237 = vunpack.c.l.b16 %v151
    %v1238 = vunpack.c.h.b16 %v151
    %v1239 = vunpack.c.l.b16 %v152
    %v1240 = vunpack.c.h.b16 %v152
    %v1241 = vunpack.c.l.b16 %v153
    %v1242 = vunpack.c.h.b16 %v153
    %v1243 = vunpack.c.l.b16 %v154
    %v1244 = vunpack.c.h.b16 %v154
    %v1245 = vunpack.c.l.b16 %v155
    %v1246 = vunpack.c.h.b16 %v155
    %v1247 = vunpack.c.l.b16 %v156
    %v1248 = vunpack.c.h.b16 %v156
    %v1249 = vunpack.c.l.b16 %v157
    %v1250 = vunpack.c.h.b16 %v157
    %v1251 = vunpack.c.l.b16 %v158
    %v1252 = vunpack.c.h.b16 %v158
    %v1253 = vunpack.c.l.b16 %v159
    %v1254 = vunpack.c.h.b16 %v159
    %v1255 = vunpack.c.l.b16 %v160
    %v1256 = vunpack.c.h.b16 %v160
    %v1257 = vunpack.c.l.b16 %v161
    %v1258 = vunpack.c.h.b16 %v161
    %v1259 = vunpack.c.l.b16 %v162
    %v1260 = vunpack.c.h.b16 %v162
    %v1261 = vunpack.c.l.b16 %v163
    %v1262 = vunpack.c.h.b16 %v163
    %v1263 = vunpack.c.l.b16 %v164
    %v1264 = vunpack.c.h.b16 %v164
    %v1265 = vunpack.c.l.b16 %v165
    %v1266 = vunpack.c.h.b16 %v165
    %v1267 = vunpack.c.l.b16 %v166
    %v1268 = vunpack.c.h.b16 %v166
    %v1269 = vunpack.c.l.b16 %v167
    %v1270 = vunpack.c.h.b16 %v167
    %v1271 = vunpack.c.l.b16 %v168
    %v1272 = vunpack.c.h.b16 %v168
    %v1273 = vunpack.c.l.b16 %v169
    %v1274 = vunpack.c.h.b16 %v169
    %v1275 = vunpack.c.l.b16 %v170
    %v1276 = vunpack.c.h.b16 %v170
    %v1277 = vunpack.c.l.b16 %v171
    %v1278 = vunpack.c.h.b16 %v171
    %v1279 = vunpack.c.l.b16 %v172
    %v1280 = vunpack.c.h.b16 %v172
    %v1281 = vunpack.c.l.b16 %v173
    %v1282 = vunpack.c.h.b16 %v173
    %v1283 = vunpack.c.l.b16 %v174
    %v1284 = vunpack.c.h.b16 %v174
    %v1285 = vunpack.c.l.b16 %v175
    %v1286 = vunpack.c.h.b16 %v175
    %v1287 = vunpack.c.l.b16 %v176
    %v1288 = vunpack.c.h.b16 %v176
    %v1289 = vunpack.c.l.b16 %v177
    %v1290 = vunpack.c.h.b16 %v177
    %v1291 = vunpack.c.l.b16 %v178
    %v1292 = vunpack.c.h.b16 %v178
    %v1293 = vunpack.c.l.b16 %v179
    %v1294 = vunpack.c.h.b16 %v179
    %v1295 = vunpack.c.l.b16 %v180
    %v1296 = vunpack.c.h.b16 %v180
    %v1297 = vunpack.c.l.b16 %v181
    %v1298 = vunpack.c.h.b16 %v181
    %v1299 = vunpack.c.l.b16 %v182
    %v1300 = vunpack.c.h.b16 %v182
    %v1301 = vunpack.c.l.b16 %v183
    %v1302 = vunpack.c.h.b16 %v183
    %v1303 = vunpack.c.l.b16 %v184
    %v1304 = vunpack.c.h.b16 %v184
    %v1305 = vunpack.c.l.b16 %v185
    %v1306 = vunpack.c.h.b16 %v185
    %v1307 = vunpack.c.l.b16 %v186
    %v1308 = vunpack.c.h.b16 %v186
    %v1309 = vunpack.c.l.b16 %v187
    %v1310 = vunpack.c.h.b16 %v187
    %v1311 = vunpack.c.l.b16 %v188
    %v1312 = vunpack.c.h.b16 %v188
    %v1313 = vunpack.c.l.b16 %v189
    %v1314 = vunpack.c.h.b16 %v189
    %v1315 = vunpack.c.l.b16 %v190
    %v1316 = vunpack.c.h.b16 %v190
    %v1317 = vunpack.c.l.b16 %v191
    %v1318 = vunpack.c.h.b16 %v191
    %v1319 = vunpack.c.l.b16 %v192
    %v1320 = vunpack.c.h.b16 %v192
    %v1321 = vunpack.c.l.b16 %v193
    %v1322 = vunpack.c.h.b16 %v193
    %v1323 = vunpack.c.l.b16 %v194
    %v1324 = vunpack.c.h.b16 %v194
    %v1325 = vunpack.c.l.b16 %v195
    %v1326 = vunpack.c.h.b16 %v195
    %v1327 = vunpack.c.l.b16 %v196
    %v1328 = vunpack.c.h.b16 %v196
    %v1329 = vunpack.c.l.b16 %v197
    %v1330 = vunpack.c.h.b16 %v197
    %v1331 = vunpack.c.l.b16 %v198
    %v1332 = vunpack.c.h.b16 %v198
    %v1333 = vunpack.c.l.b16 %v199
    %v1334 = vunpack.c.h.b16 %v199
    %v1335 = vunpack.c.l.b16 %v200
    %v1336 = vunpack.c.h.b16 %v200
    %v1337 = vunpack.c.l.b16 %v201
    %v1338 = vunpack.c.h.b16 %v201
    %v1339 = vunpack.c.l.b16 %v202
    %v1340 = vunpack.c.h.b16 %v202
    %v1341 = vunpack.c.l.b16 %v203
    %v1342 = vunpack.c.h.b16 %v203
    %v1343 = vunpack.c.l.b16 %v204
    %v1344 = vunpack.c.h.b16 %v204
    %v1345 = vunpack.c.l.b16 %v205
    %v1346 = vunpack.c.h.b16 %v205
    %v1347 = vunpack.c.l.b16 %v206
    %v1348 = vunpack.c.h.b16 %v206
    %v1349 = vunpack.c.l.b16 %v207
    %v1350 = vunpack.c.h.b16 %v207
    %v1351 = vunpack.c.l.b16 %v208
    %v1352 = vunpack.c.h.b16 %v208
    %v1353 = vunpack.c.l.b16 %v209
    %v1354 = vunpack.c.h.b16 %v209
    %v1355 = vunpack.c.l.b16 %v210
    %v1356 = vunpack.c.h.b16 %v210
    %v1357 = vunpack.c.l.b16 %v211
    %v1358 = vunpack.c.h.b16 %v211
    %v1359 = vunpack.c.l.b16 %v212
    %v1360 = vunpack.c.h.b16 %v212
    %v1361 = vunpack.c.l.b16 %v213
    %v1362 = vunpack.c.h.b16 %v213
    %v1363 = vunpack.c.l.b16 %v214
    %v1364 = vunpack.c.h.b16 %v214
    %v1365 = vunpack.c.l.b16 %v215
    %v1366 = vunpack.c.h.b16 %v215
    %v1367 = vunpack.c.l.b16 %v216
    %v1368 = vunpack.c.h.b16 %v216
    %v1369 = vunpack.c.l.b16 %v217
    %v1370 = vunpack.c.h.b16 %v217
    %v1371 = vunpack.c.l.b16 %v218
    %v1372 = vunpack.c.h.b16 %v218
    %v1373 = vunpack.c.l.b16 %v219
    %v1374 = vunpack.c.h.b16 %v219
    %v1375 = vunpack.c.l.b16 %v220
    %v1376 = vunpack.c.h.b16 %v220
    %v1377 = vunpack.c.l.b16 %v221
    %v1378 = vunpack.c.h.b16 %v221
    %v1379 = vunpack.c.l.b16 %v222
    %v1380 = vunpack.c.h.b16 %v222
    %v1381 = vunpack.c.l.b16 %v223
    %v1382 = vunpack.c.h.b16 %v223
    %v1383 = vunpack.c.l.b16 %v224
    %v1384 = vunpack.c.h.b16 %v224
    %v1385 = vunpack.c.l.b16 %v225
    %v1386 = vunpack.c.h.b16 %v225
    %v1387 = vunpack.c.l.b16 %v226
    %v1388 = vunpack.c.h.b16 %v226
    %v1389 = vunpack.c.l.b16 %v227
    %v1390 = vunpack.c.h.b16 %v227
    %v1391 = vunpack.c.l.b16 %v228
    %v1392 = vunpack.c.h.b16 %v228
    %v1393 = vunpack.c.l.b16 %v229
    %v1394 = vunpack.c.h.b16 %v229
    %v1395 = vunpack.c.l.b16 %v230
    %v1396 = vunpack.c.h.b16 %v230
    %v1397 = vunpack.c.l.b16 %v231
    %v1398 = vunpack.c.h.b16 %v231
    %v1399 = vunpack.c.l.b16 %v232
    %v1400 = vunpack.c.h.b16 %v232
    %v1401 = vunpack.c.l.b16 %v233
    %v1402 = vunpack.c.h.b16 %v233
    %v1403 = vunpack.c.l.b16 %v234
    %v1404 = vunpack.c.h.b16 %v234
    %v1405 = vunpack.c.l.b16 %v235
    %v1406 = vunpack.c.h.b16 %v235
    %v1407 = vunpack.c.l.b16 %v236
    %v1408 = vunpack.c.h.b16 %v236
    %v1409 = vunpack.c.l.b16 %v237
    %v1410 = vunpack.c.h.b16 %v237
    %v1411 = vunpack.c.l.b16 %v238
    %v1412 = vunpack.c.h.b16 %v238
    %v1413 = vunpack.c.l.b16 %v239
    %v1414 = vunpack.c.h.b16 %v239
    %v1415 = vunpack.c.l.b16 %v240
    %v1416 = vunpack.c.h.b16 %v240
    %v1417 = vunpack.c.l.b16 %v241
    %v1418 = vunpack.c.h.b16 %v241
    %v1419 = vunpack.c.l.b16 %v242
    %v1420 = vunpack.c.h.b16 %v242
    %v1421 = vunpack.c.l.b16 %v243
    %v1422 = vunpack.c.h.b16 %v243
    %v1423 = vunpack.c.l.b16 %v244
    %v1424 = vunpack.c.h.b16 %v244
    %v1425 = vunpack.c.l.b16 %v245
    %v1426 = vunpack.c.h.b16 %v245
    %v1427 = vunpack.c.l.b16 %v246
    %v1428 = vunpack.c.h.b16 %v246
    %v1429 = vunpack.c.l.b16 %v247
    %v1430 = vunpack.c.h.b16 %v247
    %v1431 = vunpack.c.l.b16 %v248
    %v1432 = vunpack.c.h.b16 %v248
    %v1433 = vunpack.c.l.b16 %v249
    %v1434 = vunpack.c.h.b16 %v249
    %v1435 = vunpack.c.l.b16 %v250
    %v1436 = vunpack.c.h.b16 %v250
    %v1437 = vunpack.c.l.b16 %v251
    %v1438 = vunpack.c.h.b16 %v251
    %v1439 = vunpack.c.l.b16 %v252
    %v1440 = vunpack.c.h.b16 %v252
    %v1441 = vunpack.c.l.b16 %v253
    %v1442 = vunpack.c.h.b16 %v253
    %v1443 = vunpack.c.l.b16 %v254
    %v1444 = vunpack.c.h.b16 %v254
    %v1445 = vunpack.c.l.b16 %v255
    %v1446 = vunpack.c.h.b16 %v255
    %v1447 = vunpack.c.l.b16 %v256
    %v1448 = vunpack.c.h.b16 %v256
    %v1449 = vunpack.c.l.b16 %v257
    %v1450 = vunpack.c.h.b16 %v257
    %v1451 = vunpack.c.l.b16 %v258
    %v1452 = vunpack.c.h.b16 %v258
    %v1453 = vunpack.c.l.b16 %v259
    %v1454 = vunpack.c.h.b16 %v259
    %v1455 = vunpack.c.l.b16 %v260
    %v1456 = vunpack.c.h.b16 %v260
    %v1457 = vunpack.c.l.b16 %v261
    %v1458 = vunpack.c.h.b16 %v261
    %v1459 = vunpack.c.l.b16 %v262
    %v1460 = vunpack.c.h.b16 %v262
    %v1461 = vunpack.c.l.b16 %v263
    %v1462 = vunpack.c.h.b16 %v263
    %v1463 = vunpack.c.l.b16 %v264
    %v1464 = vunpack.c.h.b16 %v264
    %v1465 = vunpack.c.l.b16 %v265
    %v1466 = vunpack.c.h.b16 %v265
    %v1467 = vunpack.c.l.b16 %v266
    %v1468 = vunpack.c.h.b16 %v266
    %v1469 = vunpack.c.l.b16 %v267
    %v1470 = vunpack.c.h.b16 %v267
    %v1471 = vunpack.c.l.b16 %v268
    %v1472 = vunpack.c.h.b16 %v268
    %v1473 = vunpack.c.l.b16 %v269
    %v1474 = vunpack.c.h.b16 %v269
    %v1475 = vunpack.c.l.b16 %v270
    %v1476 = vunpack.c.h.b16 %v270
    %v1477 = vunpack.c.l.b16 %v271
    %v1478 = vunpack.c.h.b16 %v271
    %v1479 = vunpack.c.l.b16 %v272
    %v1480 = vunpack.c.h.b16 %v272
    %v1481 = vunpack.c.l.b16 %v273
    %v1482 = vunpack.c.h.b16 %v273
    %v1483 = vunpack.c.l.b16 %v274
    %v1484 = vunpack.c.h.b16 %v274
    %v1485 = vunpack.c.l.b16 %v275
    %v1486 = vunpack.c.h.b16 %v275
    %v1487 = vunpack.c.l.b16 %v276
    %v1488 = vunpack.c.h.b16 %v276
    %v1489 = vunpack.c.l.b16 %v277
    %v1490 = vunpack.c.h.b16 %v277
    %v1491 = vunpack.c.l.b16 %v278
    %v1492 = vunpack.c.h.b16 %v278
    %v1493 = vunpack.c.l.b16 %v279
    %v1494 = vunpack.c.h.b16 %v279
    %v1495 = vunpack.c.l.b16 %v280
    %v1496 = vunpack.c.h.b16 %v280
    %v1497 = vunpack.c.l.b16 %v281
    %v1498 = vunpack.c.h.b16 %v281
    %v1499 = vunpack.c.l.b16 %v282
    %v1500 = vunpack.c.h.b16 %v282
    %v1501 = vunpack.c.l.b16 %v283
    %v1502 = vunpack.c.h.b16 %v283
    %v1503 = vunpack.c.l.b16 %v284
    %v1504 = vunpack.c.h.b16 %v284
    %v1505 = vunpack.c.l.b16 %v285
    %v1506 = vunpack.c.h.b16 %v285
    %v1507 = vunpack.c.l.b16 %v286
    %v1508 = vunpack.c.h.b16 %v286
    %v1509 = vunpack.c.l.b16 %v287
    %v1510 = vunpack.c.h.b16 %v287
    %v1511 = vunpack.c.l.b16 %v288
    %v1512 = vunpack.c.h.b16 %v288
    %v1513 = vunpack.c.l.b16 %v289
    %v1514 = vunpack.c.h.b16 %v289
    %v1515 = vunpack.c.l.b16 %v290
    %v1516 = vunpack.c.h.b16 %v290
    %v1517 = vunpack.c.l.b16 %v291
    %v1518 = vunpack.c.h.b16 %v291
    %v1519 = vunpack.c.l.b16 %v292
    %v1520 = vunpack.c.h.b16 %v292
    %v1521 = vunpack.c.l.b16 %v293
    %v1522 = vunpack.c.h.b16 %v293
    %v1523 = vunpack.c.l.b16 %v294
    %v1524 = vunpack.c.h.b16 %v294
    %v1525 = vunpack.c.l.b16 %v295
    %v1526 = vunpack.c.h.b16 %v295
    %v1527 = vunpack.c.l.b16 %v296
    %v1528 = vunpack.c.h.b16 %v296
    %v1529 = vunpack.c.l.b16 %v297
    %v1530 = vunpack.c.h.b16 %v297
    %v1531 = vunpack.c.l.b16 %v298
    %v1532 = vunpack.c.h.b16 %v298
    %v1533 = vunpack.c.l.b16 %v299
    %v1534 = vunpack.c.h.b16 %v299
    %v1535 = vunpack.c.l.b16 %v300
    %v1536 = vunpack.c.h.b16 %v300
    %v1537 = vunpack.c.l.b16 %v301
    %v1538 = vunpack.c.h.b16 %v301
    %v1539 = vunpack.c.l.b16 %v302
    %v1540 = vunpack.c.h.b16 %v302
    %v1541 = vunpack.c.l.b16 %v303
    %v1542 = vunpack.c.h.b16 %v303
    %v1543 = vunpack.c.l.b16 %v304
    %v1544 = vunpack.c.h.b16 %v304
    %v1545 = vunpack.c.l.b16 %v305
    %v1546 = vunpack.c.h.b16 %v305
    %v1547 = vunpack.c.l.b16 %v306
    %v1548 = vunpack.c.h.b16 %v306
    %v1549 = vunpack.c.l.b16 %v307
    %v1550 = vunpack.c.h.b16 %v307
    %v1551 = vunpack.c.l.b16 %v308
    %v1552 = vunpack.c.h.b16 %v308
    %v1553 = vunpack.c.l.b16 %v309
    %v1554 = vunpack.c.h.b16 %v309
    %v1555 = vunpack.c.l.b16 %v310
    %v1556 = vunpack.c.h.b16 %v310
    %v1557 = vunpack.c.l.b16 %v311
    %v1558 = vunpack.c.h.b16 %v311
    %v1559 = vunpack.c.l.b16 %v312
    %v1560 = vunpack.c.h.b16 %v312
    %v1561 = vunpack.c.l.b16 %v313
    %v1562 = vunpack.c.h.b16 %v313
    %v1563 = vunpack.c.l.b16 %v314
    %v1564 = vunpack.c.h.b16 %v314
    %v1565 = vunpack.c.l.b16 %v315
    %v1566 = vunpack.c.h.b16 %v315
    %v1567 = vunpack.c.l.b16 %v316
    %v1568 = vunpack.c.h.b16 %v316
    %v1569 = vunpack.c.l.b16 %v317
    %v1570 = vunpack.c.h.b16 %v317
    %v1571 = vunpack.c.l.b16 %v318
    %v1572 = vunpack.c.h.b16 %v318
    %v1573 = vunpack.c.l.b16 %v319
    %v1574 = vunpack.c.h.b16 %v319
    %v1575 = vunpack.c.l.b16 %v320
    %v1576 = vunpack.c.h.b16 %v320
    %v1577 = vunpack.c.l.b16 %v321
    %v1578 = vunpack.c.h.b16 %v321
    %v1579 = vunpack.c.l.b16 %v322
    %v1580 = vunpack.c.h.b16 %v322
    %v1581 = vunpack.c.l.b16 %v323
    %v1582 = vunpack.c.h.b16 %v323
    %v1583 = vunpack.c.l.b16 %v324
    %v1584 = vunpack.c.h.b16 %v324
    %v1585 = vunpack.c.l.b16 %v325
    %v1586 = vunpack.c.h.b16 %v325
    %v1587 = vunpack.c.l.b16 %v326
    %v1588 = vunpack.c.h.b16 %v326
    %v1589 = vunpack.c.l.b16 %v327
    %v1590 = vunpack.c.h.b16 %v327
    %v1591 = vunpack.c.l.b16 %v328
    %v1592 = vunpack.c.h.b16 %v328
    %v1593 = vunpack.c.l.b16 %v329
    %v1594 = vunpack.c.h.b16 %v329
    %v1595 = vunpack.c.l.b16 %v330
    %v1596 = vunpack.c.h.b16 %v330
    %v1597 = vunpack.c.l.b16 %v331
    %v1598 = vunpack.c.h.b16 %v331
    %v1599 = vunpack.c.l.b16 %v332
    %v1600 = vunpack.c.h.b16 %v332
    %v1601 = vunpack.c.l.b16 %v333
    %v1602 = vunpack.c.h.b16 %v333
    %v1603 = vunpack.c.l.b16 %v334
    %v1604 = vunpack.c.h.b16 %v334
    %v1605 = vunpack.c.l.b16 %v335
    %v1606 = vunpack.c.h.b16 %v335
    %v1607 = vunpack.c.l.b16 %v336
    %v1608 = vunpack.c.h.b16 %v336
    %v1609 = vunpack.c.l.b16 %v337
    %v1610 = vunpack.c.h.b16 %v337
    %v1611 = vunpack.c.l.b16 %v338
    %v1612 = vunpack.c.h.b16 %v338
    %v1613 = vunpack.c.l.b16 %v339
    %v1614 = vunpack.c.h.b16 %v339
    %v1615 = vunpack.c.l.b16 %v340
    %v1616 = vunpack.c.h.b16 %v340
    %v1617 = vunpack.c.l.b16 %v341
    %v1618 = vunpack.c.h.b16 %v341
    %v1619 = vunpack.c.l.b16 %v342
    %v1620 = vunpack.c.h.b16 %v342
    %v1621 = vunpack.c.l.b16 %v343
    %v1622 = vunpack.c.h.b16 %v343
    %v1623 = vunpack.c.l.b16 %v344
    %v1624 = vunpack.c.h.b16 %v344
    %v1625 = vunpack.c.l.b16 %v345
    %v1626 = vunpack.c.h.b16 %v345
    %v1627 = vunpack.c.l.b16 %v346
    %v1628 = vunpack.c.h.b16 %v346
    %v1629 = vunpack.c.l.b16 %v347
    %v1630 = vunpack.c.h.b16 %v347
    %v1631 = vunpack.c.l.b16 %v348
    %v1632 = vunpack.c.h.b16 %v348
    %v1633 = vunpack.c.l.b16 %v349
    %v1634 = vunpack.c.h.b16 %v349
    %v1635 = vunpack.c.l.b16 %v350
    %v1636 = vunpack.c.h.b16 %v350
    %v1637 = vunpack.c.l.b16 %v351
    %v1638 = vunpack.c.h.b16 %v351
    %v1639 = vunpack.c.l.b16 %v352
    %v1640 = vunpack.c.h.b16 %v352
    %v1641 = vunpack.c.l.b16 %v353
    %v1642 = vunpack.c.h.b16 %v353
    %v1643 = vunpack.c.l.b16 %v354
    %v1644 = vunpack.c.h.b16 %v354
    %v1645 = vunpack.c.l.b16 %v355
    %v1646 = vunpack.c.h.b16 %v355
    %v1647 = vunpack.c.l.b16 %v356
    %v1648 = vunpack.c.h.b16 %v356
    %v1649 = vunpack.c.l.b16 %v357
    %v1650 = vunpack.c.h.b16 %v357
    %v1651 = vunpack.c.l.b16 %v358
    %v1652 = vunpack.c.h.b16 %v358
    %v1653 = vunpack.c.l.b16 %v359
    %v1654 = vunpack.c.h.b16 %v359
    %v1655 = vunpack.c.l.b16 %v360
    %v1656 = vunpack.c.h.b16 %v360
    %v1657 = vunpack.c.l.b16 %v361
    %v1658 = vunpack.c.h.b16 %v361
    %v1659 = vunpack.c.l.b16 %v362
    %v1660 = vunpack.c.h.b16 %v362
    %v1661 = vunpack.c.l.b16 %v363
    %v1662 = vunpack.c.h.b16 %v363
    %v1663 = vunpack.c.l.b16 %v364
    %v1664 = vunpack.c.h.b16 %v364
    %v1665 = vunpack.c.l.b16 %v365
    %v1666 = vunpack.c.h.b16 %v365
    %v1667 = vunpack.c.l.b16 %v366
    %v1668 = vunpack.c.h.b16 %v366
    %v1669 = vunpack.c.l.b16 %v367
    %v1670 = vunpack.c.h.b16 %v367
    %v1671 = vunpack.c.l.b16 %v368
    %v1672 = vunpack.c.h.b16 %v368
    %v1673 = vunpack.c.l.b16 %v369
    %v1674 = vunpack.c.h.b16 %v369
    %v1675 = vunpack.c.l.b16 %v370
    %v1676 = vunpack.c.h.b16 %v370
    %v1677 = vunpack.c.l.b16 %v371
    %v1678 = vunpack.c.h.b16 %v371
    %v1679 = vunpack.c.l.b16 %v372
    %v1680 = vunpack.c.h.b16 %v372
    %v1681 = vunpack.c.l.b16 %v373
    %v1682 = vunpack.c.h.b16 %v373
    %v1683 = vunpack.c.l.b16 %v374
    %v1684 = vunpack.c.h.b16 %v374
    %v1685 = vunpack.c.l.b16 %v375
    %v1686 = vunpack.c.h.b16 %v375
    %v1687 = vunpack.c.l.b16 %v376
    %v1688 = vunpack.c.h.b16 %v376
    %v1689 = vunpack.c.l.b16 %v377
    %v1690 = vunpack.c.h.b16 %v377
    %v1691 = vunpack.c.l.b16 %v378
    %v1692 = vunpack.c.h.b16 %v378
    %v1693 = vunpack.c.l.b16 %v379
    %v1694 = vunpack.c.h.b16 %v379
    %v1695 = vunpack.c.l.b16 %v380
    %v1696 = vunpack.c.h.b16 %v380
    %v1697 = vunpack.c.l.b16 %v381
    %v1698 = vunpack.c.h.b16 %v381
    %v1699 = vunpack.c.l.b16 %v382
    %v1700 = vunpack.c.h.b16 %v382
    %v1701 = vunpack.c.l.b16 %v383
    %v1702 = vunpack.c.h.b16 %v383
    %v1703 = vunpack.c.l.b16 %v384
    %v1704 = vunpack.c.h.b16 %v384
    %v1705 = vunpack.c.l.b16 %v385
    %v1706 = vunpack.c.h.b16 %v385
    %v1707 = vunpack.c.l.b16 %v386
    %v1708 = vunpack.c.h.b16 %v386
    %v1709 = vunpack.c.l.b16 %v387
    %v1710 = vunpack.c.h.b16 %v387
    %v1711 = vunpack.c.l.b16 %v388
    %v1712 = vunpack.c.h.b16 %v388
    %v1713 = vunpack.c.l.b16 %v389
    %v1714 = vunpack.c.h.b16 %v389
    %v1715 = vunpack.c.l.b16 %v390
    %v1716 = vunpack.c.h.b16 %v390
    %v1717 = vunpack.c.l.b16 %v391
    %v1718 = vunpack.c.h.b16 %v391
    %v1719 = vunpack.c.l.b16 %v392
    %v1720 = vunpack.c.h.b16 %v392
    %v1721 = vunpack.c.l.b16 %v393
    %v1722 = vunpack.c.h.b16 %v393
    %v1723 = vunpack.c.l.b16 %v394
    %v1724 = vunpack.c.h.b16 %v394
    %v1725 = vunpack.c.l.b16 %v395
    %v1726 = vunpack.c.h.b16 %v395
    %v1727 = vunpack.c.l.b16 %v396
    %v1728 = vunpack.c.h.b16 %v396
    %v1729 = vunpack.c.l.b16 %v397
    %v1730 = vunpack.c.h.b16 %v397
    %v1731 = vunpack.c.l.b16 %v398
    %v1732 = vunpack.c.h.b16 %v398
    %v1733 = vunpack.c.l.b16 %v399
    %v1734 = vunpack.c.h.b16 %v399
    %v1735 = vunpack.c.l.b16 %v400
    %v1736 = vunpack.c.h.b16 %v400
    %v1737 = vunpack.c.l.b16 %v401
    %v1738 = vunpack.c.h.b16 %v401
    %v1739 = vunpack.c.l.b16 %v402
    %v1740 = vunpack.c.h.b16 %v402
    %v1741 = vunpack.c.l.b16 %v403
    %v1742 = vunpack.c.h.b16 %v403
    %v1743 = vunpack.c.l.b16 %v404
    %v1744 = vunpack.c.h.b16 %v404
    %v1745 = vunpack.c.l.b16 %v405
    %v1746 = vunpack.c.h.b16 %v405
    %v1747 = vunpack.c.l.b16 %v406
    %v1748 = vunpack.c.h.b16 %v406
    %v1749 = vunpack.c.l.b16 %v407
    %v1750 = vunpack.c.h.b16 %v407
    %v1751 = vunpack.c.l.b16 %v408
    %v1752 = vunpack.c.h.b16 %v408
    %v1753 = vunpack.c.l.b16 %v409
    %v1754 = vunpack.c.h.b16 %v409
    %v1755 = vunpack.c.l.b16 %v410
    %v1756 = vunpack.c.h.b16 %v410
    %v1757 = vunpack.c.l.b16 %v411
    %v1758 = vunpack.c.h.b16 %v411
    %v1759 = vunpack.c.l.b16 %v412
    %v1760 = vunpack.c.h.b16 %v412
    %v1761 = vunpack.c.l.b16 %v413
    %v1762 = vunpack.c.h.b16 %v413
    %v1763 = vunpack.c.l.b16 %v414
    %v1764 = vunpack.c.h.b16 %v414
    %v1765 = vunpack.c.l.b16 %v415
    %v1766 = vunpack.c.h.b16 %v415
    %v1767 = vunpack.c.l.b16 %v416
    %v1768 = vunpack.c.h.b16 %v416
    %v1769 = vunpack.c.l.b16 %v417
    %v1770 = vunpack.c.h.b16 %v417
    %v1771 = vunpack.c.l.b16 %v418
    %v1772 = vunpack.c.h.b16 %v418
    %v1773 = vunpack.c.l.b16 %v419
    %v1774 = vunpack.c.h.b16 %v419
    %v1775 = vunpack.c.l.b16 %v420
    %v1776 = vunpack.c.h.b16 %v420
    %v1777 = vunpack.c.l.b16 %v421
    %v1778 = vunpack.c.h.b16 %v421
    %v1779 = vunpack.c.l.b16 %v422
    %v1780 = vunpack.c.h.b16 %v422
    %v1781 = vunpack.c.l.b16 %v423
    %v1782 = vunpack.c.h.b16 %v423
    %v1783 = vunpack.c.l.b16 %v424
    %v1784 = vunpack.c.h.b16 %v424
    %v1785 = vunpack.c.l.b16 %v425
    %v1786 = vunpack.c.h.b16 %v425
    %v1787 = vunpack.c.l.b16 %v426
    %v1788 = vunpack.c.h.b16 %v426
    %v1789 = vunpack.c.l.b16 %v427
    %v1790 = vunpack.c.h.b16 %v427
    %v1791 = vunpack.c.l.b16 %v428
    %v1792 = vunpack.c.h.b16 %v428
    %v1793 = vunpack.c.l.b16 %v429
    %v1794 = vunpack.c.h.b16 %v429
    %v1795 = vunpack.c.l.b16 %v430
    %v1796 = vunpack.c.h.b16 %v430
    %v1797 = vunpack.c.l.b16 %v431
    %v1798 = vunpack.c.h.b16 %v431
    %v1799 = vunpack.c.l.b16 %v432
    %v1800 = vunpack.c.h.b16 %v432
    %v1801 = vunpack.c.l.b16 %v433
    %v1802 = vunpack.c.h.b16 %v433
    %v1803 = vunpack.c.l.b16 %v434
    %v1804 = vunpack.c.h.b16 %v434
    %v1805 = vunpack.c.l.b16 %v435
    %v1806 = vunpack.c.h.b16 %v435
    %v1807 = vunpack.c.l.b16 %v436
    %v1808 = vunpack.c.h.b16 %v436
    %v1809 = vunpack.c.l.b16 %v437
    %v1810 = vunpack.c.h.b16 %v437
    %v1811 = vunpack.c.l.b16 %v438
    %v1812 = vunpack.c.h.b16 %v438
    %v1813 = vunpack.c.l.b16 %v439
    %v1814 = vunpack.c.h.b16 %v439
    %v1815 = vunpack.c.l.b16 %v440
    %v1816 = vunpack.c.h.b16 %v440
    %v1817 = vunpack.c.l.b16 %v441
    %v1818 = vunpack.c.h.b16 %v441
    %v1819 = vunpack.c.l.b16 %v442
    %v1820 = vunpack.c.h.b16 %v442
    %v1821 = vunpack.c.l.b16 %v443
    %v1822 = vunpack.c.h.b16 %v443
    %v1823 = vunpack.c.l.b16 %v444
    %v1824 = vunpack.c.h.b16 %v444
    %v1825 = vunpack.c.l.b16 %v445
    %v1826 = vunpack.c.h.b16 %v445
    %v1827 = vunpack.c.l.b16 %v446
    %v1828 = vunpack.c.h.b16 %v446
    %v1829 = vunpack.c.l.b16 %v447
    %v1830 = vunpack.c.h.b16 %v447
    %v1831 = vunpack.c.l.b16 %v448
    %v1832 = vunpack.c.h.b16 %v448
    %v1833 = vunpack.c.l.b16 %v449
    %v1834 = vunpack.c.h.b16 %v449
    %v1835 = vunpack.c.l.b16 %v450
    %v1836 = vunpack.c.h.b16 %v450
    %v1837 = vunpack.c.l.b16 %v451
    %v1838 = vunpack.c.h.b16 %v451
    %v1839 = vunpack.c.l.b16 %v452
    %v1840 = vunpack.c.h.b16 %v452
    %v1841 = vunpack.c.l.b16 %v453
    %v1842 = vunpack.c.h.b16 %v453
    %v1843 = vunpack.c.l.b16 %v454
    %v1844 = vunpack.c.h.b16 %v454
    %v1845 = vunpack.c.l.b16 %v455
    %v1846 = vunpack.c.h.b16 %v455
    %v1847 = vunpack.c.l.b16 %v456
    %v1848 = vunpack.c.h.b16 %v456
    %v1849 = vunpack.c.l.b16 %v457
    %v1850 = vunpack.c.h.b16 %v457
    %v1851 = vunpack.c.l.b16 %v458
    %v1852 = vunpack.c.h.b16 %v458
    %v1853 = vunpack.c.l.b16 %v459
    %v1854 = vunpack.c.h.b16 %v459
    %v1855 = vunpack.c.l.b16 %v460
    %v1856 = vunpack.c.h.b16 %v460
    %v1857 = vunpack.c.l.b16 %v461
    %v1858 = vunpack.c.h.b16 %v461
    %v1859 = vunpack.c.l.b16 %v462
    %v1860 = vunpack.c.h.b16 %v462
    %v1861 = vunpack.c.l.b16 %v463
    %v1862 = vunpack.c.h.b16 %v463
    %v1863 = vunpack.c.l.b16 %v464
    %v1864 = vunpack.c.h.b16 %v464
    %v1865 = vunpack.c.l.b16 %v465
    %v1866 = vunpack.c.h.b16 %v465
    %v1867 = vunpack.c.l.b16 %v466
    %v1868 = vunpack.c.h.b16 %v466
    %v1869 = vunpack.c.l.b16 %v467
    %v1870 = vunpack.c.h.b16 %v467
    %v1871 = vunpack.c.l.b16 %v468
    %v1872 = vunpack.c.h.b16 %v468
    %v1873 = vunpack.c.l.b16 %v469
    %v1874 = vunpack.c.h.b16 %v469
    %v1875 = vunpack.c.l.b16 %v470
    %v1876 = vunpack.c.h.b16 %v470
    %v1877 = vunpack.c.l.b16 %v471
    %v1878 = vunpack.c.h.b16 %v471
    %v1879 = vunpack.c.l.b16 %v472
    %v1880 = vunpack.c.h.b16 %v472
    %v1881 = vunpack.c.l.b16 %v473
    %v1882 = vunpack.c.h.b16 %v473
    %v1883 = vunpack.c.l.b16 %v474
    %v1884 = vunpack.c.h.b16 %v474
    %v1885 = vunpack.c.l.b16 %v475
    %v1886 = vunpack.c.h.b16 %v475
    %v1887 = vunpack.c.l.b16 %v476
    %v1888 = vunpack.c.h.b16 %v476
    %v1889 = vunpack.c.l.b16 %v477
    %v1890 = vunpack.c.h.b16 %v477
    %v1891 = vunpack.c.l.b16 %v478
    %v1892 = vunpack.c.h.b16 %v478
    %v1893 = vunpack.c.l.b16 %v479
    %v1894 = vunpack.c.h.b16 %v479
    %v1895 = vunpack.c.l.b16 %v480
    %v1896 = vunpack.c.h.b16 %v480
    %v1897 = vunpack.c.l.b16 %v481
    %v1898 = vunpack.c.h.b16 %v481
    %v1899 = vunpack.c.l.b16 %v482
    %v1900 = vunpack.c.h.b16 %v482
    %v1901 = vunpack.c.l.b16 %v483
    %v1902 = vunpack.c.h.b16 %v483
    %v1903 = vunpack.c.l.b16 %v484
    %v1904 = vunpack.c.h.b16 %v484
    %v1905 = vunpack.c.l.b16 %v485
    %v1906 = vunpack.c.h.b16 %v485
    %v1907 = vunpack.c.l.b16 %v486
    %v1908 = vunpack.c.h.b16 %v486
    %v1909 = vunpack.c.l.b16 %v487
    %v1910 = vunpack.c.h.b16 %v487
    %v1911 = vunpack.c.l.b16 %v488
    %v1912 = vunpack.c.h.b16 %v488
    %v1913 = vunpack.c.l.b16 %v489
    %v1914 = vunpack.c.h.b16 %v489
    %v1915 = vunpack.c.l.b16 %v490
    %v1916 = vunpack.c.h.b16 %v490
    %v1917 = vunpack.c.l.b16 %v491
    %v1918 = vunpack.c.h.b16 %v491
    %v1919 = vunpack.c.l.b16 %v492
    %v1920 = vunpack.c.h.b16 %v492
    %v1921 = vunpack.c.l.b16 %v493
    %v1922 = vunpack.c.h.b16 %v493
    %v1923 = vunpack.c.l.b16 %v494
    %v1924 = vunpack.c.h.b16 %v494
    %v1925 = vunpack.c.l.b16 %v495
    %v1926 = vunpack.c.h.b16 %v495
    %v1927 = vunpack.c.l.b16 %v496
    %v1928 = vunpack.c.h.b16 %v496
    %v1929 = vunpack.c.l.b16 %v497
    %v1930 = vunpack.c.h.b16 %v497
    %v1931 = vunpack.c.l.b16 %v498
    %v1932 = vunpack.c.h.b16 %v498
    %v1933 = vunpack.c.l.b16 %v499
    %v1934 = vunpack.c.h.b16 %v499
    %v1935 = vunpack.c.l.b16 %v500
    %v1936 = vunpack.c.h.b16 %v500
    %v1937 = vunpack.c.l.b16 %v501
    %v1938 = vunpack.c.h.b16 %v501
    %v1939 = vunpack.c.l.b16 %v502
    %v1940 = vunpack.c.h.b16 %v502
    %v1941 = vunpack.c.l.b16 %v503
    %v1942 = vunpack.c.h.b16 %v503
    %v1943 = vunpack.c.l.b16 %v504
    %v1944 = vunpack.c.h.b16 %v504
    %v1945 = vunpack.c.l.b16 %v505
    %v1946 = vunpack.c.h.b16 %v505
    %v1947 = vunpack.c.l.b16 %v506
    %v1948 = vunpack.c.h.b16 %v506
    %v1949 = vunpack.c.l.b16 %v507
    %v1950 = vunpack.c.h.b16 %v507
    %v1951 = vunpack.c.l.b16 %v508
    %v1952 = vunpack.c.h.b16 %v508
    %v1953 = vunpack.c.l.b16 %v509
    %v1954 = vunpack.c.h.b16 %v509
    %v1955 = vunpack.c.l.b16 %v510
    %v1956 = vunpack.c.h.b16 %v510
    %v1957 = vunpack.c.l.b16 %v511
    %v1958 = vunpack.c.h.b16 %v511
    %v1959 = vunpack.c.l.b16 %v512
    %v1960 = vunpack.c.h.b16 %v512
    %v1961 = vunpack.c.l.b16 %v513
    %v1962 = vunpack.c.h.b16 %v513
    %v1963 = vunpack.c.l.b16 %v514
    %v1964 = vunpack.c.h.b16 %v514
    %v1965 = vunpack.c.l.b16 %v515
    %v1966 = vunpack.c.h.b16 %v515
    %v1967 = vunpack.c.l.b16 %v516
    %v1968 = vunpack.c.h.b16 %v516
    %v1969 = vunpack.c.l.b16 %v517
    %v1970 = vunpack.c.h.b16 %v517
    %v1971 = vunpack.c.l.b16 %v518
    %v1972 = vunpack.c.h.b16 %v518
    %v1973 = vunpack.c.l.b16 %v519
    %v1974 = vunpack.c.h.b16 %v519
    %v1975 = vunpack.c.l.b16 %v520
    %v1976 = vunpack.c.h.b16 %v520
    %v1977 = vunpack.c.l.b16 %v521
    %v1978 = vunpack.c.h.b16 %v521
    %v1979 = vunpack.c.l.b16 %v522
    %v1980 = vunpack.c.h.b16 %v522
    %v1981 = vunpack.c.l.b16 %v523
    %v1982 = vunpack.c.h.b16 %v523
    %v1983 = vunpack.c.l.b16 %v524
    %v1984 = vunpack.c.h.b16 %v524
    %v1985 = vunpack.c.l.b16 %v525
    %v1986 = vunpack.c.h.b16 %v525
    %v1987 = vunpack.c.l.b16 %v526
    %v1988 = vunpack.c.h.b16 %v526
    %v1989 = vunpack.c.l.b16 %v527
    %v1990 = vunpack.c.h.b16 %v527
    %v1991 = vunpack.c.l.b16 %v528
    %v1992 = vunpack.c.h.b16 %v528
    %v1993 = vunpack.c.l.b16 %v529
    %v1994 = vunpack.c.h.b16 %v529
    %v1995 = vunpack.c.l.b16 %v530
    %v1996 = vunpack.c.h.b16 %v530
    %v1997 = vunpack.c.l.b16 %v531
    %v1998 = vunpack.c.h.b16 %v531
    %v1999 = vunpack.c.l.b16 %v532
    %v2000 = vunpack.c.h.b16 %v532
    %v2001 = vunpack.c.l.b16 %v533
    %v2002 = vunpack.c.h.b16 %v533
    %v2003 = vunpack.c.l.b16 %v534
    %v2004 = vunpack.c.h.b16 %v534
    %v2005 = vunpack.c.l.b16 %v535
    %v2006 = vunpack.c.h.b16 %v535
    %v2007 = vunpack.c.l.b16 %v536
    %v2008 = vunpack.c.h.b16 %v536
    %v2009 = vunpack.c.l.b16 %v537
    %v2010 = vunpack.c.h.b16 %v537
    %v2011 = vunpack.c.l.b16 %v538
    %v2012 = vunpack.c.h.b16 %v538
    %v2013 = vunpack.c.l.b16 %v539
    %v2014 = vunpack.c.h.b16 %v539
    %v2015 = vunpack.c.l.b16 %v540
    %v2016 = vunpack.c.h.b16 %v540
    %v2017 = vunpack.c.l.b16 %v541
    %v2018 = vunpack.c.h.b16 %v541
    %v2019 = vunpack.c.l.b16 %v542
    %v2020 = vunpack.c.h.b16 %v542
    %v2021 = vunpack.c.l.b16 %v543
    %v2022 = vunpack.c.h.b16 %v543
    %v2023 = vunpack.c.l.b16 %v544
    %v2024 = vunpack.c.h.b16 %v544
    %v2025 = vunpack.c.l.b16 %v545
    %v2026 = vunpack.c.h.b16 %v545
    %v2027 = vunpack.c.l.b16 %v546
    %v2028 = vunpack.c.h.b16 %v546
    %v2029 = vunpack.c.l.b16 %v547
    %v2030 = vunpack.c.h.b16 %v547
    %v2031 = vunpack.c.l.b16 %v548
    %v2032 = vunpack.c.h.b16 %v548
    %v2033 = vunpack.c.l.b16 %v549
    %v2034 = vunpack.c.h.b16 %v549
    %v2035 = vunpack.c.l.b16 %v550
    %v2036 = vunpack.c.h.b16 %v550
    %v2037 = vunpack.c.l.b16 %v551
    %v2038 = vunpack.c.h.b16 %v551
    %v2039 = vunpack.c.l.b16 %v552
    %v2040 = vunpack.c.h.b16 %v552
    %v2041 = vunpack.c.l.b16 %v553
    %v2042 = vunpack.c.h.b16 %v553
    %v2043 = vunpack.c.l.b16 %v554
    %v2044 = vunpack.c.h.b16 %v554
    %v2045 = vunpack.c.l.b16 %v555
    %v2046 = vunpack.c.h.b16 %v555
    %v2047 = vunpack.c.l.b16 %v556
    %v2048 = vunpack.c.h.b16 %v556
    %v2049 = vunpack.c.l.b16 %v557
    %v2050 = vunpack.c.h.b16 %v557
    %v2051 = vunpack.c.l.b16 %v558
    %v2052 = vunpack.c.h.b16 %v558
    %v2053 = vunpack.c.l.b16 %v559
    %v2054 = vunpack.c.h.b16 %v559
    %v2055 = vunpack.c.l.b16 %v560
    %v2056 = vunpack.c.h.b16 %v560
    %v2057 = vunpack.c.l.b16 %v561
    %v2058 = vunpack.c.h.b16 %v561
    %v2059 = vunpack.c.l.b16 %v562
    %v2060 = vunpack.c.h.b16 %v562
    %v2061 = vunpack.c.l.b16 %v563
    %v2062 = vunpack.c.h.b16 %v563
    %v2063 = vunpack.c.l.b16 %v564
    %v2064 = vunpack.c.h.b16 %v564
    %v2065 = vunpack.c.l.b16 %v565
    %v2066 = vunpack.c.h.b16 %v565
    %v2067 = vunpack.c.l.b16 %v566
    %v2068 = vunpack.c.h.b16 %v566
    %v2069 = vunpack.c.l.b16 %v567
    %v2070 = vunpack.c.h.b16 %v567
    %v2071 = vunpack.c.l.b16 %v568
    %v2072 = vunpack.c.h.b16 %v568
    %v2073 = vunpack.c.l.b16 %v569
    %v2074 = vunpack.c.h.b16 %v569
    %v2075 = vunpack.c.l.b16 %v570
    %v2076 = vunpack.c.h.b16 %v570
    %v2077 = vunpack.c.l.b16 %v571
    %v2078 = vunpack.c.h.b16 %v571
    %v2079 = vunpack.c.l.b16 %v572
    %v2080 = vunpack.c.h.b16 %v572
    %v2081 = vunpack.c.l.b16 %v573
    %v2082 = vunpack.c.h.b16 %v573
    %v2083 = vunpack.c.l.b16 %v574
    %v2084 = vunpack.c.h.b16 %v574
    %v2085 = vunpack.c.l.b16 %v575
    %v2086 = vunpack.c.h.b16 %v575
    %v2087 = vunpack.c.l.b16 %v576
    %v2088 = vunpack.c.h.b16 %v576
    %v2089 = vunpack.c.l.b16 %v577
    %v2090 = vunpack.c.h.b16 %v577
    %v2091 = vunpack.c.l.b16 %v578
    %v2092 = vunpack.c.h.b16 %v578
    %v2093 = vunpack.c.l.b16 %v579
    %v2094 = vunpack.c.h.b16 %v579
    %v2095 = vunpack.c.l.b16 %v580
    %v2096 = vunpack.c.h.b16 %v580
    %v2097 = vunpack.c.l.b16 %v581
    %v2098 = vunpack.c.h.b16 %v581
    %v2099 = vunpack.c.l.b16 %v582
    %v2100 = vunpack.c.h.b16 %v582
    %v2101 = vunpack.c.l.b16 %v583
    %v2102 = vunpack.c.h.b16 %v583
    %v2103 = vunpack.c.l.b16 %v584
    %v2104 = vunpack.c.h.b16 %v584
    %v2105 = vunpack.c.l.b16 %v585
    %v2106 = vunpack.c.h.b16 %v585
    %v2107 = vunpack.c.l.b16 %v586
    %v2108 = vunpack.c.h.b16 %v586
    %v2109 = vunpack.c.l.b16 %v587
    %v2110 = vunpack.c.h.b16 %v587
    %v2111 = vunpack.c.l.b16 %v588
    %v2112 = vunpack.c.h.b16 %v588
    %v2113 = vunpack.c.l.b16 %v589
    %v2114 = vunpack.c.h.b16 %v589
    %v2115 = vunpack.c.l.b16 %v590
    %v2116 = vunpack.c.h.b16 %v590
    %v2117 = vunpack.c.l.b16 %v591
    %v2118 = vunpack.c.h.b16 %v591
    %v2119 = vunpack.c.l.b16 %v592
    %v2120 = vunpack.c.h.b16 %v592
    %v2121 = vunpack.c.l.b16 %v593
    %v2122 = vunpack.c.h.b16 %v593
    %v2123 = vunpack.c.l.b16 %v594
    %v2124 = vunpack.c.h.b16 %v594
    %v2125 = vunpack.c.l.b16 %v595
    %v2126 = vunpack.c.h.b16 %v595
    %v2127 = vunpack.c.l.b16 %v596
    %v2128 = vunpack.c.h.b16 %v596
    %v2129 = vunpack.c.l.b16 %v597
    %v2130 = vunpack.c.h.b16 %v597
    %v2131 = vunpack.c.l.b16 %v598
    %v2132 = vunpack.c.h.b16 %v598
    %v2133 = vunpack.c.l.b16 %v599
    %v2134 = vunpack.c.h.b16 %v599
    %v2135 = vunpack.c.l.b16 %v600
    %v2136 = vunpack.c.h.b16 %v600
    %v2137 = vunpack.c.l.b16 %v601
    %v2138 = vunpack.c.h.b16 %v601
    %v2139 = vunpack.c.l.b16 %v602
    %v2140 = vunpack.c.h.b16 %v602
    %v2141 = vunpack.c.l.b16 %v603
    %v2142 = vunpack.c.h.b16 %v603
    %v2143 = vunpack.c.l.b16 %v604
    %v2144 = vunpack.c.h.b16 %v604
    %v2145 = vunpack.c.l.b16 %v605
    %v2146 = vunpack.c.h.b16 %v605
    %v2147 = vunpack.c.l.b16 %v606
    %v2148 = vunpack.c.h.b16 %v606
    %v2149 = vunpack.c.l.b16 %v607
    %v2150 = vunpack.c.h.b16 %v607
    %v2151 = vunpack.c.l.b16 %v608
    %v2152 = vunpack.c.h.b16 %v608
    %v2153 = vunpack.c.l.b16 %v609
    %v2154 = vunpack.c.h.b16 %v609
    %v2155 = vunpack.c.l.b16 %v610
    %v2156 = vunpack.c.h.b16 %v610
    %v2157 = vunpack.c.l.b16 %v611
    %v2158 = vunpack.c.h.b16 %v611
    %v2159 = vunpack.c.l.b16 %v612
    %v2160 = vunpack.c.h.b16 %v612
    %v2161 = vunpack.c.l.b16 %v613
    %v2162 = vunpack.c.h.b16 %v613
    %v2163 = vunpack.c.l.b16 %v614
    %v2164 = vunpack.c.h.b16 %v614
    %v2165 = vunpack.c.l.b16 %v615
    %v2166 = vunpack.c.h.b16 %v615
    %v2167 = vunpack.c.l.b16 %v616
    %v2168 = vunpack.c.h.b16 %v616
    %v2169 = vunpack.c.l.b16 %v617
    %v2170 = vunpack.c.h.b16 %v617
    %v2171 = vunpack.c.l.b16 %v618
    %v2172 = vunpack.c.h.b16 %v618
    %v2173 = vunpack.c.l.b16 %v619
    %v2174 = vunpack.c.h.b16 %v619
    %v2175 = vunpack.c.l.b16 %v620
    %v2176 = vunpack.c.h.b16 %v620
    %v2177 = vunpack.c.l.b16 %v621
    %v2178 = vunpack.c.h.b16 %v621
    %v2179 = vunpack.c.l.b16 %v622
    %v2180 = vunpack.c.h.b16 %v622
    %v2181 = vunpack.c.l.b16 %v623
    %v2182 = vunpack.c.h.b16 %v623
    %v2183 = vunpack.c.l.b16 %v624
    %v2184 = vunpack.c.h.b16 %v624
    %v2185 = vunpack.c.l.b16 %v625
    %v2186 = vunpack.c.h.b16 %v625
    %v2187 = vunpack.c.l.b16 %v626
    %v2188 = vunpack.c.h.b16 %v626
    %v2189 = vunpack.c.l.b16 %v627
    %v2190 = vunpack.c.h.b16 %v627
    %v2191 = vunpack.c.l.b16 %v628
    %v2192 = vunpack.c.h.b16 %v628
    %v2193 = vunpack.c.l.b16 %v629
    %v2194 = vunpack.c.h.b16 %v629
    %v2195 = vunpack.c.l.b16 %v630
    %v2196 = vunpack.c.h.b16 %v630
    %v2197 = vunpack.c.l.b16 %v631
    %v2198 = vunpack.c.h.b16 %v631
    %v2199 = vunpack.c.l.b16 %v632
    %v2200 = vunpack.c.h.b16 %v632
    %v2201 = vunpack.c.l.b16 %v633
    %v2202 = vunpack.c.h.b16 %v633
    %v2203 = vunpack.c.l.b16 %v634
    %v2204 = vunpack.c.h.b16 %v634
    %v2205 = vunpack.c.l.b16 %v635
    %v2206 = vunpack.c.h.b16 %v635
    %v2207 = vunpack.c.l.b16 %v636
    %v2208 = vunpack.c.h.b16 %v636
    %v2209 = vunpack.c.l.b16 %v637
    %v2210 = vunpack.c.h.b16 %v637
    %v2211 = vunpack.c.l.b16 %v638
    %v2212 = vunpack.c.h.b16 %v638
    %v2213 = vunpack.c.l.b16 %v639
    %v2214 = vunpack.c.h.b16 %v639
    %v2215 = vunpack.c.l.b16 %v640
    %v2216 = vunpack.c.h.b16 %v640
    %v2217 = vunpack.c.l.b16 %v641
    %v2218 = vunpack.c.h.b16 %v641
    %v2219 = vunpack.c.l.b16 %v642
    %v2220 = vunpack.c.h.b16 %v642
    %v2221 = vpack.c.b16 %v1205, %v1197
    %v2222 = vpack.c.b16 %v1206, %v1198
    %v2223 = vpack.c.b16 %v1207, %v1199
    %v2224 = vpack.c.b16 %v1208, %v1200
    %v2225 = vpack.c.b16 %v1209, %v1201
    %v2226 = vpack.c.b16 %v1210, %v1202
    %v2227 = vpack.c.b16 %v1211, %v1203
    %v2228 = vpack.c.b16 %v1212, %v1204
    %v2229 = vpack.c.b16 %v1221, %v1213
    %v2230 = vpack.c.b16 %v1222, %v1214
    %v2231 = vpack.c.b16 %v1223, %v1215
    %v2232 = vpack.c.b16 %v1224, %v1216
    %v2233 = vpack.c.b16 %v1225, %v1217
    %v2234 = vpack.c.b16 %v1226, %v1218
    %v2235 = vpack.c.b16 %v1227, %v1219
    %v2236 = vpack.c.b16 %v1228, %v1220
    %v2237 = vpack.c.b16 %v1237, %v1229
    %v2238 = vpack.c.b16 %v1238, %v1230
    %v2239 = vpack.c.b16 %v1239, %v1231
    %v2240 = vpack.c.b16 %v1240, %v1232
    %v2241 = vpack.c.b16 %v1241, %v1233
    %v2242 = vpack.c.b16 %v1242, %v1234
    %v2243 = vpack.c.b16 %v1243, %v1235
    %v2244 = vpack.c.b16 %v1244, %v1236
    %v2245 = vpack.c.b16 %v1253, %v1245
    %v2246 = vpack.c.b16 %v1254, %v1246
    %v2247 = vpack.c.b16 %v1255, %v1247
    %v2248 = vpack.c.b16 %v1256, %v1248
    %v2249 = vpack.c.b16 %v1257, %v1249
    %v2250 = vpack.c.b16 %v1258, %v1250
    %v2251 = vpack.c.b16 %v1259, %v1251
    %v2252 = vpack.c.b16 %v1260, %v1252
    %v2253 = vpack.c.b16 %v1269, %v1261
    %v2254 = vpack.c.b16 %v1270, %v1262
    %v2255 = vpack.c.b16 %v1271, %v1263
    %v2256 = vpack.c.b16 %v1272, %v1264
    %v2257 = vpack.c.b16 %v1273, %v1265
    %v2258 = vpack.c.b16 %v1274, %v1266
    %v2259 = vpack.c.b16 %v1275, %v1267
    %v2260 = vpack.c.b16 %v1276, %v1268
    %v2261 = vpack.c.b16 %v1285, %v1277
    %v2262 = vpack.c.b16 %v1286, %v1278
    %v2263 = vpack.c.b16 %v1287, %v1279
    %v2264 = vpack.c.b16 %v1288, %v1280
    %v2265 = vpack.c.b16 %v1289, %v1281
    %v2266 = vpack.c.b16 %v1290, %v1282
    %v2267 = vpack.c.b16 %v1291, %v1283
    %v2268 = vpack.c.b16 %v1292, %v1284
    %v2269 = vpack.c.b16 %v1301, %v1293
    %v2270 = vpack.c.b16 %v1302, %v1294
    %v2271 = vpack.c.b16 %v1303, %v1295
    %v2272 = vpack.c.b16 %v1304, %v1296
    %v2273 = vpack.c.b16 %v1305, %v1297
    %v2274 = vpack.c.b16 %v1306, %v1298
    %v2275 = vpack.c.b16 %v1307, %v1299
    %v2276 = vpack.c.b16 %v1308, %v1300
    %v2277 = vpack.c.b16 %v1317, %v1309
    %v2278 = vpack.c.b16 %v1318, %v1310
    %v2279 = vpack.c.b16 %v1319, %v1311
    %v2280 = vpack.c.b16 %v1320, %v1312
    %v2281 = vpack.c.b16 %v1321, %v1313
    %v2282 = vpack.c.b16 %v1322, %v1314
    %v2283 = vpack.c.b16 %v1323, %v1315
    %v2284 = vpack.c.b16 %v1324, %v1316
    %v2285 = vpack.c.b16 %v1333, %v1325
    %v2286 = vpack.c.b16 %v1334, %v1326
    %v2287 = vpack.c.b16 %v1335, %v1327
    %v2288 = vpack.c.b16 %v1336, %v1328
    %v2289 = vpack.c.b16 %v1337, %v1329
    %v2290 = vpack.c.b16 %v1338, %v1330
    %v2291 = vpack.c.b16 %v1339, %v1331
    %v2292 = vpack.c.b16 %v1340, %v1332
    %v2293 = vpack.c.b16 %v1349, %v1341
    %v2294 = vpack.c.b16 %v1350, %v1342
    %v2295 = vpack.c.b16 %v1351, %v1343
    %v2296 = vpack.c.b16 %v1352, %v1344
    %v2297 = vpack.c.b16 %v1353, %v1345
    %v2298 = vpack.c.b16 %v1354, %v1346
    %v2299 = vpack.c.b16 %v1355, %v1347
    %v2300 = vpack.c.b16 %v1356, %v1348
    %v2301 = vpack.c.b16 %v1365, %v1357
    %v2302 = vpack.c.b16 %v1366, %v1358
    %v2303 = vpack.c.b16 %v1367, %v1359
    %v2304 = vpack.c.b16 %v1368, %v1360
    %v2305 = vpack.c.b16 %v1369, %v1361
    %v2306 = vpack.c.b16 %v1370, %v1362
    %v2307 = vpack.c.b16 %v1371, %v1363
    %v2308 = vpack.c.b16 %v1372, %v1364
    %v2309 = vpack.c.b16 %v1381, %v1373
    %v2310 = vpack.c.b16 %v1382, %v1374
    %v2311 = vpack.c.b16 %v1383, %v1375
    %v2312 = vpack.c.b16 %v1384, %v1376
    %v2313 = vpack.c.b16 %v1385, %v1377
    %v2314 = vpack.c.b16 %v1386, %v1378
    %v2315 = vpack.c.b16 %v1387, %v1379
    %v2316 = vpack.c.b16 %v1388, %v1380
    %v2317 = vpack.c.b16 %v1397, %v1389
    %v2318 = vpack.c.b16 %v1398, %v1390
    %v2319 = vpack.c.b16 %v1399, %v1391
    %v2320 = vpack.c.b16 %v1400, %v1392
    %v2321 = vpack.c.b16 %v1401, %v1393
    %v2322 = vpack.c.b16 %v1402, %v1394
    %v2323 = vpack.c.b16 %v1403, %v1395
    %v2324 = vpack.c.b16 %v1404, %v1396
    %v2325 = vpack.c.b16 %v1413, %v1405
    %v2326 = vpack.c.b16 %v1414, %v1406
    %v2327 = vpack.c.b16 %v1415, %v1407
    %v2328 = vpack.c.b16 %v1416, %v1408
    %v2329 = vpack.c.b16 %v1417, %v1409
    %v2330 = vpack.c.b16 %v1418, %v1410
    %v2331 = vpack.c.b16 %v1419, %v1411
    %v2332 = vpack.c.b16 %v1420, %v1412
    %v2333 = vpack.c.b16 %v1429, %v1421
    %v2334 = vpack.c.b16 %v1430, %v1422
    %v2335 = vpack.c.b16 %v1431, %v1423
    %v2336 = vpack.c.b16 %v1432, %v1424
    %v2337 = vpack.c.b16 %v1433, %v1425
    %v2338 = vpack.c.b16 %v1434, %v1426
    %v2339 = vpack.c.b16 %v1435, %v1427
    %v2340 = vpack.c.b16 %v1436, %v1428
    %v2341 = vpack.c.b16 %v1445, %v1437
    %v2342 = vpack.c.b16 %v1446, %v1438
    %v2343 = vpack.c.b16 %v1447, %v1439
    %v2344 = vpack.c.b16 %v1448, %v1440
    %v2345 = vpack.c.b16 %v1449, %v1441
    %v2346 = vpack.c.b16 %v1450, %v1442
    %v2347 = vpack.c.b16 %v1451, %v1443
    %v2348 = vpack.c.b16 %v1452, %v1444
    %v2349 = vpack.c.b16 %v1461, %v1453
    %v2350 = vpack.c.b16 %v1462, %v1454
    %v2351 = vpack.c.b16 %v1463, %v1455
    %v2352 = vpack.c.b16 %v1464, %v1456
    %v2353 = vpack.c.b16 %v1465, %v1457
    %v2354 = vpack.c.b16 %v1466, %v1458
    %v2355 = vpack.c.b16 %v1467, %v1459
    %v2356 = vpack.c.b16 %v1468, %v1460
    %v2357 = vpack.c.b16 %v1477, %v1469
    %v2358 = vpack.c.b16 %v1478, %v1470
    %v2359 = vpack.c.b16 %v1479, %v1471
    %v2360 = vpack.c.b16 %v1480, %v1472
    %v2361 = vpack.c.b16 %v1481, %v1473
    %v2362 = vpack.c.b16 %v1482, %v1474
    %v2363 = vpack.c.b16 %v1483, %v1475
    %v2364 = vpack.c.b16 %v1484, %v1476
    %v2365 = vpack.c.b16 %v1493, %v1485
    %v2366 = vpack.c.b16 %v1494, %v1486
    %v2367 = vpack.c.b16 %v1495, %v1487
    %v2368 = vpack.c.b16 %v1496, %v1488
    %v2369 = vpack.c.b16 %v1497, %v1489
    %v2370 = vpack.c.b16 %v1498, %v1490
    %v2371 = vpack.c.b16 %v1499, %v1491
    %v2372 = vpack.c.b16 %v1500, %v1492
    %v2373 = vpack.c.b16 %v1509, %v1501
    %v2374 = vpack.c.b16 %v1510, %v1502
    %v2375 = vpack.c.b16 %v1511, %v1503
    %v2376 = vpack.c.b16 %v1512, %v1504
    %v2377 = vpack.c.b16 %v1513, %v1505
    %v2378 = vpack.c.b16 %v1514, %v1506
    %v2379 = vpack.c.b16 %v1515, %v1507
    %v2380 = vpack.c.b16 %v1516, %v1508
    %v2381 = vpack.c.b16 %v1525, %v1517
    %v2382 = vpack.c.b16 %v1526, %v1518
    %v2383 = vpack.c.b16 %v1527, %v1519
    %v2384 = vpack.c.b16 %v1528, %v1520
    %v2385 = vpack.c.b16 %v1529, %v1521
    %v2386 = vpack.c.b16 %v1530, %v1522
    %v2387 = vpack.c.b16 %v1531, %v1523
    %v2388 = vpack.c.b16 %v1532, %v1524
    %v2389 = vpack.c.b16 %v1541, %v1533
    %v2390 = vpack.c.b16 %v1542, %v1534
    %v2391 = vpack.c.b16 %v1543, %v1535
    %v2392 = vpack.c.b16 %v1544, %v1536
    %v2393 = vpack.c.b16 %v1545, %v1537
    %v2394 = vpack.c.b16 %v1546, %v1538
    %v2395 = vpack.c.b16 %v1547, %v1539
    %v2396 = vpack.c.b16 %v1548, %v1540
    %v2397 = vpack.c.b16 %v1557, %v1549
    %v2398 = vpack.c.b16 %v1558, %v1550
    %v2399 = vpack.c.b16 %v1559, %v1551
    %v2400 = vpack.c.b16 %v1560, %v1552
    %v2401 = vpack.c.b16 %v1561, %v1553
    %v2402 = vpack.c.b16 %v1562, %v1554
    %v2403 = vpack.c.b16 %v1563, %v1555
    %v2404 = vpack.c.b16 %v1564, %v1556
    %v2405 = vpack.c.b16 %v1573, %v1565
    %v2406 = vpack.c.b16 %v1574, %v1566
    %v2407 = vpack.c.b16 %v1575, %v1567
    %v2408 = vpack.c.b16 %v1576, %v1568
    %v2409 = vpack.c.b16 %v1577, %v1569
    %v2410 = vpack.c.b16 %v1578, %v1570
    %v2411 = vpack.c.b16 %v1579, %v1571
    %v2412 = vpack.c.b16 %v1580, %v1572
    %v2413 = vpack.c.b16 %v1589, %v1581
    %v2414 = vpack.c.b16 %v1590, %v1582
    %v2415 = vpack.c.b16 %v1591, %v1583
    %v2416 = vpack.c.b16 %v1592, %v1584
    %v2417 = vpack.c.b16 %v1593, %v1585
    %v2418 = vpack.c.b16 %v1594, %v1586
    %v2419 = vpack.c.b16 %v1595, %v1587
    %v2420 = vpack.c.b16 %v1596, %v1588
    %v2421 = vpack.c.b16 %v1605, %v1597
    %v2422 = vpack.c.b16 %v1606, %v1598
    %v2423 = vpack.c.b16 %v1607, %v1599
    %v2424 = vpack.c.b16 %v1608, %v1600
    %v2425 = vpack.c.b16 %v1609, %v1601
    %v2426 = vpack.c.b16 %v1610, %v1602
    %v2427 = vpack.c.b16 %v1611, %v1603
    %v2428 = vpack.c.b16 %v1612, %v1604
    %v2429 = vpack.c.b16 %v1621, %v1613
    %v2430 = vpack.c.b16 %v1622, %v1614
    %v2431 = vpack.c.b16 %v1623, %v1615
    %v2432 = vpack.c.b16 %v1624, %v1616
    %v2433 = vpack.c.b16 %v1625, %v1617
    %v2434 = vpack.c.b16 %v1626, %v1618
    %v2435 = vpack.c.b16 %v1627, %v1619
    %v2436 = vpack.c.b16 %v1628, %v1620
    %v2437 = vpack.c.b16 %v1637, %v1629
    %v2438 = vpack.c.b16 %v1638, %v1630
    %v2439 = vpack.c.b16 %v1639, %v1631
    %v2440 = vpack.c.b16 %v1640, %v1632
    %v2441 = vpack.c.b16 %v1641, %v1633
    %v2442 = vpack.c.b16 %v1642, %v1634
    %v2443 = vpack.c.b16 %v1643, %v1635
    %v2444 = vpack.c.b16 %v1644, %v1636
    %v2445 = vpack.c.b16 %v1653, %v1645
    %v2446 = vpack.c.b16 %v1654, %v1646
    %v2447 = vpack.c.b16 %v1655, %v1647
    %v2448 = vpack.c.b16 %v1656, %v1648
    %v2449 = vpack.c.b16 %v1657, %v1649
    %v2450 = vpack.c.b16 %v1658, %v1650
    %v2451 = vpack.c.b16 %v1659, %v1651
    %v2452 = vpack.c.b16 %v1660, %v1652
    %v2453 = vpack.c.b16 %v1669, %v1661
    %v2454 = vpack.c.b16 %v1670, %v1662
    %v2455 = vpack.c.b16 %v1671, %v1663
    %v2456 = vpack.c.b16 %v1672, %v1664
    %v2457 = vpack.c.b16 %v1673, %v1665
    %v2458 = vpack.c.b16 %v1674, %v1666
    %v2459 = vpack.c.b16 %v1675, %v1667
    %v2460 = vpack.c.b16 %v1676, %v1668
    %v2461 = vpack.c.b16 %v1685, %v1677
    %v2462 = vpack.c.b16 %v1686, %v1678
    %v2463 = vpack.c.b16 %v1687, %v1679
    %v2464 = vpack.c.b16 %v1688, %v1680
    %v2465 = vpack.c.b16 %v1689, %v1681
    %v2466 = vpack.c.b16 %v1690, %v1682
    %v2467 = vpack.c.b16 %v1691, %v1683
    %v2468 = vpack.c.b16 %v1692, %v1684
    %v2469 = vpack.c.b16 %v1701, %v1693
    %v2470 = vpack.c.b16 %v1702, %v1694
    %v2471 = vpack.c.b16 %v1703, %v1695
    %v2472 = vpack.c.b16 %v1704, %v1696
    %v2473 = vpack.c.b16 %v1705, %v1697
    %v2474 = vpack.c.b16 %v1706, %v1698
    %v2475 = vpack.c.b16 %v1707, %v1699
    %v2476 = vpack.c.b16 %v1708, %v1700
    %v2477 = vpack.c.b16 %v1717, %v1709
    %v2478 = vpack.c.b16 %v1718, %v1710
    %v2479 = vpack.c.b16 %v1719, %v1711
    %v2480 = vpack.c.b16 %v1720, %v1712
    %v2481 = vpack.c.b16 %v1721, %v1713
    %v2482 = vpack.c.b16 %v1722, %v1714
    %v2483 = vpack.c.b16 %v1723, %v1715
    %v2484 = vpack.c.b16 %v1724, %v1716
    %v2485 = vpack.c.b16 %v1733, %v1725
    %v2486 = vpack.c.b16 %v1734, %v1726
    %v2487 = vpack.c.b16 %v1735, %v1727
    %v2488 = vpack.c.b16 %v1736, %v1728
    %v2489 = vpack.c.b16 %v1737, %v1729
    %v2490 = vpack.c.b16 %v1738, %v1730
    %v2491 = vpack.c.b16 %v1739, %v1731
    %v2492 = vpack.c.b16 %v1740, %v1732
    %v2493 = vpack.c.b16 %v1749, %v1741
    %v2494 = vpack.c.b16 %v1750, %v1742
    %v2495 = vpack.c.b16 %v1751, %v1743
    %v2496 = vpack.c.b16 %v1752, %v1744
    %v2497 = vpack.c.b16 %v1753, %v1745
    %v2498 = vpack.c.b16 %v1754, %v1746
    %v2499 = vpack.c.b16 %v1755, %v1747
    %v2500 = vpack.c.b16 %v1756, %v1748
    %v2501 = vpack.c.b16 %v1765, %v1757
    %v2502 = vpack.c.b16 %v1766, %v1758
    %v2503 = vpack.c.b16 %v1767, %v1759
    %v2504 = vpack.c.b16 %v1768, %v1760
    %v2505 = vpack.c.b16 %v1769, %v1761
    %v2506 = vpack.c.b16 %v1770, %v1762
    %v2507 = vpack.c.b16 %v1771, %v1763
    %v2508 = vpack.c.b16 %v1772, %v1764
    %v2509 = vpack.c.b16 %v1781, %v1773
    %v2510 = vpack.c.b16 %v1782, %v1774
    %v2511 = vpack.c.b16 %v1783, %v1775
    %v2512 = vpack.c.b16 %v1784, %v1776
    %v2513 = vpack.c.b16 %v1785, %v1777
    %v2514 = vpack.c.b16 %v1786, %v1778
    %v2515 = vpack.c.b16 %v1787, %v1779
    %v2516 = vpack.c.b16 %v1788, %v1780
    %v2517 = vpack.c.b16 %v1797, %v1789
    %v2518 = vpack.c.b16 %v1798, %v1790
    %v2519 = vpack.c.b16 %v1799, %v1791
    %v2520 = vpack.c.b16 %v1800, %v1792
    %v2521 = vpack.c.b16 %v1801, %v1793
    %v2522 = vpack.c.b16 %v1802, %v1794
    %v2523 = vpack.c.b16 %v1803, %v1795
    %v2524 = vpack.c.b16 %v1804, %v1796
    %v2525 = vpack.c.b16 %v1813, %v1805
    %v2526 = vpack.c.b16 %v1814, %v1806
    %v2527 = vpack.c.b16 %v1815, %v1807
    %v2528 = vpack.c.b16 %v1816, %v1808
    %v2529 = vpack.c.b16 %v1817, %v1809
    %v2530 = vpack.c.b16 %v1818, %v1810
    %v2531 = vpack.c.b16 %v1819, %v1811
    %v2532 = vpack.c.b16 %v1820, %v1812
    %v2533 = vpack.c.b16 %v1829, %v1821
    %v2534 = vpack.c.b16 %v1830, %v1822
    %v2535 = vpack.c.b16 %v1831, %v1823
    %v2536 = vpack.c.b16 %v1832, %v1824
    %v2537 = vpack.c.b16 %v1833, %v1825
    %v2538 = vpack.c.b16 %v1834, %v1826
    %v2539 = vpack.c.b16 %v1835, %v1827
    %v2540 = vpack.c.b16 %v1836, %v1828
    %v2541 = vpack.c.b16 %v1845, %v1837
    %v2542 = vpack.c.b16 %v1846, %v1838
    %v2543 = vpack.c.b16 %v1847, %v1839
    %v2544 = vpack.c.b16 %v1848, %v1840
    %v2545 = vpack.c.b16 %v1849, %v1841
    %v2546 = vpack.c.b16 %v1850, %v1842
    %v2547 = vpack.c.b16 %v1851, %v1843
    %v2548 = vpack.c.b16 %v1852, %v1844
    %v2549 = vpack.c.b16 %v1861, %v1853
    %v2550 = vpack.c.b16 %v1862, %v1854
    %v2551 = vpack.c.b16 %v1863, %v1855
    %v2552 = vpack.c.b16 %v1864, %v1856
    %v2553 = vpack.c.b16 %v1865, %v1857
    %v2554 = vpack.c.b16 %v1866, %v1858
    %v2555 = vpack.c.b16 %v1867, %v1859
    %v2556 = vpack.c.b16 %v1868, %v1860
    %v2557 = vpack.c.b16 %v1877, %v1869
    %v2558 = vpack.c.b16 %v1878, %v1870
    %v2559 = vpack.c.b16 %v1879, %v1871
    %v2560 = vpack.c.b16 %v1880, %v1872
    %v2561 = vpack.c.b16 %v1881, %v1873
    %v2562 = vpack.c.b16 %v1882, %v1874
    %v2563 = vpack.c.b16 %v1883, %v1875
    %v2564 = vpack.c.b16 %v1884, %v1876
    %v2565 = vpack.c.b16 %v1893, %v1885
    %v2566 = vpack.c.b16 %v1894, %v1886
    %v2567 = vpack.c.b16 %v1895, %v1887
    %v2568 = vpack.c.b16 %v1896, %v1888
    %v2569 = vpack.c.b16 %v1897, %v1889
    %v2570 = vpack.c.b16 %v1898, %v1890
    %v2571 = vpack.c.b16 %v1899, %v1891
    %v2572 = vpack.c.b16 %v1900, %v1892
    %v2573 = vpack.c.b16 %v1909, %v1901
    %v2574 = vpack.c.b16 %v1910, %v1902
    %v2575 = vpack.c.b16 %v1911, %v1903
    %v2576 = vpack.c.b16 %v1912, %v1904
    %v2577 = vpack.c.b16 %v1913, %v1905
    %v2578 = vpack.c.b16 %v1914, %v1906
    %v2579 = vpack.c.b16 %v1915, %v1907
    %v2580 = vpack.c.b16 %v1916, %v1908
    %v2581 = vpack.c.b16 %v1925, %v1917
    %v2582 = vpack.c.b16 %v1926, %v1918
    %v2583 = vpack.c.b16 %v1927, %v1919
    %v2584 = vpack.c.b16 %v1928, %v1920
    %v2585 = vpack.c.b16 %v1929, %v1921
    %v2586 = vpack.c.b16 %v1930, %v1922
    %v2587 = vpack.c.b16 %v1931, %v1923
    %v2588 = vpack.c.b16 %v1932, %v1924
    %v2589 = vpack.c.b16 %v1941, %v1933
    %v2590 = vpack.c.b16 %v1942, %v1934
    %v2591 = vpack.c.b16 %v1943, %v1935
    %v2592 = vpack.c.b16 %v1944, %v1936
    %v2593 = vpack.c.b16 %v1945, %v1937
    %v2594 = vpack.c.b16 %v1946, %v1938
    %v2595 = vpack.c.b16 %v1947, %v1939
    %v2596 = vpack.c.b16 %v1948, %v1940
    %v2597 = vpack.c.b16 %v1957, %v1949
    %v2598 = vpack.c.b16 %v1958, %v1950
    %v2599 = vpack.c.b16 %v1959, %v1951
    %v2600 = vpack.c.b16 %v1960, %v1952
    %v2601 = vpack.c.b16 %v1961, %v1953
    %v2602 = vpack.c.b16 %v1962, %v1954
    %v2603 = vpack.c.b16 %v1963, %v1955
    %v2604 = vpack.c.b16 %v1964, %v1956
    %v2605 = vpack.c.b16 %v1973, %v1965
    %v2606 = vpack.c.b16 %v1974, %v1966
    %v2607 = vpack.c.b16 %v1975, %v1967
    %v2608 = vpack.c.b16 %v1976, %v1968
    %v2609 = vpack.c.b16 %v1977, %v1969
    %v2610 = vpack.c.b16 %v1978, %v1970
    %v2611 = vpack.c.b16 %v1979, %v1971
    %v2612 = vpack.c.b16 %v1980, %v1972
    %v2613 = vpack.c.b16 %v1989, %v1981
    %v2614 = vpack.c.b16 %v1990, %v1982
    %v2615 = vpack.c.b16 %v1991, %v1983
    %v2616 = vpack.c.b16 %v1992, %v1984
    %v2617 = vpack.c.b16 %v1993, %v1985
    %v2618 = vpack.c.b16 %v1994, %v1986
    %v2619 = vpack.c.b16 %v1995, %v1987
    %v2620 = vpack.c.b16 %v1996, %v1988
    %v2621 = vpack.c.b16 %v2005, %v1997
    %v2622 = vpack.c.b16 %v2006, %v1998
    %v2623 = vpack.c.b16 %v2007, %v1999
    %v2624 = vpack.c.b16 %v2008, %v2000
    %v2625 = vpack.c.b16 %v2009, %v2001
    %v2626 = vpack.c.b16 %v2010, %v2002
    %v2627 = vpack.c.b16 %v2011, %v2003
    %v2628 = vpack.c.b16 %v2012, %v2004
    %v2629 = vpack.c.b16 %v2021, %v2013
    %v2630 = vpack.c.b16 %v2022, %v2014
    %v2631 = vpack.c.b16 %v2023, %v2015
    %v2632 = vpack.c.b16 %v2024, %v2016
    %v2633 = vpack.c.b16 %v2025, %v2017
    %v2634 = vpack.c.b16 %v2026, %v2018
    %v2635 = vpack.c.b16 %v2027, %v2019
    %v2636 = vpack.c.b16 %v2028, %v2020
    %v2637 = vpack.c.b16 %v2037, %v2029
    %v2638 = vpack.c.b16 %v2038, %v2030
    %v2639 = vpack.c.b16 %v2039, %v2031
    %v2640 = vpack.c.b16 %v2040, %v2032
    %v2641 = vpack.c.b16 %v2041, %v2033
    %v2642 = vpack.c.b16 %v2042, %v2034
    %v2643 = vpack.c.b16 %v2043, %v2035
    %v2644 = vpack.c.b16 %v2044, %v2036
    %v2645 = vpack.c.b16 %v2053, %v2045
    %v2646 = vpack.c.b16 %v2054, %v2046
    %v2647 = vpack.c.b16 %v2055, %v2047
    %v2648 = vpack.c.b16 %v2056, %v2048
    %v2649 = vpack.c.b16 %v2057, %v2049
    %v2650 = vpack.c.b16 %v2058, %v2050
    %v2651 = vpack.c.b16 %v2059, %v2051
    %v2652 = vpack.c.b16 %v2060, %v2052
    %v2653 = vpack.c.b16 %v2069, %v2061
    %v2654 = vpack.c.b16 %v2070, %v2062
    %v2655 = vpack.c.b16 %v2071, %v2063
    %v2656 = vpack.c.b16 %v2072, %v2064
    %v2657 = vpack.c.b16 %v2073, %v2065
    %v2658 = vpack.c.b16 %v2074, %v2066
    %v2659 = vpack.c.b16 %v2075, %v2067
    %v2660 = vpack.c.b16 %v2076, %v2068
    %v2661 = vpack.c.b16 %v2085, %v2077
    %v2662 = vpack.c.b16 %v2086, %v2078
    %v2663 = vpack.c.b16 %v2087, %v2079
    %v2664 = vpack.c.b16 %v2088, %v2080
    %v2665 = vpack.c.b16 %v2089, %v2081
    %v2666 = vpack.c.b16 %v2090, %v2082
    %v2667 = vpack.c.b16 %v2091, %v2083
    %v2668 = vpack.c.b16 %v2092, %v2084
    %v2669 = vpack.c.b16 %v2101, %v2093
    %v2670 = vpack.c.b16 %v2102, %v2094
    %v2671 = vpack.c.b16 %v2103, %v2095
    %v2672 = vpack.c.b16 %v2104, %v2096
    %v2673 = vpack.c.b16 %v2105, %v2097
    %v2674 = vpack.c.b16 %v2106, %v2098
    %v2675 = vpack.c.b16 %v2107, %v2099
    %v2676 = vpack.c.b16 %v2108, %v2100
    %v2677 = vpack.c.b16 %v2117, %v2109
    %v2678 = vpack.c.b16 %v2118, %v2110
    %v2679 = vpack.c.b16 %v2119, %v2111
    %v2680 = vpack.c.b16 %v2120, %v2112
    %v2681 = vpack.c.b16 %v2121, %v2113
    %v2682 = vpack.c.b16 %v2122, %v2114
    %v2683 = vpack.c.b16 %v2123, %v2115
    %v2684 = vpack.c.b16 %v2124, %v2116
    %v2685 = vpack.c.b16 %v2133, %v2125
    %v2686 = vpack.c.b16 %v2134, %v2126
    %v2687 = vpack.c.b16 %v2135, %v2127
    %v2688 = vpack.c.b16 %v2136, %v2128
    %v2689 = vpack.c.b16 %v2137, %v2129
    %v2690 = vpack.c.b16 %v2138, %v2130
    %v2691 = vpack.c.b16 %v2139, %v2131
    %v2692 = vpack.c.b16 %v2140, %v2132
    %v2693 = vpack.c.b16 %v2149, %v2141
    %v2694 = vpack.c.b16 %v2150, %v2142
    %v2695 = vpack.c.b16 %v2151, %v2143
    %v2696 = vpack.c.b16 %v2152, %v2144
    %v2697 = vpack.c.b16 %v2153, %v2145
    %v2698 = vpack.c.b16 %v2154, %v2146
    %v2699 = vpack.c.b16 %v2155, %v2147
    %v2700 = vpack.c.b16 %v2156, %v2148
    %v2701 = vpack.c.b16 %v2165, %v2157
    %v2702 = vpack.c.b16 %v2166, %v2158
    %v2703 = vpack.c.b16 %v2167, %v2159
    %v2704 = vpack.c.b16 %v2168, %v2160
    %v2705 = vpack.c.b16 %v2169, %v2161
    %v2706 = vpack.c.b16 %v2170, %v2162
    %v2707 = vpack.c.b16 %v2171, %v2163
    %v2708 = vpack.c.b16 %v2172, %v2164
    %v2709 = vpack.c.b16 %v2181, %v2173
    %v2710 = vpack.c.b16 %v2182, %v2174
    %v2711 = vpack.c.b16 %v2183, %v2175
    %v2712 = vpack.c.b16 %v2184, %v2176
    %v2713 = vpack.c.b16 %v2185, %v2177
    %v2714 = vpack.c.b16 %v2186, %v2178
    %v2715 = vpack.c.b16 %v2187, %v2179
    %v2716 = vpack.c.b16 %v2188, %v2180
    %v2717 = vpack.c.b16 %v2197, %v2189
    %v2718 = vpack.c.b16 %v2198, %v2190
    %v2719 = vpack.c.b16 %v2199, %v2191
    %v2720 = vpack.c.b16 %v2200, %v2192
    %v2721 = vpack.c.b16 %v2201, %v2193
    %v2722 = vpack.c.b16 %v2202, %v2194
    %v2723 = vpack.c.b16 %v2203, %v2195
    %v2724 = vpack.c.b16 %v2204, %v2196
    %v2725 = vpack.c.b16 %v2213, %v2205
    %v2726 = vpack.c.b16 %v2214, %v2206
    %v2727 = vpack.c.b16 %v2215, %v2207
    %v2728 = vpack.c.b16 %v2216, %v2208
    %v2729 = vpack.c.b16 %v2217, %v2209
    %v2730 = vpack.c.b16 %v2218, %v2210
    %v2731 = vpack.c.b16 %v2219, %v2211
    %v2732 = vpack.c.b16 %v2220, %v2212
    %3245 = vmatprep.subr.bf16.mxu0 %v2278
    %3246 = vmatpush1.bf16.msra.mxu0 %v2277
    %3247 = vmatprep.subr.bf16.mxu0 %v2270
    %3248 = vmatpush1.bf16.msra.mxu0 %v2269
    %3249 = vmatprep.subr.bf16.mxu0 %v2262
    %3250 = vmatpush1.bf16.msra.mxu0 %v2261
    %3251 = vmatprep.subr.bf16.mxu0 %v2254
    %3252 = vmatpush1.bf16.msra.mxu0 %v2253
    %3253 = vmatprep.subr.bf16.mxu0 %v2246
    %3254 = vmatpush1.bf16.msra.mxu0 %v2245
    %3255 = vmatprep.subr.bf16.mxu0 %v2238
    %3256 = vmatpush1.bf16.msra.mxu0 %v2237
    %3257 = vmatprep.subr.bf16.mxu0 %v2230
    %3258 = vmatpush1.bf16.msra.mxu0 %v2229
    %3259 = vmatprep.subr.bf16.mxu0 %v2222
    %3260 = vmatpush1.bf16.msra.mxu0 %v2221
    %3261 = vmatprep.subr.bf16.mxu0 %v2342
    %3262 = vmatpush2.bf16.msra.mxu0 %v2341
    %3263 = vmatprep.subr.bf16.mxu0 %v2334
    %3264 = vmatpush2.bf16.msra.mxu0 %v2333
    %3265 = vmatprep.subr.bf16.mxu0 %v2326
    %3266 = vmatpush2.bf16.msra.mxu0 %v2325
    %3267 = vmatprep.subr.bf16.mxu0 %v2318
    %3268 = vmatpush2.bf16.msra.mxu0 %v2317
    %3269 = vmatprep.subr.bf16.mxu0 %v2310
    %3270 = vmatpush2.bf16.msra.mxu0 %v2309
    %3271 = vmatprep.subr.bf16.mxu0 %v2302
    %3272 = vmatpush2.bf16.msra.mxu0 %v2301
    %3273 = vmatprep.subr.bf16.mxu0 %v2294
    %3274 = vmatpush2.bf16.msra.mxu0 %v2293
    %3275 = vmatprep.subr.bf16.mxu0 %v2286
    %3276 = vmatpush2.bf16.msra.mxu0 %v2285
    %3277 = vmatprep.mubr.bf16.mxu0 %v124
    %3278 = vmatmul.mubr.bf16.gmra.mxu0 %v123
    %v3279 = vpop.f32.mrf.mxu0
    %v3280 = vadd.f32 %v648, %v3279
    %v3281 = vpop.f32.mrf.mxu0
    %v3282 = vadd.f32 %v652, %v3281
    %v3283 = vpop.f32.mrf.mxu0
    %v3284 = vpop.f32.mrf.mxu0
    %3285 = vdwg.mxu0
    %3286 = vmatprep.subr.bf16.mxu0 %v2406
    %3287 = vmatpush1.bf16.msra.mxu0 %v2405
    %3288 = vmatprep.subr.bf16.mxu0 %v2398
    %3289 = vmatpush1.bf16.msra.mxu0 %v2397
    %3290 = vmatprep.subr.bf16.mxu0 %v2390
    %3291 = vmatpush1.bf16.msra.mxu0 %v2389
    %3292 = vmatprep.subr.bf16.mxu0 %v2382
    %3293 = vmatpush1.bf16.msra.mxu0 %v2381
    %3294 = vmatprep.subr.bf16.mxu0 %v2374
    %3295 = vmatpush1.bf16.msra.mxu0 %v2373
    %3296 = vmatprep.subr.bf16.mxu0 %v2366
    %3297 = vmatpush1.bf16.msra.mxu0 %v2365
    %3298 = vmatprep.subr.bf16.mxu0 %v2358
    %3299 = vmatpush1.bf16.msra.mxu0 %v2357
    %3300 = vmatprep.subr.bf16.mxu0 %v2350
    %3301 = vmatpush1.bf16.msra.mxu0 %v2349
    %3302 = vmatprep.subr.bf16.mxu0 %v2470
    %3303 = vmatpush2.bf16.msra.mxu0 %v2469
    %3304 = vmatprep.subr.bf16.mxu0 %v2462
    %3305 = vmatpush2.bf16.msra.mxu0 %v2461
    %3306 = vmatprep.subr.bf16.mxu0 %v2454
    %3307 = vmatpush2.bf16.msra.mxu0 %v2453
    %3308 = vmatprep.subr.bf16.mxu0 %v2446
    %3309 = vmatpush2.bf16.msra.mxu0 %v2445
    %3310 = vmatprep.subr.bf16.mxu0 %v2438
    %3311 = vmatpush2.bf16.msra.mxu0 %v2437
    %3312 = vmatprep.subr.bf16.mxu0 %v2430
    %3313 = vmatpush2.bf16.msra.mxu0 %v2429
    %3314 = vmatprep.subr.bf16.mxu0 %v2422
    %3315 = vmatpush2.bf16.msra.mxu0 %v2421
    %3316 = vmatprep.subr.bf16.mxu0 %v2414
    %3317 = vmatpush2.bf16.msra.mxu0 %v2413
    %3318 = vmatprep.mubr.bf16.mxu0 %v126
    %3319 = vmatmul.mubr.bf16.gmra.mxu0 %v125
    %v3320 = vpop.f32.mrf.mxu0
    %v3321 = vadd.f32 %v3280, %v3320
    %v3322 = vpop.f32.mrf.mxu0
    %v3323 = vadd.f32 %v3282, %v3322
    %v3324 = vpop.f32.mrf.mxu0
    %v3325 = vpop.f32.mrf.mxu0
    %3326 = vdwg.mxu0
    %3327 = vmatprep.subr.bf16.mxu0 %v2534
    %3328 = vmatpush1.bf16.msra.mxu0 %v2533
    %3329 = vmatprep.subr.bf16.mxu0 %v2526
    %3330 = vmatpush1.bf16.msra.mxu0 %v2525
    %3331 = vmatprep.subr.bf16.mxu0 %v2518
    %3332 = vmatpush1.bf16.msra.mxu0 %v2517
    %3333 = vmatprep.subr.bf16.mxu0 %v2510
    %3334 = vmatpush1.bf16.msra.mxu0 %v2509
    %3335 = vmatprep.subr.bf16.mxu0 %v2502
    %3336 = vmatpush1.bf16.msra.mxu0 %v2501
    %3337 = vmatprep.subr.bf16.mxu0 %v2494
    %3338 = vmatpush1.bf16.msra.mxu0 %v2493
    %3339 = vmatprep.subr.bf16.mxu0 %v2486
    %3340 = vmatpush1.bf16.msra.mxu0 %v2485
    %3341 = vmatprep.subr.bf16.mxu0 %v2478
    %3342 = vmatpush1.bf16.msra.mxu0 %v2477
    %3343 = vmatprep.subr.bf16.mxu0 %v2598
    %3344 = vmatpush2.bf16.msra.mxu0 %v2597
    %3345 = vmatprep.subr.bf16.mxu0 %v2590
    %3346 = vmatpush2.bf16.msra.mxu0 %v2589
    %3347 = vmatprep.subr.bf16.mxu0 %v2582
    %3348 = vmatpush2.bf16.msra.mxu0 %v2581
    %3349 = vmatprep.subr.bf16.mxu0 %v2574
    %3350 = vmatpush2.bf16.msra.mxu0 %v2573
    %3351 = vmatprep.subr.bf16.mxu0 %v2566
    %3352 = vmatpush2.bf16.msra.mxu0 %v2565
    %3353 = vmatprep.subr.bf16.mxu0 %v2558
    %3354 = vmatpush2.bf16.msra.mxu0 %v2557
    %3355 = vmatprep.subr.bf16.mxu0 %v2550
    %3356 = vmatpush2.bf16.msra.mxu0 %v2549
    %3357 = vmatprep.subr.bf16.mxu0 %v2542
    %3358 = vmatpush2.bf16.msra.mxu0 %v2541
    %3359 = vmatprep.mubr.bf16.mxu0 %v128
    %3360 = vmatmul.mubr.bf16.gmra.mxu0 %v127
    %v3361 = vpop.f32.mrf.mxu0
    %v3362 = vadd.f32 %v3321, %v3361
    %v3363 = vpop.f32.mrf.mxu0
    %v3364 = vadd.f32 %v3323, %v3363
    %v3365 = vpop.f32.mrf.mxu0
    %v3366 = vpop.f32.mrf.mxu0
    %3367 = vdwg.mxu0
    %3368 = vmatprep.subr.bf16.mxu0 %v2662
    %3369 = vmatpush1.bf16.msra.mxu0 %v2661
    %3370 = vmatprep.subr.bf16.mxu0 %v2654
    %3371 = vmatpush1.bf16.msra.mxu0 %v2653
    %3372 = vmatprep.subr.bf16.mxu0 %v2646
    %3373 = vmatpush1.bf16.msra.mxu0 %v2645
    %3374 = vmatprep.subr.bf16.mxu0 %v2638
    %3375 = vmatpush1.bf16.msra.mxu0 %v2637
    %3376 = vmatprep.subr.bf16.mxu0 %v2630
    %3377 = vmatpush1.bf16.msra.mxu0 %v2629
    %3378 = vmatprep.subr.bf16.mxu0 %v2622
    %3379 = vmatpush1.bf16.msra.mxu0 %v2621
    %3380 = vmatprep.subr.bf16.mxu0 %v2614
    %3381 = vmatpush1.bf16.msra.mxu0 %v2613
    %3382 = vmatprep.subr.bf16.mxu0 %v2606
    %3383 = vmatpush1.bf16.msra.mxu0 %v2605
    %3384 = vmatprep.subr.bf16.mxu0 %v2726
    %3385 = vmatpush2.bf16.msra.mxu0 %v2725
    %3386 = vmatprep.subr.bf16.mxu0 %v2718
    %3387 = vmatpush2.bf16.msra.mxu0 %v2717
    %3388 = vmatprep.subr.bf16.mxu0 %v2710
    %3389 = vmatpush2.bf16.msra.mxu0 %v2709
    %3390 = vmatprep.subr.bf16.mxu0 %v2702
    %3391 = vmatpush2.bf16.msra.mxu0 %v2701
    %3392 = vmatprep.subr.bf16.mxu0 %v2694
    %3393 = vmatpush2.bf16.msra.mxu0 %v2693
    %3394 = vmatprep.subr.bf16.mxu0 %v2686
    %3395 = vmatpush2.bf16.msra.mxu0 %v2685
    %3396 = vmatprep.subr.bf16.mxu0 %v2678
    %3397 = vmatpush2.bf16.msra.mxu0 %v2677
    %3398 = vmatprep.subr.bf16.mxu0 %v2670
    %3399 = vmatpush2.bf16.msra.mxu0 %v2669
    %3400 = vmatprep.mubr.bf16.mxu0 %v130
    %3401 = vmatmul.mubr.bf16.gmra.mxu0 %v129
    %v3402 = vpop.f32.mrf.mxu0
    %v3403 = vadd.f32 %v3362, %v3402
    %v3404 = vpop.f32.mrf.mxu0
    %v3405 = vadd.f32 %v3364, %v3404
    %v3406 = vpop.f32.mrf.mxu0
    %v3407 = vpop.f32.mrf.mxu0
    %3408 = vdwg.mxu0
    %3409 = vmatprep.subr.bf16.mxu0 %v2280
    %3410 = vmatpush1.bf16.msra.mxu0 %v2279
    %3411 = vmatprep.subr.bf16.mxu0 %v2272
    %3412 = vmatpush1.bf16.msra.mxu0 %v2271
    %3413 = vmatprep.subr.bf16.mxu0 %v2264
    %3414 = vmatpush1.bf16.msra.mxu0 %v2263
    %3415 = vmatprep.subr.bf16.mxu0 %v2256
    %3416 = vmatpush1.bf16.msra.mxu0 %v2255
    %3417 = vmatprep.subr.bf16.mxu0 %v2248
    %3418 = vmatpush1.bf16.msra.mxu0 %v2247
    %3419 = vmatprep.subr.bf16.mxu0 %v2240
    %3420 = vmatpush1.bf16.msra.mxu0 %v2239
    %3421 = vmatprep.subr.bf16.mxu0 %v2232
    %3422 = vmatpush1.bf16.msra.mxu0 %v2231
    %3423 = vmatprep.subr.bf16.mxu0 %v2224
    %3424 = vmatpush1.bf16.msra.mxu0 %v2223
    %3425 = vmatprep.subr.bf16.mxu0 %v2344
    %3426 = vmatpush2.bf16.msra.mxu0 %v2343
    %3427 = vmatprep.subr.bf16.mxu0 %v2336
    %3428 = vmatpush2.bf16.msra.mxu0 %v2335
    %3429 = vmatprep.subr.bf16.mxu0 %v2328
    %3430 = vmatpush2.bf16.msra.mxu0 %v2327
    %3431 = vmatprep.subr.bf16.mxu0 %v2320
    %3432 = vmatpush2.bf16.msra.mxu0 %v2319
    %3433 = vmatprep.subr.bf16.mxu0 %v2312
    %3434 = vmatpush2.bf16.msra.mxu0 %v2311
    %3435 = vmatprep.subr.bf16.mxu0 %v2304
    %3436 = vmatpush2.bf16.msra.mxu0 %v2303
    %3437 = vmatprep.subr.bf16.mxu0 %v2296
    %3438 = vmatpush2.bf16.msra.mxu0 %v2295
    %3439 = vmatprep.subr.bf16.mxu0 %v2288
    %3440 = vmatpush2.bf16.msra.mxu0 %v2287
    %3441 = vmatprep.mubr.bf16.mxu0 %v124
    %3442 = vmatmul.mubr.bf16.gmra.mxu0 %v123
    %v3443 = vpop.f32.mrf.mxu0
    %v3444 = vadd.f32 %v656, %v3443
    %v3445 = vpop.f32.mrf.mxu0
    %v3446 = vadd.f32 %v660, %v3445
    %v3447 = vpop.f32.mrf.mxu0
    %v3448 = vpop.f32.mrf.mxu0
    %3449 = vdwg.mxu0
    %3450 = vmatprep.subr.bf16.mxu0 %v2408
    %3451 = vmatpush1.bf16.msra.mxu0 %v2407
    %3452 = vmatprep.subr.bf16.mxu0 %v2400
    %3453 = vmatpush1.bf16.msra.mxu0 %v2399
    %3454 = vmatprep.subr.bf16.mxu0 %v2392
    %3455 = vmatpush1.bf16.msra.mxu0 %v2391
    %3456 = vmatprep.subr.bf16.mxu0 %v2384
    %3457 = vmatpush1.bf16.msra.mxu0 %v2383
    %3458 = vmatprep.subr.bf16.mxu0 %v2376
    %3459 = vmatpush1.bf16.msra.mxu0 %v2375
    %3460 = vmatprep.subr.bf16.mxu0 %v2368
    %3461 = vmatpush1.bf16.msra.mxu0 %v2367
    %3462 = vmatprep.subr.bf16.mxu0 %v2360
    %3463 = vmatpush1.bf16.msra.mxu0 %v2359
    %3464 = vmatprep.subr.bf16.mxu0 %v2352
    %3465 = vmatpush1.bf16.msra.mxu0 %v2351
    %3466 = vmatprep.subr.bf16.mxu0 %v2472
    %3467 = vmatpush2.bf16.msra.mxu0 %v2471
    %3468 = vmatprep.subr.bf16.mxu0 %v2464
    %3469 = vmatpush2.bf16.msra.mxu0 %v2463
    %3470 = vmatprep.subr.bf16.mxu0 %v2456
    %3471 = vmatpush2.bf16.msra.mxu0 %v2455
    %3472 = vmatprep.subr.bf16.mxu0 %v2448
    %3473 = vmatpush2.bf16.msra.mxu0 %v2447
    %3474 = vmatprep.subr.bf16.mxu0 %v2440
    %3475 = vmatpush2.bf16.msra.mxu0 %v2439
    %3476 = vmatprep.subr.bf16.mxu0 %v2432
    %3477 = vmatpush2.bf16.msra.mxu0 %v2431
    %3478 = vmatprep.subr.bf16.mxu0 %v2424
    %3479 = vmatpush2.bf16.msra.mxu0 %v2423
    %3480 = vmatprep.subr.bf16.mxu0 %v2416
    %3481 = vmatpush2.bf16.msra.mxu0 %v2415
    %3482 = vmatprep.mubr.bf16.mxu0 %v126
    %3483 = vmatmul.mubr.bf16.gmra.mxu0 %v125
    %v3484 = vpop.f32.mrf.mxu0
    %v3485 = vadd.f32 %v3444, %v3484
    %v3486 = vpop.f32.mrf.mxu0
    %v3487 = vadd.f32 %v3446, %v3486
    %v3488 = vpop.f32.mrf.mxu0
    %v3489 = vpop.f32.mrf.mxu0
    %3490 = vdwg.mxu0
    %3491 = vmatprep.subr.bf16.mxu0 %v2536
    %3492 = vmatpush1.bf16.msra.mxu0 %v2535
    %3493 = vmatprep.subr.bf16.mxu0 %v2528
    %3494 = vmatpush1.bf16.msra.mxu0 %v2527
    %3495 = vmatprep.subr.bf16.mxu0 %v2520
    %3496 = vmatpush1.bf16.msra.mxu0 %v2519
    %3497 = vmatprep.subr.bf16.mxu0 %v2512
    %3498 = vmatpush1.bf16.msra.mxu0 %v2511
    %3499 = vmatprep.subr.bf16.mxu0 %v2504
    %3500 = vmatpush1.bf16.msra.mxu0 %v2503
    %3501 = vmatprep.subr.bf16.mxu0 %v2496
    %3502 = vmatpush1.bf16.msra.mxu0 %v2495
    %3503 = vmatprep.subr.bf16.mxu0 %v2488
    %3504 = vmatpush1.bf16.msra.mxu0 %v2487
    %3505 = vmatprep.subr.bf16.mxu0 %v2480
    %3506 = vmatpush1.bf16.msra.mxu0 %v2479
    %3507 = vmatprep.subr.bf16.mxu0 %v2600
    %3508 = vmatpush2.bf16.msra.mxu0 %v2599
    %3509 = vmatprep.subr.bf16.mxu0 %v2592
    %3510 = vmatpush2.bf16.msra.mxu0 %v2591
    %3511 = vmatprep.subr.bf16.mxu0 %v2584
    %3512 = vmatpush2.bf16.msra.mxu0 %v2583
    %3513 = vmatprep.subr.bf16.mxu0 %v2576
    %3514 = vmatpush2.bf16.msra.mxu0 %v2575
    %3515 = vmatprep.subr.bf16.mxu0 %v2568
    %3516 = vmatpush2.bf16.msra.mxu0 %v2567
    %3517 = vmatprep.subr.bf16.mxu0 %v2560
    %3518 = vmatpush2.bf16.msra.mxu0 %v2559
    %3519 = vmatprep.subr.bf16.mxu0 %v2552
    %3520 = vmatpush2.bf16.msra.mxu0 %v2551
    %3521 = vmatprep.subr.bf16.mxu0 %v2544
    %3522 = vmatpush2.bf16.msra.mxu0 %v2543
    %3523 = vmatprep.mubr.bf16.mxu0 %v128
    %3524 = vmatmul.mubr.bf16.gmra.mxu0 %v127
    %v3525 = vpop.f32.mrf.mxu0
    %v3526 = vadd.f32 %v3485, %v3525
    %v3527 = vpop.f32.mrf.mxu0
    %v3528 = vadd.f32 %v3487, %v3527
    %v3529 = vpop.f32.mrf.mxu0
    %v3530 = vpop.f32.mrf.mxu0
    %3531 = vdwg.mxu0
    %3532 = vmatprep.subr.bf16.mxu0 %v2664
    %3533 = vmatpush1.bf16.msra.mxu0 %v2663
    %3534 = vmatprep.subr.bf16.mxu0 %v2656
    %3535 = vmatpush1.bf16.msra.mxu0 %v2655
    %3536 = vmatprep.subr.bf16.mxu0 %v2648
    %3537 = vmatpush1.bf16.msra.mxu0 %v2647
    %3538 = vmatprep.subr.bf16.mxu0 %v2640
    %3539 = vmatpush1.bf16.msra.mxu0 %v2639
    %3540 = vmatprep.subr.bf16.mxu0 %v2632
    %3541 = vmatpush1.bf16.msra.mxu0 %v2631
    %3542 = vmatprep.subr.bf16.mxu0 %v2624
    %3543 = vmatpush1.bf16.msra.mxu0 %v2623
    %3544 = vmatprep.subr.bf16.mxu0 %v2616
    %3545 = vmatpush1.bf16.msra.mxu0 %v2615
    %3546 = vmatprep.subr.bf16.mxu0 %v2608
    %3547 = vmatpush1.bf16.msra.mxu0 %v2607
    %3548 = vmatprep.subr.bf16.mxu0 %v2728
    %3549 = vmatpush2.bf16.msra.mxu0 %v2727
    %3550 = vmatprep.subr.bf16.mxu0 %v2720
    %3551 = vmatpush2.bf16.msra.mxu0 %v2719
    %3552 = vmatprep.subr.bf16.mxu0 %v2712
    %3553 = vmatpush2.bf16.msra.mxu0 %v2711
    %3554 = vmatprep.subr.bf16.mxu0 %v2704
    %3555 = vmatpush2.bf16.msra.mxu0 %v2703
    %3556 = vmatprep.subr.bf16.mxu0 %v2696
    %3557 = vmatpush2.bf16.msra.mxu0 %v2695
    %3558 = vmatprep.subr.bf16.mxu0 %v2688
    %3559 = vmatpush2.bf16.msra.mxu0 %v2687
    %3560 = vmatprep.subr.bf16.mxu0 %v2680
    %3561 = vmatpush2.bf16.msra.mxu0 %v2679
    %3562 = vmatprep.subr.bf16.mxu0 %v2672
    %3563 = vmatpush2.bf16.msra.mxu0 %v2671
    %3564 = vmatprep.mubr.bf16.mxu0 %v130
    %3565 = vmatmul.mubr.bf16.gmra.mxu0 %v129
    %v3566 = vpop.f32.mrf.mxu0
    %v3567 = vadd.f32 %v3526, %v3566
    %v3568 = vpop.f32.mrf.mxu0
    %v3569 = vadd.f32 %v3528, %v3568
    %v3570 = vpop.f32.mrf.mxu0
    %v3571 = vpop.f32.mrf.mxu0
    %3572 = vdwg.mxu0
    %3573 = vmatprep.subr.bf16.mxu0 %v2282
    %3574 = vmatpush1.bf16.msra.mxu0 %v2281
    %3575 = vmatprep.subr.bf16.mxu0 %v2274
    %3576 = vmatpush1.bf16.msra.mxu0 %v2273
    %3577 = vmatprep.subr.bf16.mxu0 %v2266
    %3578 = vmatpush1.bf16.msra.mxu0 %v2265
    %3579 = vmatprep.subr.bf16.mxu0 %v2258
    %3580 = vmatpush1.bf16.msra.mxu0 %v2257
    %3581 = vmatprep.subr.bf16.mxu0 %v2250
    %3582 = vmatpush1.bf16.msra.mxu0 %v2249
    %3583 = vmatprep.subr.bf16.mxu0 %v2242
    %3584 = vmatpush1.bf16.msra.mxu0 %v2241
    %3585 = vmatprep.subr.bf16.mxu0 %v2234
    %3586 = vmatpush1.bf16.msra.mxu0 %v2233
    %3587 = vmatprep.subr.bf16.mxu0 %v2226
    %3588 = vmatpush1.bf16.msra.mxu0 %v2225
    %3589 = vmatprep.subr.bf16.mxu0 %v2346
    %3590 = vmatpush2.bf16.msra.mxu0 %v2345
    %3591 = vmatprep.subr.bf16.mxu0 %v2338
    %3592 = vmatpush2.bf16.msra.mxu0 %v2337
    %3593 = vmatprep.subr.bf16.mxu0 %v2330
    %3594 = vmatpush2.bf16.msra.mxu0 %v2329
    %3595 = vmatprep.subr.bf16.mxu0 %v2322
    %3596 = vmatpush2.bf16.msra.mxu0 %v2321
    %3597 = vmatprep.subr.bf16.mxu0 %v2314
    %3598 = vmatpush2.bf16.msra.mxu0 %v2313
    %3599 = vmatprep.subr.bf16.mxu0 %v2306
    %3600 = vmatpush2.bf16.msra.mxu0 %v2305
    %3601 = vmatprep.subr.bf16.mxu0 %v2298
    %3602 = vmatpush2.bf16.msra.mxu0 %v2297
    %3603 = vmatprep.subr.bf16.mxu0 %v2290
    %3604 = vmatpush2.bf16.msra.mxu0 %v2289
    %3605 = vmatprep.mubr.bf16.mxu0 %v124
    %3606 = vmatmul.mubr.bf16.gmra.mxu0 %v123
    %v3607 = vpop.f32.mrf.mxu0
    %v3608 = vadd.f32 %v664, %v3607
    %v3609 = vpop.f32.mrf.mxu0
    %v3610 = vadd.f32 %v668, %v3609
    %v3611 = vpop.f32.mrf.mxu0
    %v3612 = vpop.f32.mrf.mxu0
    %3613 = vdwg.mxu0
    %3614 = vmatprep.subr.bf16.mxu0 %v2410
    %3615 = vmatpush1.bf16.msra.mxu0 %v2409
    %3616 = vmatprep.subr.bf16.mxu0 %v2402
    %3617 = vmatpush1.bf16.msra.mxu0 %v2401
    %3618 = vmatprep.subr.bf16.mxu0 %v2394
    %3619 = vmatpush1.bf16.msra.mxu0 %v2393
    %3620 = vmatprep.subr.bf16.mxu0 %v2386
    %3621 = vmatpush1.bf16.msra.mxu0 %v2385
    %3622 = vmatprep.subr.bf16.mxu0 %v2378
    %3623 = vmatpush1.bf16.msra.mxu0 %v2377
    %3624 = vmatprep.subr.bf16.mxu0 %v2370
    %3625 = vmatpush1.bf16.msra.mxu0 %v2369
    %3626 = vmatprep.subr.bf16.mxu0 %v2362
    %3627 = vmatpush1.bf16.msra.mxu0 %v2361
    %3628 = vmatprep.subr.bf16.mxu0 %v2354
    %3629 = vmatpush1.bf16.msra.mxu0 %v2353
    %3630 = vmatprep.subr.bf16.mxu0 %v2474
    %3631 = vmatpush2.bf16.msra.mxu0 %v2473
    %3632 = vmatprep.subr.bf16.mxu0 %v2466
    %3633 = vmatpush2.bf16.msra.mxu0 %v2465
    %3634 = vmatprep.subr.bf16.mxu0 %v2458
    %3635 = vmatpush2.bf16.msra.mxu0 %v2457
    %3636 = vmatprep.subr.bf16.mxu0 %v2450
    %3637 = vmatpush2.bf16.msra.mxu0 %v2449
    %3638 = vmatprep.subr.bf16.mxu0 %v2442
    %3639 = vmatpush2.bf16.msra.mxu0 %v2441
    %3640 = vmatprep.subr.bf16.mxu0 %v2434
    %3641 = vmatpush2.bf16.msra.mxu0 %v2433
    %3642 = vmatprep.subr.bf16.mxu0 %v2426
    %3643 = vmatpush2.bf16.msra.mxu0 %v2425
    %3644 = vmatprep.subr.bf16.mxu0 %v2418
    %3645 = vmatpush2.bf16.msra.mxu0 %v2417
    %3646 = vmatprep.mubr.bf16.mxu0 %v126
    %3647 = vmatmul.mubr.bf16.gmra.mxu0 %v125
    %v3648 = vpop.f32.mrf.mxu0
    %v3649 = vadd.f32 %v3608, %v3648
    %v3650 = vpop.f32.mrf.mxu0
    %v3651 = vadd.f32 %v3610, %v3650
    %v3652 = vpop.f32.mrf.mxu0
    %v3653 = vpop.f32.mrf.mxu0
    %3654 = vdwg.mxu0
    %3655 = vmatprep.subr.bf16.mxu0 %v2538
    %3656 = vmatpush1.bf16.msra.mxu0 %v2537
    %3657 = vmatprep.subr.bf16.mxu0 %v2530
    %3658 = vmatpush1.bf16.msra.mxu0 %v2529
    %3659 = vmatprep.subr.bf16.mxu0 %v2522
    %3660 = vmatpush1.bf16.msra.mxu0 %v2521
    %3661 = vmatprep.subr.bf16.mxu0 %v2514
    %3662 = vmatpush1.bf16.msra.mxu0 %v2513
    %3663 = vmatprep.subr.bf16.mxu0 %v2506
    %3664 = vmatpush1.bf16.msra.mxu0 %v2505
    %3665 = vmatprep.subr.bf16.mxu0 %v2498
    %3666 = vmatpush1.bf16.msra.mxu0 %v2497
    %3667 = vmatprep.subr.bf16.mxu0 %v2490
    %3668 = vmatpush1.bf16.msra.mxu0 %v2489
    %3669 = vmatprep.subr.bf16.mxu0 %v2482
    %3670 = vmatpush1.bf16.msra.mxu0 %v2481
    %3671 = vmatprep.subr.bf16.mxu0 %v2602
    %3672 = vmatpush2.bf16.msra.mxu0 %v2601
    %3673 = vmatprep.subr.bf16.mxu0 %v2594
    %3674 = vmatpush2.bf16.msra.mxu0 %v2593
    %3675 = vmatprep.subr.bf16.mxu0 %v2586
    %3676 = vmatpush2.bf16.msra.mxu0 %v2585
    %3677 = vmatprep.subr.bf16.mxu0 %v2578
    %3678 = vmatpush2.bf16.msra.mxu0 %v2577
    %3679 = vmatprep.subr.bf16.mxu0 %v2570
    %3680 = vmatpush2.bf16.msra.mxu0 %v2569
    %3681 = vmatprep.subr.bf16.mxu0 %v2562
    %3682 = vmatpush2.bf16.msra.mxu0 %v2561
    %3683 = vmatprep.subr.bf16.mxu0 %v2554
    %3684 = vmatpush2.bf16.msra.mxu0 %v2553
    %3685 = vmatprep.subr.bf16.mxu0 %v2546
    %3686 = vmatpush2.bf16.msra.mxu0 %v2545
    %3687 = vmatprep.mubr.bf16.mxu0 %v128
    %3688 = vmatmul.mubr.bf16.gmra.mxu0 %v127
    %v3689 = vpop.f32.mrf.mxu0
    %v3690 = vadd.f32 %v3649, %v3689
    %v3691 = vpop.f32.mrf.mxu0
    %v3692 = vadd.f32 %v3651, %v3691
    %v3693 = vpop.f32.mrf.mxu0
    %v3694 = vpop.f32.mrf.mxu0
    %3695 = vdwg.mxu0
    %3696 = vmatprep.subr.bf16.mxu0 %v2666
    %3697 = vmatpush1.bf16.msra.mxu0 %v2665
    %3698 = vmatprep.subr.bf16.mxu0 %v2658
    %3699 = vmatpush1.bf16.msra.mxu0 %v2657
    %3700 = vmatprep.subr.bf16.mxu0 %v2650
    %3701 = vmatpush1.bf16.msra.mxu0 %v2649
    %3702 = vmatprep.subr.bf16.mxu0 %v2642
    %3703 = vmatpush1.bf16.msra.mxu0 %v2641
    %3704 = vmatprep.subr.bf16.mxu0 %v2634
    %3705 = vmatpush1.bf16.msra.mxu0 %v2633
    %3706 = vmatprep.subr.bf16.mxu0 %v2626
    %3707 = vmatpush1.bf16.msra.mxu0 %v2625
    %3708 = vmatprep.subr.bf16.mxu0 %v2618
    %3709 = vmatpush1.bf16.msra.mxu0 %v2617
    %3710 = vmatprep.subr.bf16.mxu0 %v2610
    %3711 = vmatpush1.bf16.msra.mxu0 %v2609
    %3712 = vmatprep.subr.bf16.mxu0 %v2730
    %3713 = vmatpush2.bf16.msra.mxu0 %v2729
    %3714 = vmatprep.subr.bf16.mxu0 %v2722
    %3715 = vmatpush2.bf16.msra.mxu0 %v2721
    %3716 = vmatprep.subr.bf16.mxu0 %v2714
    %3717 = vmatpush2.bf16.msra.mxu0 %v2713
    %3718 = vmatprep.subr.bf16.mxu0 %v2706
    %3719 = vmatpush2.bf16.msra.mxu0 %v2705
    %3720 = vmatprep.subr.bf16.mxu0 %v2698
    %3721 = vmatpush2.bf16.msra.mxu0 %v2697
    %3722 = vmatprep.subr.bf16.mxu0 %v2690
    %3723 = vmatpush2.bf16.msra.mxu0 %v2689
    %3724 = vmatprep.subr.bf16.mxu0 %v2682
    %3725 = vmatpush2.bf16.msra.mxu0 %v2681
    %3726 = vmatprep.subr.bf16.mxu0 %v2674
    %3727 = vmatpush2.bf16.msra.mxu0 %v2673
    %3728 = vmatprep.mubr.bf16.mxu0 %v130
    %3729 = vmatmul.mubr.bf16.gmra.mxu0 %v129
    %v3730 = vpop.f32.mrf.mxu0
    %v3731 = vadd.f32 %v3690, %v3730
    %v3732 = vpop.f32.mrf.mxu0
    %v3733 = vadd.f32 %v3692, %v3732
    %v3734 = vpop.f32.mrf.mxu0
    %v3735 = vpop.f32.mrf.mxu0
    %3736 = vdwg.mxu0
    %3737 = vmatprep.subr.bf16.mxu0 %v2284
    %3738 = vmatpush1.bf16.msra.mxu0 %v2283
    %3739 = vmatprep.subr.bf16.mxu0 %v2276
    %3740 = vmatpush1.bf16.msra.mxu0 %v2275
    %3741 = vmatprep.subr.bf16.mxu0 %v2268
    %3742 = vmatpush1.bf16.msra.mxu0 %v2267
    %3743 = vmatprep.subr.bf16.mxu0 %v2260
    %3744 = vmatpush1.bf16.msra.mxu0 %v2259
    %3745 = vmatprep.subr.bf16.mxu0 %v2252
    %3746 = vmatpush1.bf16.msra.mxu0 %v2251
    %3747 = vmatprep.subr.bf16.mxu0 %v2244
    %3748 = vmatpush1.bf16.msra.mxu0 %v2243
    %3749 = vmatprep.subr.bf16.mxu0 %v2236
    %3750 = vmatpush1.bf16.msra.mxu0 %v2235
    %3751 = vmatprep.subr.bf16.mxu0 %v2228
    %3752 = vmatpush1.bf16.msra.mxu0 %v2227
    %3753 = vmatprep.subr.bf16.mxu0 %v2348
    %3754 = vmatpush2.bf16.msra.mxu0 %v2347
    %3755 = vmatprep.subr.bf16.mxu0 %v2340
    %3756 = vmatpush2.bf16.msra.mxu0 %v2339
    %3757 = vmatprep.subr.bf16.mxu0 %v2332
    %3758 = vmatpush2.bf16.msra.mxu0 %v2331
    %3759 = vmatprep.subr.bf16.mxu0 %v2324
    %3760 = vmatpush2.bf16.msra.mxu0 %v2323
    %3761 = vmatprep.subr.bf16.mxu0 %v2316
    %3762 = vmatpush2.bf16.msra.mxu0 %v2315
    %3763 = vmatprep.subr.bf16.mxu0 %v2308
    %3764 = vmatpush2.bf16.msra.mxu0 %v2307
    %3765 = vmatprep.subr.bf16.mxu0 %v2300
    %3766 = vmatpush2.bf16.msra.mxu0 %v2299
    %3767 = vmatprep.subr.bf16.mxu0 %v2292
    %3768 = vmatpush2.bf16.msra.mxu0 %v2291
    %3769 = vmatprep.mubr.bf16.mxu0 %v124
    %3770 = vmatmul.mubr.bf16.gmra.mxu0 %v123
    %v3771 = vpop.f32.mrf.mxu0
    %v3772 = vadd.f32 %v672, %v3771
    %v3773 = vpop.f32.mrf.mxu0
    %v3774 = vadd.f32 %v676, %v3773
    %v3775 = vpop.f32.mrf.mxu0
    %v3776 = vpop.f32.mrf.mxu0
    %3777 = vdwg.mxu0
    %3778 = vmatprep.subr.bf16.mxu0 %v2412
    %3779 = vmatpush1.bf16.msra.mxu0 %v2411
    %3780 = vmatprep.subr.bf16.mxu0 %v2404
    %3781 = vmatpush1.bf16.msra.mxu0 %v2403
    %3782 = vmatprep.subr.bf16.mxu0 %v2396
    %3783 = vmatpush1.bf16.msra.mxu0 %v2395
    %3784 = vmatprep.subr.bf16.mxu0 %v2388
    %3785 = vmatpush1.bf16.msra.mxu0 %v2387
    %3786 = vmatprep.subr.bf16.mxu0 %v2380
    %3787 = vmatpush1.bf16.msra.mxu0 %v2379
    %3788 = vmatprep.subr.bf16.mxu0 %v2372
    %3789 = vmatpush1.bf16.msra.mxu0 %v2371
    %3790 = vmatprep.subr.bf16.mxu0 %v2364
    %3791 = vmatpush1.bf16.msra.mxu0 %v2363
    %3792 = vmatprep.subr.bf16.mxu0 %v2356
    %3793 = vmatpush1.bf16.msra.mxu0 %v2355
    %3794 = vmatprep.subr.bf16.mxu0 %v2476
    %3795 = vmatpush2.bf16.msra.mxu0 %v2475
    %3796 = vmatprep.subr.bf16.mxu0 %v2468
    %3797 = vmatpush2.bf16.msra.mxu0 %v2467
    %3798 = vmatprep.subr.bf16.mxu0 %v2460
    %3799 = vmatpush2.bf16.msra.mxu0 %v2459
    %3800 = vmatprep.subr.bf16.mxu0 %v2452
    %3801 = vmatpush2.bf16.msra.mxu0 %v2451
    %3802 = vmatprep.subr.bf16.mxu0 %v2444
    %3803 = vmatpush2.bf16.msra.mxu0 %v2443
    %3804 = vmatprep.subr.bf16.mxu0 %v2436
    %3805 = vmatpush2.bf16.msra.mxu0 %v2435
    %3806 = vmatprep.subr.bf16.mxu0 %v2428
    %3807 = vmatpush2.bf16.msra.mxu0 %v2427
    %3808 = vmatprep.subr.bf16.mxu0 %v2420
    %3809 = vmatpush2.bf16.msra.mxu0 %v2419
    %3810 = vmatprep.mubr.bf16.mxu0 %v126
    %3811 = vmatmul.mubr.bf16.gmra.mxu0 %v125
    %v3812 = vpop.f32.mrf.mxu0
    %v3813 = vadd.f32 %v3772, %v3812
    %v3814 = vpop.f32.mrf.mxu0
    %v3815 = vadd.f32 %v3774, %v3814
    %v3816 = vpop.f32.mrf.mxu0
    %v3817 = vpop.f32.mrf.mxu0
    %3818 = vdwg.mxu0
    %3819 = vmatprep.subr.bf16.mxu0 %v2540
    %3820 = vmatpush1.bf16.msra.mxu0 %v2539
    %3821 = vmatprep.subr.bf16.mxu0 %v2532
    %3822 = vmatpush1.bf16.msra.mxu0 %v2531
    %3823 = vmatprep.subr.bf16.mxu0 %v2524
    %3824 = vmatpush1.bf16.msra.mxu0 %v2523
    %3825 = vmatprep.subr.bf16.mxu0 %v2516
    %3826 = vmatpush1.bf16.msra.mxu0 %v2515
    %3827 = vmatprep.subr.bf16.mxu0 %v2508
    %3828 = vmatpush1.bf16.msra.mxu0 %v2507
    %3829 = vmatprep.subr.bf16.mxu0 %v2500
    %3830 = vmatpush1.bf16.msra.mxu0 %v2499
    %3831 = vmatprep.subr.bf16.mxu0 %v2492
    %3832 = vmatpush1.bf16.msra.mxu0 %v2491
    %3833 = vmatprep.subr.bf16.mxu0 %v2484
    %3834 = vmatpush1.bf16.msra.mxu0 %v2483
    %3835 = vmatprep.subr.bf16.mxu0 %v2604
    %3836 = vmatpush2.bf16.msra.mxu0 %v2603
    %3837 = vmatprep.subr.bf16.mxu0 %v2596
    %3838 = vmatpush2.bf16.msra.mxu0 %v2595
    %3839 = vmatprep.subr.bf16.mxu0 %v2588
    %3840 = vmatpush2.bf16.msra.mxu0 %v2587
    %3841 = vmatprep.subr.bf16.mxu0 %v2580
    %3842 = vmatpush2.bf16.msra.mxu0 %v2579
    %3843 = vmatprep.subr.bf16.mxu0 %v2572
    %3844 = vmatpush2.bf16.msra.mxu0 %v2571
    %3845 = vmatprep.subr.bf16.mxu0 %v2564
    %3846 = vmatpush2.bf16.msra.mxu0 %v2563
    %3847 = vmatprep.subr.bf16.mxu0 %v2556
    %3848 = vmatpush2.bf16.msra.mxu0 %v2555
    %3849 = vmatprep.subr.bf16.mxu0 %v2548
    %3850 = vmatpush2.bf16.msra.mxu0 %v2547
    %3851 = vmatprep.mubr.bf16.mxu0 %v128
    %3852 = vmatmul.mubr.bf16.gmra.mxu0 %v127
    %v3853 = vpop.f32.mrf.mxu0
    %v3854 = vadd.f32 %v3813, %v3853
    %v3855 = vpop.f32.mrf.mxu0
    %v3856 = vadd.f32 %v3815, %v3855
    %v3857 = vpop.f32.mrf.mxu0
    %v3858 = vpop.f32.mrf.mxu0
    %3859 = vdwg.mxu0
    %3860 = vmatprep.subr.bf16.mxu0 %v2668
    %3861 = vmatpush1.bf16.msra.mxu0 %v2667
    %3862 = vmatprep.subr.bf16.mxu0 %v2660
    %3863 = vmatpush1.bf16.msra.mxu0 %v2659
    %3864 = vmatprep.subr.bf16.mxu0 %v2652
    %3865 = vmatpush1.bf16.msra.mxu0 %v2651
    %3866 = vmatprep.subr.bf16.mxu0 %v2644
    %3867 = vmatpush1.bf16.msra.mxu0 %v2643
    %3868 = vmatprep.subr.bf16.mxu0 %v2636
    %3869 = vmatpush1.bf16.msra.mxu0 %v2635
    %3870 = vmatprep.subr.bf16.mxu0 %v2628
    %3871 = vmatpush1.bf16.msra.mxu0 %v2627
    %3872 = vmatprep.subr.bf16.mxu0 %v2620
    %3873 = vmatpush1.bf16.msra.mxu0 %v2619
    %3874 = vmatprep.subr.bf16.mxu0 %v2612
    %3875 = vmatpush1.bf16.msra.mxu0 %v2611
    %3876 = vmatprep.subr.bf16.mxu0 %v2732
    %3877 = vmatpush2.bf16.msra.mxu0 %v2731
    %3878 = vmatprep.subr.bf16.mxu0 %v2724
    %3879 = vmatpush2.bf16.msra.mxu0 %v2723
    %3880 = vmatprep.subr.bf16.mxu0 %v2716
    %3881 = vmatpush2.bf16.msra.mxu0 %v2715
    %3882 = vmatprep.subr.bf16.mxu0 %v2708
    %3883 = vmatpush2.bf16.msra.mxu0 %v2707
    %3884 = vmatprep.subr.bf16.mxu0 %v2700
    %3885 = vmatpush2.bf16.msra.mxu0 %v2699
    %3886 = vmatprep.subr.bf16.mxu0 %v2692
    %3887 = vmatpush2.bf16.msra.mxu0 %v2691
    %3888 = vmatprep.subr.bf16.mxu0 %v2684
    %3889 = vmatpush2.bf16.msra.mxu0 %v2683
    %3890 = vmatprep.subr.bf16.mxu0 %v2676
    %3891 = vmatpush2.bf16.msra.mxu0 %v2675
    %3892 = vmatprep.mubr.bf16.mxu0 %v130
    %3893 = vmatmul.mubr.bf16.gmra.mxu0 %v129
    %v3894 = vpop.f32.mrf.mxu0
    %v3895 = vadd.f32 %v3854, %v3894
    %v3896 = vpop.f32.mrf.mxu0
    %v3897 = vadd.f32 %v3856, %v3896
    %v3898 = vpop.f32.mrf.mxu0
    %v3899 = vpop.f32.mrf.mxu0
    %3900 = vdwg.mxu0
    %v3901 = vmax.f32 %v3403, 0.0
    %v3902 = vmax.f32 %v3405, 0.0
    %v3903 = vmax.f32 %v3567, 0.0
    %v3904 = vmax.f32 %v3569, 0.0
    %v3905 = vmax.f32 %v3731, 0.0
    %v3906 = vmax.f32 %v3733, 0.0
    %v3907 = vmax.f32 %v3895, 0.0
    %v3908 = vmax.f32 %v3897, 0.0
    %v3909 = vpack.c.bf16 %v3901, %v3901
    %v3910 = vpack.c.bf16 %v3902, %v3902
    %v3911 = vpack.c.bf16 %v3903, %v3903
    %v3912 = vpack.c.bf16 %v3904, %v3904
    %v3913 = vpack.c.bf16 %v3905, %v3905
    %v3914 = vpack.c.bf16 %v3906, %v3906
    %v3915 = vpack.c.bf16 %v3907, %v3907
    %v3916 = vpack.c.bf16 %v3908, %v3908
    %v3917 = vld [vmem:[#allocation8] sm:$0xff]
    %v3918 = vld [vmem:[#allocation8 + $0x8] sm:$0xff]
    %v3919 = vld [vmem:[#allocation8 + $0x10] sm:$0xff]
    %v3920 = vld [vmem:[#allocation8 + $0x18] sm:$0xff]
    %v3921 = vld [vmem:[#allocation8 + $0x20] sm:$0xff]
    %v3922 = vld [vmem:[#allocation8 + $0x28] sm:$0xff]
    %v3923 = vld [vmem:[#allocation8 + $0x30] sm:$0xff]
    %v3924 = vld [vmem:[#allocation8 + $0x38] sm:$0xff]
    %v3925 = vld [vmem:[#allocation8 + $0x40] sm:$0xff]
    %v3926 = vld [vmem:[#allocation8 + $0x48] sm:$0xff]
    %v3927 = vld [vmem:[#allocation8 + $0x50] sm:$0xff]
    %v3928 = vld [vmem:[#allocation8 + $0x58] sm:$0xff]
    %v3929 = vld [vmem:[#allocation8 + $0x60] sm:$0xff]
    %v3930 = vld [vmem:[#allocation8 + $0x68] sm:$0xff]
    %v3931 = vld [vmem:[#allocation8 + $0x70] sm:$0xff]
    %v3932 = vld [vmem:[#allocation8 + $0x78] sm:$0xff]
    %v3933 = vld [vmem:[#allocation8 + $0x80] sm:$0xff]
    %v3934 = vld [vmem:[#allocation8 + $0x88] sm:$0xff]
    %v3935 = vld [vmem:[#allocation8 + $0x90] sm:$0xff]
    %v3936 = vld [vmem:[#allocation8 + $0x98] sm:$0xff]
    %v3937 = vld [vmem:[#allocation8 + $0xa0] sm:$0xff]
    %v3938 = vld [vmem:[#allocation8 + $0xa8] sm:$0xff]
    %v3939 = vld [vmem:[#allocation8 + $0xb0] sm:$0xff]
    %v3940 = vld [vmem:[#allocation8 + $0xb8] sm:$0xff]
    %v3941 = vld [vmem:[#allocation8 + $0xc0] sm:$0xff]
    %v3942 = vld [vmem:[#allocation8 + $0xc8] sm:$0xff]
    %v3943 = vld [vmem:[#allocation8 + $0xd0] sm:$0xff]
    %v3944 = vld [vmem:[#allocation8 + $0xd8] sm:$0xff]
    %v3945 = vld [vmem:[#allocation8 + $0xe0] sm:$0xff]
    %v3946 = vld [vmem:[#allocation8 + $0xe8] sm:$0xff]
    %v3947 = vld [vmem:[#allocation8 + $0xf0] sm:$0xff]
    %v3948 = vld [vmem:[#allocation8 + $0xf8] sm:$0xff]
    %v3949 = vld [vmem:[#allocation8 + $0x100] sm:$0xff]
    %v3950 = vld [vmem:[#allocation8 + $0x108] sm:$0xff]
    %v3951 = vld [vmem:[#allocation8 + $0x110] sm:$0xff]
    %v3952 = vld [vmem:[#allocation8 + $0x118] sm:$0xff]
    %v3953 = vld [vmem:[#allocation8 + $0x120] sm:$0xff]
    %v3954 = vld [vmem:[#allocation8 + $0x128] sm:$0xff]
    %v3955 = vld [vmem:[#allocation8 + $0x130] sm:$0xff]
    %v3956 = vld [vmem:[#allocation8 + $0x138] sm:$0xff]
    %v3957 = vld [vmem:[#allocation8 + $0x140] sm:$0xff]
    %v3958 = vld [vmem:[#allocation8 + $0x148] sm:$0xff]
    %v3959 = vld [vmem:[#allocation8 + $0x150] sm:$0xff]
    %v3960 = vld [vmem:[#allocation8 + $0x158] sm:$0xff]
    %v3961 = vld [vmem:[#allocation8 + $0x160] sm:$0xff]
    %v3962 = vld [vmem:[#allocation8 + $0x168] sm:$0xff]
    %v3963 = vld [vmem:[#allocation8 + $0x170] sm:$0xff]
    %v3964 = vld [vmem:[#allocation8 + $0x178] sm:$0xff]
    %v3965 = vld [vmem:[#allocation8 + $0x180] sm:$0xff]
    %v3966 = vld [vmem:[#allocation8 + $0x188] sm:$0xff]
    %v3967 = vld [vmem:[#allocation8 + $0x190] sm:$0xff]
    %v3968 = vld [vmem:[#allocation8 + $0x198] sm:$0xff]
    %v3969 = vld [vmem:[#allocation8 + $0x1a0] sm:$0xff]
    %v3970 = vld [vmem:[#allocation8 + $0x1a8] sm:$0xff]
    %v3971 = vld [vmem:[#allocation8 + $0x1b0] sm:$0xff]
    %v3972 = vld [vmem:[#allocation8 + $0x1b8] sm:$0xff]
    %v3973 = vld [vmem:[#allocation8 + $0x1c0] sm:$0xff]
    %v3974 = vld [vmem:[#allocation8 + $0x1c8] sm:$0xff]
    %v3975 = vld [vmem:[#allocation8 + $0x1d0] sm:$0xff]
    %v3976 = vld [vmem:[#allocation8 + $0x1d8] sm:$0xff]
    %v3977 = vld [vmem:[#allocation8 + $0x1e0] sm:$0xff]
    %v3978 = vld [vmem:[#allocation8 + $0x1e8] sm:$0xff]
    %v3979 = vld [vmem:[#allocation8 + $0x1f0] sm:$0xff]
    %v3980 = vld [vmem:[#allocation8 + $0x1f8] sm:$0xff]
    %v3981 = vld [vmem:[#allocation8 + $0x200] sm:$0xff]
    %v3982 = vld [vmem:[#allocation8 + $0x208] sm:$0xff]
    %v3983 = vld [vmem:[#allocation8 + $0x210] sm:$0xff]
    %v3984 = vld [vmem:[#allocation8 + $0x218] sm:$0xff]
    %v3985 = vld [vmem:[#allocation8 + $0x220] sm:$0xff]
    %v3986 = vld [vmem:[#allocation8 + $0x228] sm:$0xff]
    %v3987 = vld [vmem:[#allocation8 + $0x230] sm:$0xff]
    %v3988 = vld [vmem:[#allocation8 + $0x238] sm:$0xff]
    %v3989 = vld [vmem:[#allocation8 + $0x240] sm:$0xff]
    %v3990 = vld [vmem:[#allocation8 + $0x248] sm:$0xff]
    %v3991 = vld [vmem:[#allocation8 + $0x250] sm:$0xff]
    %v3992 = vld [vmem:[#allocation8 + $0x258] sm:$0xff]
    %v3993 = vld [vmem:[#allocation8 + $0x260] sm:$0xff]
    %v3994 = vld [vmem:[#allocation8 + $0x268] sm:$0xff]
    %v3995 = vld [vmem:[#allocation8 + $0x270] sm:$0xff]
    %v3996 = vld [vmem:[#allocation8 + $0x278] sm:$0xff]
    %v3997 = vld [vmem:[#allocation8 + $0x280] sm:$0xff]
    %v3998 = vld [vmem:[#allocation8 + $0x288] sm:$0xff]
    %v3999 = vld [vmem:[#allocation8 + $0x290] sm:$0xff]
    %v4000 = vld [vmem:[#allocation8 + $0x298] sm:$0xff]
    %v4001 = vld [vmem:[#allocation8 + $0x2a0] sm:$0xff]
    %v4002 = vld [vmem:[#allocation8 + $0x2a8] sm:$0xff]
    %v4003 = vld [vmem:[#allocation8 + $0x2b0] sm:$0xff]
    %v4004 = vld [vmem:[#allocation8 + $0x2b8] sm:$0xff]
    %v4005 = vld [vmem:[#allocation8 + $0x2c0] sm:$0xff]
    %v4006 = vld [vmem:[#allocation8 + $0x2c8] sm:$0xff]
    %v4007 = vld [vmem:[#allocation8 + $0x2d0] sm:$0xff]
    %v4008 = vld [vmem:[#allocation8 + $0x2d8] sm:$0xff]
    %v4009 = vld [vmem:[#allocation8 + $0x2e0] sm:$0xff]
    %v4010 = vld [vmem:[#allocation8 + $0x2e8] sm:$0xff]
    %v4011 = vld [vmem:[#allocation8 + $0x2f0] sm:$0xff]
    %v4012 = vld [vmem:[#allocation8 + $0x2f8] sm:$0xff]
    %v4013 = vld [vmem:[#allocation8 + $0x300] sm:$0xff]
    %v4014 = vld [vmem:[#allocation8 + $0x308] sm:$0xff]
    %v4015 = vld [vmem:[#allocation8 + $0x310] sm:$0xff]
    %v4016 = vld [vmem:[#allocation8 + $0x318] sm:$0xff]
    %v4017 = vld [vmem:[#allocation8 + $0x320] sm:$0xff]
    %v4018 = vld [vmem:[#allocation8 + $0x328] sm:$0xff]
    %v4019 = vld [vmem:[#allocation8 + $0x330] sm:$0xff]
    %v4020 = vld [vmem:[#allocation8 + $0x338] sm:$0xff]
    %v4021 = vld [vmem:[#allocation8 + $0x340] sm:$0xff]
    %v4022 = vld [vmem:[#allocation8 + $0x348] sm:$0xff]
    %v4023 = vld [vmem:[#allocation8 + $0x350] sm:$0xff]
    %v4024 = vld [vmem:[#allocation8 + $0x358] sm:$0xff]
    %v4025 = vld [vmem:[#allocation8 + $0x360] sm:$0xff]
    %v4026 = vld [vmem:[#allocation8 + $0x368] sm:$0xff]
    %v4027 = vld [vmem:[#allocation8 + $0x370] sm:$0xff]
    %v4028 = vld [vmem:[#allocation8 + $0x378] sm:$0xff]
    %v4029 = vld [vmem:[#allocation8 + $0x380] sm:$0xff]
    %v4030 = vld [vmem:[#allocation8 + $0x388] sm:$0xff]
    %v4031 = vld [vmem:[#allocation8 + $0x390] sm:$0xff]
    %v4032 = vld [vmem:[#allocation8 + $0x398] sm:$0xff]
    %v4033 = vld [vmem:[#allocation8 + $0x3a0] sm:$0xff]
    %v4034 = vld [vmem:[#allocation8 + $0x3a8] sm:$0xff]
    %v4035 = vld [vmem:[#allocation8 + $0x3b0] sm:$0xff]
    %v4036 = vld [vmem:[#allocation8 + $0x3b8] sm:$0xff]
    %v4037 = vld [vmem:[#allocation8 + $0x3c0] sm:$0xff]
    %v4038 = vld [vmem:[#allocation8 + $0x3c8] sm:$0xff]
    %v4039 = vld [vmem:[#allocation8 + $0x3d0] sm:$0xff]
    %v4040 = vld [vmem:[#allocation8 + $0x3d8] sm:$0xff]
    %v4041 = vld [vmem:[#allocation8 + $0x3e0] sm:$0xff]
    %v4042 = vld [vmem:[#allocation8 + $0x3e8] sm:$0xff]
    %v4043 = vld [vmem:[#allocation8 + $0x3f0] sm:$0xff]
    %v4044 = vld [vmem:[#allocation8 + $0x3f8] sm:$0xff]
    %v4045 = vld [vmem:[#allocation10] sm:$0x3]
    %v4047 = vlaneseq
    %v4048 = vshrl.u32 %v4047, 7
    %v4049 = vsub.s32 0, %v4048
    %v4050 = vrot.slane %v4045, %v4049
    %v4051 = vlaneseq
    %v4052 = vshrl.u32 %v4051, 7
    %v4053 = vsub.s32 1, %v4052
    %v4054 = vrot.slane %v4045, %v4053
    %v4185 = vunpack.c.l.b16 %v3917
    %v4186 = vunpack.c.h.b16 %v3917
    %v4187 = vunpack.c.l.b16 %v3918
    %v4188 = vunpack.c.h.b16 %v3918
    %v4189 = vunpack.c.l.b16 %v3919
    %v4190 = vunpack.c.h.b16 %v3919
    %v4191 = vunpack.c.l.b16 %v3920
    %v4192 = vunpack.c.h.b16 %v3920
    %v4193 = vunpack.c.l.b16 %v3921
    %v4194 = vunpack.c.h.b16 %v3921
    %v4195 = vunpack.c.l.b16 %v3922
    %v4196 = vunpack.c.h.b16 %v3922
    %v4197 = vunpack.c.l.b16 %v3923
    %v4198 = vunpack.c.h.b16 %v3923
    %v4199 = vunpack.c.l.b16 %v3924
    %v4200 = vunpack.c.h.b16 %v3924
    %v4201 = vunpack.c.l.b16 %v3925
    %v4202 = vunpack.c.h.b16 %v3925
    %v4203 = vunpack.c.l.b16 %v3926
    %v4204 = vunpack.c.h.b16 %v3926
    %v4205 = vunpack.c.l.b16 %v3927
    %v4206 = vunpack.c.h.b16 %v3927
    %v4207 = vunpack.c.l.b16 %v3928
    %v4208 = vunpack.c.h.b16 %v3928
    %v4209 = vunpack.c.l.b16 %v3929
    %v4210 = vunpack.c.h.b16 %v3929
    %v4211 = vunpack.c.l.b16 %v3930
    %v4212 = vunpack.c.h.b16 %v3930
    %v4213 = vunpack.c.l.b16 %v3931
    %v4214 = vunpack.c.h.b16 %v3931
    %v4215 = vunpack.c.l.b16 %v3932
    %v4216 = vunpack.c.h.b16 %v3932
    %v4217 = vunpack.c.l.b16 %v3933
    %v4218 = vunpack.c.h.b16 %v3933
    %v4219 = vunpack.c.l.b16 %v3934
    %v4220 = vunpack.c.h.b16 %v3934
    %v4221 = vunpack.c.l.b16 %v3935
    %v4222 = vunpack.c.h.b16 %v3935
    %v4223 = vunpack.c.l.b16 %v3936
    %v4224 = vunpack.c.h.b16 %v3936
    %v4225 = vunpack.c.l.b16 %v3937
    %v4226 = vunpack.c.h.b16 %v3937
    %v4227 = vunpack.c.l.b16 %v3938
    %v4228 = vunpack.c.h.b16 %v3938
    %v4229 = vunpack.c.l.b16 %v3939
    %v4230 = vunpack.c.h.b16 %v3939
    %v4231 = vunpack.c.l.b16 %v3940
    %v4232 = vunpack.c.h.b16 %v3940
    %v4233 = vunpack.c.l.b16 %v3941
    %v4234 = vunpack.c.h.b16 %v3941
    %v4235 = vunpack.c.l.b16 %v3942
    %v4236 = vunpack.c.h.b16 %v3942
    %v4237 = vunpack.c.l.b16 %v3943
    %v4238 = vunpack.c.h.b16 %v3943
    %v4239 = vunpack.c.l.b16 %v3944
    %v4240 = vunpack.c.h.b16 %v3944
    %v4241 = vunpack.c.l.b16 %v3945
    %v4242 = vunpack.c.h.b16 %v3945
    %v4243 = vunpack.c.l.b16 %v3946
    %v4244 = vunpack.c.h.b16 %v3946
    %v4245 = vunpack.c.l.b16 %v3947
    %v4246 = vunpack.c.h.b16 %v3947
    %v4247 = vunpack.c.l.b16 %v3948
    %v4248 = vunpack.c.h.b16 %v3948
    %v4249 = vunpack.c.l.b16 %v3949
    %v4250 = vunpack.c.h.b16 %v3949
    %v4251 = vunpack.c.l.b16 %v3950
    %v4252 = vunpack.c.h.b16 %v3950
    %v4253 = vunpack.c.l.b16 %v3951
    %v4254 = vunpack.c.h.b16 %v3951
    %v4255 = vunpack.c.l.b16 %v3952
    %v4256 = vunpack.c.h.b16 %v3952
    %v4257 = vunpack.c.l.b16 %v3953
    %v4258 = vunpack.c.h.b16 %v3953
    %v4259 = vunpack.c.l.b16 %v3954
    %v4260 = vunpack.c.h.b16 %v3954
    %v4261 = vunpack.c.l.b16 %v3955
    %v4262 = vunpack.c.h.b16 %v3955
    %v4263 = vunpack.c.l.b16 %v3956
    %v4264 = vunpack.c.h.b16 %v3956
    %v4265 = vunpack.c.l.b16 %v3957
    %v4266 = vunpack.c.h.b16 %v3957
    %v4267 = vunpack.c.l.b16 %v3958
    %v4268 = vunpack.c.h.b16 %v3958
    %v4269 = vunpack.c.l.b16 %v3959
    %v4270 = vunpack.c.h.b16 %v3959
    %v4271 = vunpack.c.l.b16 %v3960
    %v4272 = vunpack.c.h.b16 %v3960
    %v4273 = vunpack.c.l.b16 %v3961
    %v4274 = vunpack.c.h.b16 %v3961
    %v4275 = vunpack.c.l.b16 %v3962
    %v4276 = vunpack.c.h.b16 %v3962
    %v4277 = vunpack.c.l.b16 %v3963
    %v4278 = vunpack.c.h.b16 %v3963
    %v4279 = vunpack.c.l.b16 %v3964
    %v4280 = vunpack.c.h.b16 %v3964
    %v4281 = vunpack.c.l.b16 %v3965
    %v4282 = vunpack.c.h.b16 %v3965
    %v4283 = vunpack.c.l.b16 %v3966
    %v4284 = vunpack.c.h.b16 %v3966
    %v4285 = vunpack.c.l.b16 %v3967
    %v4286 = vunpack.c.h.b16 %v3967
    %v4287 = vunpack.c.l.b16 %v3968
    %v4288 = vunpack.c.h.b16 %v3968
    %v4289 = vunpack.c.l.b16 %v3969
    %v4290 = vunpack.c.h.b16 %v3969
    %v4291 = vunpack.c.l.b16 %v3970
    %v4292 = vunpack.c.h.b16 %v3970
    %v4293 = vunpack.c.l.b16 %v3971
    %v4294 = vunpack.c.h.b16 %v3971
    %v4295 = vunpack.c.l.b16 %v3972
    %v4296 = vunpack.c.h.b16 %v3972
    %v4297 = vunpack.c.l.b16 %v3973
    %v4298 = vunpack.c.h.b16 %v3973
    %v4299 = vunpack.c.l.b16 %v3974
    %v4300 = vunpack.c.h.b16 %v3974
    %v4301 = vunpack.c.l.b16 %v3975
    %v4302 = vunpack.c.h.b16 %v3975
    %v4303 = vunpack.c.l.b16 %v3976
    %v4304 = vunpack.c.h.b16 %v3976
    %v4305 = vunpack.c.l.b16 %v3977
    %v4306 = vunpack.c.h.b16 %v3977
    %v4307 = vunpack.c.l.b16 %v3978
    %v4308 = vunpack.c.h.b16 %v3978
    %v4309 = vunpack.c.l.b16 %v3979
    %v4310 = vunpack.c.h.b16 %v3979
    %v4311 = vunpack.c.l.b16 %v3980
    %v4312 = vunpack.c.h.b16 %v3980
    %v4313 = vunpack.c.l.b16 %v3981
    %v4314 = vunpack.c.h.b16 %v3981
    %v4315 = vunpack.c.l.b16 %v3982
    %v4316 = vunpack.c.h.b16 %v3982
    %v4317 = vunpack.c.l.b16 %v3983
    %v4318 = vunpack.c.h.b16 %v3983
    %v4319 = vunpack.c.l.b16 %v3984
    %v4320 = vunpack.c.h.b16 %v3984
    %v4321 = vunpack.c.l.b16 %v3985
    %v4322 = vunpack.c.h.b16 %v3985
    %v4323 = vunpack.c.l.b16 %v3986
    %v4324 = vunpack.c.h.b16 %v3986
    %v4325 = vunpack.c.l.b16 %v3987
    %v4326 = vunpack.c.h.b16 %v3987
    %v4327 = vunpack.c.l.b16 %v3988
    %v4328 = vunpack.c.h.b16 %v3988
    %v4329 = vunpack.c.l.b16 %v3989
    %v4330 = vunpack.c.h.b16 %v3989
    %v4331 = vunpack.c.l.b16 %v3990
    %v4332 = vunpack.c.h.b16 %v3990
    %v4333 = vunpack.c.l.b16 %v3991
    %v4334 = vunpack.c.h.b16 %v3991
    %v4335 = vunpack.c.l.b16 %v3992
    %v4336 = vunpack.c.h.b16 %v3992
    %v4337 = vunpack.c.l.b16 %v3993
    %v4338 = vunpack.c.h.b16 %v3993
    %v4339 = vunpack.c.l.b16 %v3994
    %v4340 = vunpack.c.h.b16 %v3994
    %v4341 = vunpack.c.l.b16 %v3995
    %v4342 = vunpack.c.h.b16 %v3995
    %v4343 = vunpack.c.l.b16 %v3996
    %v4344 = vunpack.c.h.b16 %v3996
    %v4345 = vunpack.c.l.b16 %v3997
    %v4346 = vunpack.c.h.b16 %v3997
    %v4347 = vunpack.c.l.b16 %v3998
    %v4348 = vunpack.c.h.b16 %v3998
    %v4349 = vunpack.c.l.b16 %v3999
    %v4350 = vunpack.c.h.b16 %v3999
    %v4351 = vunpack.c.l.b16 %v4000
    %v4352 = vunpack.c.h.b16 %v4000
    %v4353 = vunpack.c.l.b16 %v4001
    %v4354 = vunpack.c.h.b16 %v4001
    %v4355 = vunpack.c.l.b16 %v4002
    %v4356 = vunpack.c.h.b16 %v4002
    %v4357 = vunpack.c.l.b16 %v4003
    %v4358 = vunpack.c.h.b16 %v4003
    %v4359 = vunpack.c.l.b16 %v4004
    %v4360 = vunpack.c.h.b16 %v4004
    %v4361 = vunpack.c.l.b16 %v4005
    %v4362 = vunpack.c.h.b16 %v4005
    %v4363 = vunpack.c.l.b16 %v4006
    %v4364 = vunpack.c.h.b16 %v4006
    %v4365 = vunpack.c.l.b16 %v4007
    %v4366 = vunpack.c.h.b16 %v4007
    %v4367 = vunpack.c.l.b16 %v4008
    %v4368 = vunpack.c.h.b16 %v4008
    %v4369 = vunpack.c.l.b16 %v4009
    %v4370 = vunpack.c.h.b16 %v4009
    %v4371 = vunpack.c.l.b16 %v4010
    %v4372 = vunpack.c.h.b16 %v4010
    %v4373 = vunpack.c.l.b16 %v4011
    %v4374 = vunpack.c.h.b16 %v4011
    %v4375 = vunpack.c.l.b16 %v4012
    %v4376 = vunpack.c.h.b16 %v4012
    %v4377 = vunpack.c.l.b16 %v4013
    %v4378 = vunpack.c.h.b16 %v4013
    %v4379 = vunpack.c.l.b16 %v4014
    %v4380 = vunpack.c.h.b16 %v4014
    %v4381 = vunpack.c.l.b16 %v4015
    %v4382 = vunpack.c.h.b16 %v4015
    %v4383 = vunpack.c.l.b16 %v4016
    %v4384 = vunpack.c.h.b16 %v4016
    %v4385 = vunpack.c.l.b16 %v4017
    %v4386 = vunpack.c.h.b16 %v4017
    %v4387 = vunpack.c.l.b16 %v4018
    %v4388 = vunpack.c.h.b16 %v4018
    %v4389 = vunpack.c.l.b16 %v4019
    %v4390 = vunpack.c.h.b16 %v4019
    %v4391 = vunpack.c.l.b16 %v4020
    %v4392 = vunpack.c.h.b16 %v4020
    %v4393 = vunpack.c.l.b16 %v4021
    %v4394 = vunpack.c.h.b16 %v4021
    %v4395 = vunpack.c.l.b16 %v4022
    %v4396 = vunpack.c.h.b16 %v4022
    %v4397 = vunpack.c.l.b16 %v4023
    %v4398 = vunpack.c.h.b16 %v4023
    %v4399 = vunpack.c.l.b16 %v4024
    %v4400 = vunpack.c.h.b16 %v4024
    %v4401 = vunpack.c.l.b16 %v4025
    %v4402 = vunpack.c.h.b16 %v4025
    %v4403 = vunpack.c.l.b16 %v4026
    %v4404 = vunpack.c.h.b16 %v4026
    %v4405 = vunpack.c.l.b16 %v4027
    %v4406 = vunpack.c.h.b16 %v4027
    %v4407 = vunpack.c.l.b16 %v4028
    %v4408 = vunpack.c.h.b16 %v4028
    %v4409 = vunpack.c.l.b16 %v4029
    %v4410 = vunpack.c.h.b16 %v4029
    %v4411 = vunpack.c.l.b16 %v4030
    %v4412 = vunpack.c.h.b16 %v4030
    %v4413 = vunpack.c.l.b16 %v4031
    %v4414 = vunpack.c.h.b16 %v4031
    %v4415 = vunpack.c.l.b16 %v4032
    %v4416 = vunpack.c.h.b16 %v4032
    %v4417 = vunpack.c.l.b16 %v4033
    %v4418 = vunpack.c.h.b16 %v4033
    %v4419 = vunpack.c.l.b16 %v4034
    %v4420 = vunpack.c.h.b16 %v4034
    %v4421 = vunpack.c.l.b16 %v4035
    %v4422 = vunpack.c.h.b16 %v4035
    %v4423 = vunpack.c.l.b16 %v4036
    %v4424 = vunpack.c.h.b16 %v4036
    %v4425 = vunpack.c.l.b16 %v4037
    %v4426 = vunpack.c.h.b16 %v4037
    %v4427 = vunpack.c.l.b16 %v4038
    %v4428 = vunpack.c.h.b16 %v4038
    %v4429 = vunpack.c.l.b16 %v4039
    %v4430 = vunpack.c.h.b16 %v4039
    %v4431 = vunpack.c.l.b16 %v4040
    %v4432 = vunpack.c.h.b16 %v4040
    %v4433 = vunpack.c.l.b16 %v4041
    %v4434 = vunpack.c.h.b16 %v4041
    %v4435 = vunpack.c.l.b16 %v4042
    %v4436 = vunpack.c.h.b16 %v4042
    %v4437 = vunpack.c.l.b16 %v4043
    %v4438 = vunpack.c.h.b16 %v4043
    %v4439 = vunpack.c.l.b16 %v4044
    %v4440 = vunpack.c.h.b16 %v4044
    %v4441 = vpack.c.b16 %v4187, %v4185
    %v4442 = vpack.c.b16 %v4188, %v4186
    %v4443 = vpack.c.b16 %v4191, %v4189
    %v4444 = vpack.c.b16 %v4192, %v4190
    %v4445 = vpack.c.b16 %v4195, %v4193
    %v4446 = vpack.c.b16 %v4196, %v4194
    %v4447 = vpack.c.b16 %v4199, %v4197
    %v4448 = vpack.c.b16 %v4200, %v4198
    %v4449 = vpack.c.b16 %v4203, %v4201
    %v4450 = vpack.c.b16 %v4204, %v4202
    %v4451 = vpack.c.b16 %v4207, %v4205
    %v4452 = vpack.c.b16 %v4208, %v4206
    %v4453 = vpack.c.b16 %v4211, %v4209
    %v4454 = vpack.c.b16 %v4212, %v4210
    %v4455 = vpack.c.b16 %v4215, %v4213
    %v4456 = vpack.c.b16 %v4216, %v4214
    %v4457 = vpack.c.b16 %v4219, %v4217
    %v4458 = vpack.c.b16 %v4220, %v4218
    %v4459 = vpack.c.b16 %v4223, %v4221
    %v4460 = vpack.c.b16 %v4224, %v4222
    %v4461 = vpack.c.b16 %v4227, %v4225
    %v4462 = vpack.c.b16 %v4228, %v4226
    %v4463 = vpack.c.b16 %v4231, %v4229
    %v4464 = vpack.c.b16 %v4232, %v4230
    %v4465 = vpack.c.b16 %v4235, %v4233
    %v4466 = vpack.c.b16 %v4236, %v4234
    %v4467 = vpack.c.b16 %v4239, %v4237
    %v4468 = vpack.c.b16 %v4240, %v4238
    %v4469 = vpack.c.b16 %v4243, %v4241
    %v4470 = vpack.c.b16 %v4244, %v4242
    %v4471 = vpack.c.b16 %v4247, %v4245
    %v4472 = vpack.c.b16 %v4248, %v4246
    %v4473 = vpack.c.b16 %v4251, %v4249
    %v4474 = vpack.c.b16 %v4252, %v4250
    %v4475 = vpack.c.b16 %v4255, %v4253
    %v4476 = vpack.c.b16 %v4256, %v4254
    %v4477 = vpack.c.b16 %v4259, %v4257
    %v4478 = vpack.c.b16 %v4260, %v4258
    %v4479 = vpack.c.b16 %v4263, %v4261
    %v4480 = vpack.c.b16 %v4264, %v4262
    %v4481 = vpack.c.b16 %v4267, %v4265
    %v4482 = vpack.c.b16 %v4268, %v4266
    %v4483 = vpack.c.b16 %v4271, %v4269
    %v4484 = vpack.c.b16 %v4272, %v4270
    %v4485 = vpack.c.b16 %v4275, %v4273
    %v4486 = vpack.c.b16 %v4276, %v4274
    %v4487 = vpack.c.b16 %v4279, %v4277
    %v4488 = vpack.c.b16 %v4280, %v4278
    %v4489 = vpack.c.b16 %v4283, %v4281
    %v4490 = vpack.c.b16 %v4284, %v4282
    %v4491 = vpack.c.b16 %v4287, %v4285
    %v4492 = vpack.c.b16 %v4288, %v4286
    %v4493 = vpack.c.b16 %v4291, %v4289
    %v4494 = vpack.c.b16 %v4292, %v4290
    %v4495 = vpack.c.b16 %v4295, %v4293
    %v4496 = vpack.c.b16 %v4296, %v4294
    %v4497 = vpack.c.b16 %v4299, %v4297
    %v4498 = vpack.c.b16 %v4300, %v4298
    %v4499 = vpack.c.b16 %v4303, %v4301
    %v4500 = vpack.c.b16 %v4304, %v4302
    %v4501 = vpack.c.b16 %v4307, %v4305
    %v4502 = vpack.c.b16 %v4308, %v4306
    %v4503 = vpack.c.b16 %v4311, %v4309
    %v4504 = vpack.c.b16 %v4312, %v4310
    %v4505 = vpack.c.b16 %v4315, %v4313
    %v4506 = vpack.c.b16 %v4316, %v4314
    %v4507 = vpack.c.b16 %v4319, %v4317
    %v4508 = vpack.c.b16 %v4320, %v4318
    %v4509 = vpack.c.b16 %v4323, %v4321
    %v4510 = vpack.c.b16 %v4324, %v4322
    %v4511 = vpack.c.b16 %v4327, %v4325
    %v4512 = vpack.c.b16 %v4328, %v4326
    %v4513 = vpack.c.b16 %v4331, %v4329
    %v4514 = vpack.c.b16 %v4332, %v4330
    %v4515 = vpack.c.b16 %v4335, %v4333
    %v4516 = vpack.c.b16 %v4336, %v4334
    %v4517 = vpack.c.b16 %v4339, %v4337
    %v4518 = vpack.c.b16 %v4340, %v4338
    %v4519 = vpack.c.b16 %v4343, %v4341
    %v4520 = vpack.c.b16 %v4344, %v4342
    %v4521 = vpack.c.b16 %v4347, %v4345
    %v4522 = vpack.c.b16 %v4348, %v4346
    %v4523 = vpack.c.b16 %v4351, %v4349
    %v4524 = vpack.c.b16 %v4352, %v4350
    %v4525 = vpack.c.b16 %v4355, %v4353
    %v4526 = vpack.c.b16 %v4356, %v4354
    %v4527 = vpack.c.b16 %v4359, %v4357
    %v4528 = vpack.c.b16 %v4360, %v4358
    %v4529 = vpack.c.b16 %v4363, %v4361
    %v4530 = vpack.c.b16 %v4364, %v4362
    %v4531 = vpack.c.b16 %v4367, %v4365
    %v4532 = vpack.c.b16 %v4368, %v4366
    %v4533 = vpack.c.b16 %v4371, %v4369
    %v4534 = vpack.c.b16 %v4372, %v4370
    %v4535 = vpack.c.b16 %v4375, %v4373
    %v4536 = vpack.c.b16 %v4376, %v4374
    %v4537 = vpack.c.b16 %v4379, %v4377
    %v4538 = vpack.c.b16 %v4380, %v4378
    %v4539 = vpack.c.b16 %v4383, %v4381
    %v4540 = vpack.c.b16 %v4384, %v4382
    %v4541 = vpack.c.b16 %v4387, %v4385
    %v4542 = vpack.c.b16 %v4388, %v4386
    %v4543 = vpack.c.b16 %v4391, %v4389
    %v4544 = vpack.c.b16 %v4392, %v4390
    %v4545 = vpack.c.b16 %v4395, %v4393
    %v4546 = vpack.c.b16 %v4396, %v4394
    %v4547 = vpack.c.b16 %v4399, %v4397
    %v4548 = vpack.c.b16 %v4400, %v4398
    %v4549 = vpack.c.b16 %v4403, %v4401
    %v4550 = vpack.c.b16 %v4404, %v4402
    %v4551 = vpack.c.b16 %v4407, %v4405
    %v4552 = vpack.c.b16 %v4408, %v4406
    %v4553 = vpack.c.b16 %v4411, %v4409
    %v4554 = vpack.c.b16 %v4412, %v4410
    %v4555 = vpack.c.b16 %v4415, %v4413
    %v4556 = vpack.c.b16 %v4416, %v4414
    %v4557 = vpack.c.b16 %v4419, %v4417
    %v4558 = vpack.c.b16 %v4420, %v4418
    %v4559 = vpack.c.b16 %v4423, %v4421
    %v4560 = vpack.c.b16 %v4424, %v4422
    %v4561 = vpack.c.b16 %v4427, %v4425
    %v4562 = vpack.c.b16 %v4428, %v4426
    %v4563 = vpack.c.b16 %v4431, %v4429
    %v4564 = vpack.c.b16 %v4432, %v4430
    %v4565 = vpack.c.b16 %v4435, %v4433
    %v4566 = vpack.c.b16 %v4436, %v4434
    %v4567 = vpack.c.b16 %v4439, %v4437
    %v4568 = vpack.c.b16 %v4440, %v4438
    %4697 = vmatprep.subr.bf16.mxu0 %v4456
    %4698 = vmatpush1.bf16.msra.mxu0 %v4455
    %4699 = vmatprep.subr.bf16.mxu0 %v4454
    %4700 = vmatpush1.bf16.msra.mxu0 %v4453
    %4701 = vmatprep.subr.bf16.mxu0 %v4452
    %4702 = vmatpush1.bf16.msra.mxu0 %v4451
    %4703 = vmatprep.subr.bf16.mxu0 %v4450
    %4704 = vmatpush1.bf16.msra.mxu0 %v4449
    %4705 = vmatprep.subr.bf16.mxu0 %v4448
    %4706 = vmatpush1.bf16.msra.mxu0 %v4447
    %4707 = vmatprep.subr.bf16.mxu0 %v4446
    %4708 = vmatpush1.bf16.msra.mxu0 %v4445
    %4709 = vmatprep.subr.bf16.mxu0 %v4444
    %4710 = vmatpush1.bf16.msra.mxu0 %v4443
    %4711 = vmatprep.subr.bf16.mxu0 %v4442
    %4712 = vmatpush1.bf16.msra.mxu0 %v4441
    %4713 = vmatprep.subr.bf16.mxu0 %v4472
    %4714 = vmatpush2.bf16.msra.mxu0 %v4471
    %4715 = vmatprep.subr.bf16.mxu0 %v4470
    %4716 = vmatpush2.bf16.msra.mxu0 %v4469
    %4717 = vmatprep.subr.bf16.mxu0 %v4468
    %4718 = vmatpush2.bf16.msra.mxu0 %v4467
    %4719 = vmatprep.subr.bf16.mxu0 %v4466
    %4720 = vmatpush2.bf16.msra.mxu0 %v4465
    %4721 = vmatprep.subr.bf16.mxu0 %v4464
    %4722 = vmatpush2.bf16.msra.mxu0 %v4463
    %4723 = vmatprep.subr.bf16.mxu0 %v4462
    %4724 = vmatpush2.bf16.msra.mxu0 %v4461
    %4725 = vmatprep.subr.bf16.mxu0 %v4460
    %4726 = vmatpush2.bf16.msra.mxu0 %v4459
    %4727 = vmatprep.subr.bf16.mxu0 %v4458
    %4728 = vmatpush2.bf16.msra.mxu0 %v4457
    %4729 = vmatprep.mubr.bf16.mxu0 %v3910
    %4730 = vmatmul.mubr.bf16.gmra.mxu0 %v3909
    %v4731 = vpop.f32.mrf.mxu0
    %v4732 = vadd.f32 %v4050, %v4731
    %v4733 = vpop.f32.mrf.mxu0
    %v4734 = vadd.f32 %v4054, %v4733
    %v4735 = vpop.f32.mrf.mxu0
    %v4736 = vpop.f32.mrf.mxu0
    %4737 = vdwg.mxu0
    %4738 = vmatprep.subr.bf16.mxu0 %v4488
    %4739 = vmatpush1.bf16.msra.mxu0 %v4487
    %4740 = vmatprep.subr.bf16.mxu0 %v4486
    %4741 = vmatpush1.bf16.msra.mxu0 %v4485
    %4742 = vmatprep.subr.bf16.mxu0 %v4484
    %4743 = vmatpush1.bf16.msra.mxu0 %v4483
    %4744 = vmatprep.subr.bf16.mxu0 %v4482
    %4745 = vmatpush1.bf16.msra.mxu0 %v4481
    %4746 = vmatprep.subr.bf16.mxu0 %v4480
    %4747 = vmatpush1.bf16.msra.mxu0 %v4479
    %4748 = vmatprep.subr.bf16.mxu0 %v4478
    %4749 = vmatpush1.bf16.msra.mxu0 %v4477
    %4750 = vmatprep.subr.bf16.mxu0 %v4476
    %4751 = vmatpush1.bf16.msra.mxu0 %v4475
    %4752 = vmatprep.subr.bf16.mxu0 %v4474
    %4753 = vmatpush1.bf16.msra.mxu0 %v4473
    %4754 = vmatprep.subr.bf16.mxu0 %v4504
    %4755 = vmatpush2.bf16.msra.mxu0 %v4503
    %4756 = vmatprep.subr.bf16.mxu0 %v4502
    %4757 = vmatpush2.bf16.msra.mxu0 %v4501
    %4758 = vmatprep.subr.bf16.mxu0 %v4500
    %4759 = vmatpush2.bf16.msra.mxu0 %v4499
    %4760 = vmatprep.subr.bf16.mxu0 %v4498
    %4761 = vmatpush2.bf16.msra.mxu0 %v4497
    %4762 = vmatprep.subr.bf16.mxu0 %v4496
    %4763 = vmatpush2.bf16.msra.mxu0 %v4495
    %4764 = vmatprep.subr.bf16.mxu0 %v4494
    %4765 = vmatpush2.bf16.msra.mxu0 %v4493
    %4766 = vmatprep.subr.bf16.mxu0 %v4492
    %4767 = vmatpush2.bf16.msra.mxu0 %v4491
    %4768 = vmatprep.subr.bf16.mxu0 %v4490
    %4769 = vmatpush2.bf16.msra.mxu0 %v4489
    %4770 = vmatprep.mubr.bf16.mxu0 %v3912
    %4771 = vmatmul.mubr.bf16.gmra.mxu0 %v3911
    %v4772 = vpop.f32.mrf.mxu0
    %v4773 = vadd.f32 %v4732, %v4772
    %v4774 = vpop.f32.mrf.mxu0
    %v4775 = vadd.f32 %v4734, %v4774
    %v4776 = vpop.f32.mrf.mxu0
    %v4777 = vpop.f32.mrf.mxu0
    %4778 = vdwg.mxu0
    %4779 = vmatprep.subr.bf16.mxu0 %v4520
    %4780 = vmatpush1.bf16.msra.mxu0 %v4519
    %4781 = vmatprep.subr.bf16.mxu0 %v4518
    %4782 = vmatpush1.bf16.msra.mxu0 %v4517
    %4783 = vmatprep.subr.bf16.mxu0 %v4516
    %4784 = vmatpush1.bf16.msra.mxu0 %v4515
    %4785 = vmatprep.subr.bf16.mxu0 %v4514
    %4786 = vmatpush1.bf16.msra.mxu0 %v4513
    %4787 = vmatprep.subr.bf16.mxu0 %v4512
    %4788 = vmatpush1.bf16.msra.mxu0 %v4511
    %4789 = vmatprep.subr.bf16.mxu0 %v4510
    %4790 = vmatpush1.bf16.msra.mxu0 %v4509
    %4791 = vmatprep.subr.bf16.mxu0 %v4508
    %4792 = vmatpush1.bf16.msra.mxu0 %v4507
    %4793 = vmatprep.subr.bf16.mxu0 %v4506
    %4794 = vmatpush1.bf16.msra.mxu0 %v4505
    %4795 = vmatprep.subr.bf16.mxu0 %v4536
    %4796 = vmatpush2.bf16.msra.mxu0 %v4535
    %4797 = vmatprep.subr.bf16.mxu0 %v4534
    %4798 = vmatpush2.bf16.msra.mxu0 %v4533
    %4799 = vmatprep.subr.bf16.mxu0 %v4532
    %4800 = vmatpush2.bf16.msra.mxu0 %v4531
    %4801 = vmatprep.subr.bf16.mxu0 %v4530
    %4802 = vmatpush2.bf16.msra.mxu0 %v4529
    %4803 = vmatprep.subr.bf16.mxu0 %v4528
    %4804 = vmatpush2.bf16.msra.mxu0 %v4527
    %4805 = vmatprep.subr.bf16.mxu0 %v4526
    %4806 = vmatpush2.bf16.msra.mxu0 %v4525
    %4807 = vmatprep.subr.bf16.mxu0 %v4524
    %4808 = vmatpush2.bf16.msra.mxu0 %v4523
    %4809 = vmatprep.subr.bf16.mxu0 %v4522
    %4810 = vmatpush2.bf16.msra.mxu0 %v4521
    %4811 = vmatprep.mubr.bf16.mxu0 %v3914
    %4812 = vmatmul.mubr.bf16.gmra.mxu0 %v3913
    %v4813 = vpop.f32.mrf.mxu0
    %v4814 = vadd.f32 %v4773, %v4813
    %v4815 = vpop.f32.mrf.mxu0
    %v4816 = vadd.f32 %v4775, %v4815
    %v4817 = vpop.f32.mrf.mxu0
    %v4818 = vpop.f32.mrf.mxu0
    %4819 = vdwg.mxu0
    %4820 = vmatprep.subr.bf16.mxu0 %v4552
    %4821 = vmatpush1.bf16.msra.mxu0 %v4551
    %4822 = vmatprep.subr.bf16.mxu0 %v4550
    %4823 = vmatpush1.bf16.msra.mxu0 %v4549
    %4824 = vmatprep.subr.bf16.mxu0 %v4548
    %4825 = vmatpush1.bf16.msra.mxu0 %v4547
    %4826 = vmatprep.subr.bf16.mxu0 %v4546
    %4827 = vmatpush1.bf16.msra.mxu0 %v4545
    %4828 = vmatprep.subr.bf16.mxu0 %v4544
    %4829 = vmatpush1.bf16.msra.mxu0 %v4543
    %4830 = vmatprep.subr.bf16.mxu0 %v4542
    %4831 = vmatpush1.bf16.msra.mxu0 %v4541
    %4832 = vmatprep.subr.bf16.mxu0 %v4540
    %4833 = vmatpush1.bf16.msra.mxu0 %v4539
    %4834 = vmatprep.subr.bf16.mxu0 %v4538
    %4835 = vmatpush1.bf16.msra.mxu0 %v4537
    %4836 = vmatprep.subr.bf16.mxu0 %v4568
    %4837 = vmatpush2.bf16.msra.mxu0 %v4567
    %4838 = vmatprep.subr.bf16.mxu0 %v4566
    %4839 = vmatpush2.bf16.msra.mxu0 %v4565
    %4840 = vmatprep.subr.bf16.mxu0 %v4564
    %4841 = vmatpush2.bf16.msra.mxu0 %v4563
    %4842 = vmatprep.subr.bf16.mxu0 %v4562
    %4843 = vmatpush2.bf16.msra.mxu0 %v4561
    %4844 = vmatprep.subr.bf16.mxu0 %v4560
    %4845 = vmatpush2.bf16.msra.mxu0 %v4559
    %4846 = vmatprep.subr.bf16.mxu0 %v4558
    %4847 = vmatpush2.bf16.msra.mxu0 %v4557
    %4848 = vmatprep.subr.bf16.mxu0 %v4556
    %4849 = vmatpush2.bf16.msra.mxu0 %v4555
    %4850 = vmatprep.subr.bf16.mxu0 %v4554
    %4851 = vmatpush2.bf16.msra.mxu0 %v4553
    %4852 = vmatprep.mubr.bf16.mxu0 %v3916
    %4853 = vmatmul.mubr.bf16.gmra.mxu0 %v3915
    %v4854 = vpop.f32.mrf.mxu0
    %v4855 = vadd.f32 %v4814, %v4854
    %v4856 = vpop.f32.mrf.mxu0
    %v4857 = vadd.f32 %v4816, %v4856
    %v4858 = vpop.f32.mrf.mxu0
    %v4859 = vpop.f32.mrf.mxu0
    %4860 = vdwg.mxu0
    %v4861 = vmax.f32 %v4855, 0.0
    %v4862 = vmax.f32 %v4857, 0.0
    %v4863 = vpack.c.bf16 %v4861, %v4861
    %v4864 = vpack.c.bf16 %v4862, %v4862
    %v4865 = vld [vmem:[#allocation11] sm:$0xf]
    %v4866 = vld [vmem:[#allocation11 + $0x4] sm:$0xf]
    %v4867 = vld [vmem:[#allocation11 + $0x8] sm:$0xf]
    %v4868 = vld [vmem:[#allocation11 + $0xc] sm:$0xf]
    %v4869 = vld [vmem:[#allocation11 + $0x10] sm:$0xf]
    %v4870 = vld [vmem:[#allocation11 + $0x14] sm:$0xf]
    %v4871 = vld [vmem:[#allocation11 + $0x18] sm:$0xf]
    %v4872 = vld [vmem:[#allocation11 + $0x1c] sm:$0xf]
    %v4873 = vld [vmem:[#allocation11 + $0x20] sm:$0xf]
    %v4874 = vld [vmem:[#allocation11 + $0x24] sm:$0xf]
    %v4875 = vld [vmem:[#allocation11 + $0x28] sm:$0xf]
    %v4876 = vld [vmem:[#allocation11 + $0x2c] sm:$0xf]
    %v4877 = vld [vmem:[#allocation11 + $0x30] sm:$0xf]
    %v4878 = vld [vmem:[#allocation11 + $0x34] sm:$0xf]
    %v4879 = vld [vmem:[#allocation11 + $0x38] sm:$0xf]
    %v4880 = vld [vmem:[#allocation11 + $0x3c] sm:$0xf]
    %v4881 = vld [vmem:[#allocation11 + $0x40] sm:$0xf]
    %v4882 = vld [vmem:[#allocation11 + $0x44] sm:$0xf]
    %v4883 = vld [vmem:[#allocation11 + $0x48] sm:$0xf]
    %v4884 = vld [vmem:[#allocation11 + $0x4c] sm:$0xf]
    %v4885 = vld [vmem:[#allocation11 + $0x50] sm:$0xf]
    %v4886 = vld [vmem:[#allocation11 + $0x54] sm:$0xf]
    %v4887 = vld [vmem:[#allocation11 + $0x58] sm:$0xf]
    %v4888 = vld [vmem:[#allocation11 + $0x5c] sm:$0xf]
    %v4889 = vld [vmem:[#allocation11 + $0x60] sm:$0xf]
    %v4890 = vld [vmem:[#allocation11 + $0x64] sm:$0xf]
    %v4891 = vld [vmem:[#allocation11 + $0x68] sm:$0xf]
    %v4892 = vld [vmem:[#allocation11 + $0x6c] sm:$0xf]
    %v4893 = vld [vmem:[#allocation11 + $0x70] sm:$0xf]
    %v4894 = vld [vmem:[#allocation11 + $0x74] sm:$0xf]
    %v4895 = vld [vmem:[#allocation11 + $0x78] sm:$0xf]
    %v4896 = vld [vmem:[#allocation11 + $0x7c] sm:$0xf]
    %v4897 = vld [vmem:[#allocation13] sm:$0x1]
    %v4899 = vlaneseq
    %v4900 = vshrl.u32 %v4899, 7
    %v4901 = vsub.s32 0, %v4900
    %v4902 = vrot.slane %v4897, %v4901
    %v4936 = vunpack.c.l.b16 %v4865
    %v4937 = vunpack.c.l.b16 %v4866
    %v4938 = vunpack.c.l.b16 %v4867
    %v4939 = vunpack.c.l.b16 %v4868
    %v4940 = vunpack.c.l.b16 %v4869
    %v4941 = vunpack.c.l.b16 %v4870
    %v4942 = vunpack.c.l.b16 %v4871
    %v4943 = vunpack.c.l.b16 %v4872
    %v4944 = vunpack.c.l.b16 %v4873
    %v4945 = vunpack.c.l.b16 %v4874
    %v4946 = vunpack.c.l.b16 %v4875
    %v4947 = vunpack.c.l.b16 %v4876
    %v4948 = vunpack.c.l.b16 %v4877
    %v4949 = vunpack.c.l.b16 %v4878
    %v4950 = vunpack.c.l.b16 %v4879
    %v4951 = vunpack.c.l.b16 %v4880
    %v4952 = vunpack.c.l.b16 %v4881
    %v4953 = vunpack.c.l.b16 %v4882
    %v4954 = vunpack.c.l.b16 %v4883
    %v4955 = vunpack.c.l.b16 %v4884
    %v4956 = vunpack.c.l.b16 %v4885
    %v4957 = vunpack.c.l.b16 %v4886
    %v4958 = vunpack.c.l.b16 %v4887
    %v4959 = vunpack.c.l.b16 %v4888
    %v4960 = vunpack.c.l.b16 %v4889
    %v4961 = vunpack.c.l.b16 %v4890
    %v4962 = vunpack.c.l.b16 %v4891
    %v4963 = vunpack.c.l.b16 %v4892
    %v4964 = vunpack.c.l.b16 %v4893
    %v4965 = vunpack.c.l.b16 %v4894
    %v4966 = vunpack.c.l.b16 %v4895
    %v4967 = vunpack.c.l.b16 %v4896
    %v4968 = vpack.c.b16 %v4937, %v4936
    %v4969 = vpack.c.b16 %v4939, %v4938
    %v4970 = vpack.c.b16 %v4941, %v4940
    %v4971 = vpack.c.b16 %v4943, %v4942
    %v4972 = vpack.c.b16 %v4945, %v4944
    %v4973 = vpack.c.b16 %v4947, %v4946
    %v4974 = vpack.c.b16 %v4949, %v4948
    %v4975 = vpack.c.b16 %v4951, %v4950
    %v4976 = vpack.c.b16 %v4953, %v4952
    %v4977 = vpack.c.b16 %v4955, %v4954
    %v4978 = vpack.c.b16 %v4957, %v4956
    %v4979 = vpack.c.b16 %v4959, %v4958
    %v4980 = vpack.c.b16 %v4961, %v4960
    %v4981 = vpack.c.b16 %v4963, %v4962
    %v4982 = vpack.c.b16 %v4965, %v4964
    %v4983 = vpack.c.b16 %v4967, %v4966
    %5000 = vmatprep.subr.bf16.mxu0 0
    %5001 = vmatpush1.bf16.msra.mxu0 %v4975
    %5002 = vmatprep.subr.bf16.mxu0 0
    %5003 = vmatpush1.bf16.msra.mxu0 %v4974
    %5004 = vmatprep.subr.bf16.mxu0 0
    %5005 = vmatpush1.bf16.msra.mxu0 %v4973
    %5006 = vmatprep.subr.bf16.mxu0 0
    %5007 = vmatpush1.bf16.msra.mxu0 %v4972
    %5008 = vmatprep.subr.bf16.mxu0 0
    %5009 = vmatpush1.bf16.msra.mxu0 %v4971
    %5010 = vmatprep.subr.bf16.mxu0 0
    %5011 = vmatpush1.bf16.msra.mxu0 %v4970
    %5012 = vmatprep.subr.bf16.mxu0 0
    %5013 = vmatpush1.bf16.msra.mxu0 %v4969
    %5014 = vmatprep.subr.bf16.mxu0 0
    %5015 = vmatpush1.bf16.msra.mxu0 %v4968
    %5016 = vmatprep.subr.bf16.mxu0 0
    %5017 = vmatpush2.bf16.msra.mxu0 %v4983
    %5018 = vmatprep.subr.bf16.mxu0 0
    %5019 = vmatpush2.bf16.msra.mxu0 %v4982
    %5020 = vmatprep.subr.bf16.mxu0 0
    %5021 = vmatpush2.bf16.msra.mxu0 %v4981
    %5022 = vmatprep.subr.bf16.mxu0 0
    %5023 = vmatpush2.bf16.msra.mxu0 %v4980
    %5024 = vmatprep.subr.bf16.mxu0 0
    %5025 = vmatpush2.bf16.msra.mxu0 %v4979
    %5026 = vmatprep.subr.bf16.mxu0 0
    %5027 = vmatpush2.bf16.msra.mxu0 %v4978
    %5028 = vmatprep.subr.bf16.mxu0 0
    %5029 = vmatpush2.bf16.msra.mxu0 %v4977
    %5030 = vmatprep.subr.bf16.mxu0 0
    %5031 = vmatpush2.bf16.msra.mxu0 %v4976
    %5032 = vmatprep.mubr.bf16.mxu0 %v4864
    %5033 = vmatmul.mubr.bf16.gmra.mxu0 %v4863
    %v5034 = vpop.f32.mrf.mxu0
    %v5035 = vadd.f32 %v4902, %v5034
    %v5036 = vpop.f32.mrf.mxu0
    %v5037 = vpop.f32.mrf.mxu0
    %v5038 = vpop.f32.mrf.mxu0
    %5039 = vdwg.mxu0
    %5040 = vst [vmem:[#allocation14] sm:$0xff] %v5035
    // Predicated region
    $region58: #{tpu_custom_call.1} parent=1 // pred_check
      _
    $region59: #{tpu_custom_call.1} parent=1 // pred_check_branch
      %5042 = sbr.rel (0) target = $region61
    $region60: #{tpu_custom_call.1} parent=1 // pred_region
      %s5044 = ssub.s32 128, 128
      %5045 = vsyncadd [#allocation4], %s5044
      %s5047 = sshll.u32 [#allocation14], 4
      %s5048 = int_to_ptr.vmem [resolvable:$true] %s5047
      %5050 = dma.vmem_to_hbm [thread:$0]  %s5048, 128, %s7, [#allocation4]
    $region61: #{tpu_custom_call.1} parent=1 // pred_fallthru
      _
    // Predicated region
    $region62: #{tpu_custom_call.1} parent=1 // pred_check
      _
    $region63: #{tpu_custom_call.1} parent=1 // pred_check_branch
      %5052 = sbr.rel (0) target = $region65
    $region64: #{tpu_custom_call.1} parent=1 // pred_region
      %5053 = dma.done [#allocation4], 128
    $region65: #{tpu_custom_call.1} parent=1 // pred_fallthru
      _
    %5054 = vsyncpa [#allocation3], 1
    %5055 = vsyncpa [#allocation6], 1
    %5056 = vsyncpa [#allocation9], 1
    %5057 = vsyncpa [#allocation12], 1
    %5058 = vsyncpa [#allocation4], 1

</llo_original>
